<compile_context>
chip_gen: v5e
topology: v5e:2x2
jax: 0.10.0
libtpu: 0.0.40
codegen_flags: <defaults>
</compile_context>

<pallas_src>
from functools import partial

import jax
import jax.numpy as jnp
from jax.experimental import pallas as pl
from jax.experimental.pallas import tpu as pltpu

BN_EPS = 1e-5


# ----------------------------- Pallas kernel ------------------------------ #
def _mobileone_kernel(x_ref, w_ref, b_ref, o_ref, xpad_ref, col_ref,
                      *, K, pad, H, W, Cin):
    """One image per grid step: fused pad -> in-VMEM im2col -> one MXU matmul."""
    Ho = H + 2 * pad - K + 1
    Wo = W + 2 * pad - K + 1

    # Zero-padding fused into a VMEM staging buffer (no jnp.pad HBM pass).
    # Re-zeroed every step so per-core scratch is always valid under megacore.
    xpad_ref[...] = jnp.zeros_like(xpad_ref)
    xpad_ref[pad:pad + H, pad:pad + W, :] = x_ref[0]

    # Dense im2col built with K*K static slice copies inside VMEM.
    for dy in range(K):
        for dx in range(K):
            tap = dy * K + dx
            col_ref[:, tap * Cin:(tap + 1) * Cin] = (
                xpad_ref[dy:dy + Ho, dx:dx + Wo, :].reshape(Ho * Wo, Cin))

    # Single dense MXU matmul: bf16 operands, f32 accumulation.
    # (contraction = K*K*Cin; no banded zeros. Lane padding of K*K*Cin to the
    #  next 128 multiple is left to the compiler -- negligible at these sizes.)
    acc = jnp.dot(col_ref[...], w_ref[...], preferred_element_type=jnp.float32)
    acc = acc + b_ref[...]                                  # f32 bias, broadcast
    o_ref[0] = jnp.maximum(acc, 0.0).astype(o_ref.dtype)    # ReLU (se = Identity)


def mobileone_block_pallas(x_nchw, w_mat, bias_row, *, K, pad):
    """Forward pass. `w_mat` (K*K*Cin, Cout) bf16 and `bias_row` (1, Cout) f32
    come from prepare_folded_weight(); they are weight-only (precomputed)."""
    N, Cin, H, W = x_nchw.shape
    KKC, Cout = w_mat.shape
    assert KKC == K * K * Cin
    Ho = H + 2 * pad - K + 1
    Wo = W + 2 * pad - K + 1
    Hp, Wp = H + 2 * pad, W + 2 * pad

    # NCHW -> NHWC with the bf16 cast fused into the same XLA pass.
    x_nhwc = jnp.transpose(x_nchw, (0, 2, 3, 1)).astype(jnp.bfloat16)

    kernel = partial(_mobileone_kernel, K=K, pad=pad, H=H, W=W, Cin=Cin)

    out = pl.pallas_call(
        kernel,
        out_shape=jax.ShapeDtypeStruct((N, Ho * Wo, Cout), x_nchw.dtype),
        grid=(N,),
        in_specs=[
            pl.BlockSpec((1, H, W, Cin), lambda n: (n, 0, 0, 0)),
            # Constant index map -> folded weight stays VMEM-resident.
            pl.BlockSpec((KKC, Cout), lambda n: (0, 0)),
            pl.BlockSpec((1, Cout), lambda n: (0, 0)),
        ],
        out_specs=pl.BlockSpec((1, Ho * Wo, Cout), lambda n: (n, 0, 0)),
        scratch_shapes=[
            pltpu.VMEM((Hp, Wp, Cin), jnp.bfloat16),    # zero-padded image
            pltpu.VMEM((Ho * Wo, KKC), jnp.bfloat16),   # dense im2col matrix
        ],
        compiler_params=pltpu.CompilerParams(dimension_semantics=("parallel",)),
    )(x_nhwc, w_mat, bias_row)

    out_nhwc = out.reshape(N, Ho, Wo, Cout)
    return jnp.transpose(out_nhwc, (0, 3, 1, 2))


# ----------------------- parameter setup / BN folding ---------------------- #
def fold_conv_bn(w_hwio, gamma, beta, mean, var, eps=BN_EPS):
    t = gamma / jnp.sqrt(var + eps)                    # (Cout,)
    return w_hwio * t[None, None, None, :], beta - mean * t


def build_folded_params(params, K, Cin, Cout):
    """Sum all MobileOne branches into one equivalent KxK conv (HWIO) + bias.
    Exact in f32 (linearity of eval-mode BN). stride=1, groups=1 only."""
    w_total = jnp.zeros((K, K, Cin, Cout), jnp.float32)
    b_total = jnp.zeros((Cout,), jnp.float32)
    c = K // 2

    # kxk conv branches
    for br in params["rbr_conv"]:
        wf, bf = fold_conv_bn(br["w"], *br["bn"])
        w_total += wf
        b_total += bf

    # 1x1 scale branch, padded to the kernel center
    sc = params["rbr_scale"]
    wf, bf = fold_conv_bn(sc["w"], *sc["bn"])
    w_total = w_total.at[c, c].add(wf[0, 0])
    b_total += bf

    # skip BN branch == identity conv folded with BN (requires Cin == Cout)
    w_id = jnp.zeros((K, K, Cin, Cout), jnp.float32)
    w_id = w_id.at[c, c].set(jnp.eye(Cin, dtype=jnp.float32))
    wf, bf = fold_conv_bn(w_id, *params["rbr_skip"])
    w_total += wf
    b_total += bf
    return w_total, b_total


def prepare_folded_weight(params, K, Cin, Cout):
    """Weight-only: run once per parameter update, NOT per forward call."""
    w_hwio, b = build_folded_params(params, K, Cin, Cout)            # exact f32
    w_mat = w_hwio.reshape(K * K * Cin, Cout).astype(jnp.bfloat16)   # cast once
    return w_mat, b.reshape(1, Cout)                                 # bias stays f32


# ---------------------------- plain-JAX references ------------------------- #
def conv2d_nhwc(x, w, pad):
    return jax.lax.conv_general_dilated(
        x, w, window_strides=(1, 1),
        padding=[(pad, pad), (pad, pad)],
        dimension_numbers=("NHWC", "HWIO", "NHWC"))


def bn_eval(x, gamma, beta, mean, var, eps=BN_EPS):
    return (x - mean) / jnp.sqrt(var + eps) * gamma + beta


def reference_forward(x_nchw, params, K, pad):
    """Exact per-branch (module-semantics) f32 reference."""
    x = jnp.transpose(x_nchw, (0, 2, 3, 1))
    out = bn_eval(x, *params["rbr_skip"])                                   # identity_out
    sc = params["rbr_scale"]
    out = out + bn_eval(conv2d_nhwc(x, sc["w"], 0), *sc["bn"])              # scale_out
    for br in params["rbr_conv"]:
        out = out + bn_eval(conv2d_nhwc(x, br["w"], pad), *br["bn"])
    out = jnp.maximum(out, 0.0)
    return jnp.transpose(out, (0, 3, 1, 2))


def reference_forward_folded_bf16(x_nchw, w_hwio_bf16, bias_f32, K, pad):
    """Reference with the same operand quantization as the kernel (bf16 x/w,
    f32 accumulation) -- isolates kernel-logic error from bf16 rounding."""
    x = jnp.transpose(x_nchw, (0, 2, 3, 1)).astype(jnp.bfloat16)
    out = jax.lax.conv_general_dilated(
        x, w_hwio_bf16, window_strides=(1, 1),
        padding=[(pad, pad), (pad, pad)],
        dimension_numbers=("NHWC", "HWIO", "NHWC"),
        preferred_element_type=jnp.float32)
    out = jnp.maximum(out + bias_f32, 0.0)
    return jnp.transpose(out, (0, 3, 1, 2))


# ----------------------------------- main ---------------------------------- #
def make_bn_params(key, C):
    k1, k2, k3, k4 = jax.random.split(key, 4)
    gamma = jax.random.uniform(k1, (C,), jnp.float32, 0.5, 1.5)
    beta = 0.1 * jax.random.normal(k2, (C,), jnp.float32)
    mean = 0.1 * jax.random.normal(k3, (C,), jnp.float32)
    var = jax.random.uniform(k4, (C,), jnp.float32, 0.5, 1.5)
    return (gamma, beta, mean, var)


if __name__ == "__main__":
    # MobileOneBlock(in=32, out=32, kernel_size=3, stride=1, padding=1,
    #                groups=1, num_conv_branches=2)
    N, Cin, Cout, H, W = 2, 32, 32, 16, 16
    K, PAD, NUM_BRANCHES = 3, 1, 2

    key = jax.random.PRNGKey(0)
    keys = jax.random.split(key, 2 * NUM_BRANCHES + 4)

    params = {
        "rbr_conv": [
            {"w": 0.1 * jax.random.normal(keys[2 * i], (K, K, Cin, Cout), jnp.float32),
             "bn": make_bn_params(keys[2 * i + 1], Cout)}
            for i in range(NUM_BRANCHES)
        ],
        "rbr_scale": {
            "w": 0.1 * jax.random.normal(keys[-4], (1, 1, Cin, Cout), jnp.float32),
            "bn": make_bn_params(keys[-3], Cout),
        },
        "rbr_skip": make_bn_params(keys[-2], Cin),
    }
    x = jax.random.normal(keys[-1], (N, Cin, H, W), jnp.float32)

    # Weight-only prep, hoisted off the forward path (run once per update).
    w_mat, b_row = prepare_folded_weight(params, K, Cin, Cout)

    forward = jax.jit(partial(mobileone_block_pallas, K=K, pad=PAD))
    out = jax.block_until_ready(forward(x, w_mat, b_row))
    assert out.shape == (N, Cout, H, W)

    # (1) Tight check vs a reference using identical bf16 operand quantization.
    ref_q = reference_forward_folded_bf16(
        x, w_mat.reshape(K, K, Cin, Cout), b_row[0], K, PAD)
    max_err_q = float(jnp.max(jnp.abs(out - ref_q)))
    assert jnp.allclose(out, ref_q, atol=1e-3, rtol=1e-3), \
        f"kernel-logic mismatch vs quantized reference: max err {max_err_q}"

    # (2) Loose check vs the exact per-branch f32 module semantics
    #     (difference is only the bf16 operand rounding).
    ref = reference_forward(x, params, K, PAD)
    max_err = float(jnp.max(jnp.abs(out - ref)))
    assert max_err < 0.2, f"bf16 error vs f32 module reference too large: {max_err}"

    print("KERNEL_OK")
</pallas_src>

<mosaic_0001>
module attributes {stable_mosaic.version = 11 : i64} {
  func.func @_mobileone_kernel(%arg0: i32, %arg1: memref<1x16x16x32xbf16, #tpu.memory_space<vmem>>, %arg2: memref<288x32xbf16, #tpu.memory_space<vmem>>, %arg3: memref<1x32xf32, #tpu.memory_space<vmem>>, %arg4: memref<1x256x32xf32, #tpu.memory_space<vmem>>, %arg5: memref<18x18x32xbf16, #tpu.memory_space<vmem>>, %arg6: memref<256x288xbf16, #tpu.memory_space<vmem>>) attributes {dimension_semantics = [#tpu.dimension_semantics<parallel>], iteration_bounds = array<i64: 2>, scalar_prefetch = 0 : i64, scratch_operands = 2 : i64, tpu.core_type = #tpu.core_type<tc>, window_params = [{transform_indices = @transform_0, window_bounds = array<i64: 1, 16, 16, 32>}, {pipeline_mode = #tpu.pipeline_mode<synchronous>, transform_indices = @transform_1, window_bounds = array<i64: 288, 32>}, {pipeline_mode = #tpu.pipeline_mode<synchronous>, transform_indices = @transform_2, window_bounds = array<i64: 1, 32>}, {transform_indices = @transform_3, window_bounds = array<i64: 1, 256, 32>}]} {
    %cst = arith.constant 0.000000e+00 : bf16
    %0 = vector.broadcast %cst : bf16 to vector<18x18x32xbf16>
    %c0 = arith.constant 0 : index
    %c0_0 = arith.constant 0 : index
    %c0_1 = arith.constant 0 : index
    %1 = vector.load %arg5[%c0, %c0_0, %c0_1] : memref<18x18x32xbf16, #tpu.memory_space<vmem>>, vector<18x18x32xbf16>
    tpu.vector_store %arg5[%c0, %c0_0, %c0_1], %0 {strides = array<i32>} : memref<18x18x32xbf16, #tpu.memory_space<vmem>>, vector<18x18x32xbf16>,
    %c0_2 = arith.constant 0 : index
    %c0_3 = arith.constant 0 : index
    %c0_4 = arith.constant 0 : index
    %c0_5 = arith.constant 0 : index
    %2 = vector.load %arg1[%c0_2, %c0_3, %c0_4, %c0_5] : memref<1x16x16x32xbf16, #tpu.memory_space<vmem>>, vector<1x16x16x32xbf16>
    %3 = vector.shape_cast %2 : vector<1x16x16x32xbf16> to vector<16x16x32xbf16>
    %c1 = arith.constant 1 : index
    %c1_6 = arith.constant 1 : index
    %c0_7 = arith.constant 0 : index
    %4 = vector.load %arg5[%c1, %c1_6, %c0_7] : memref<18x18x32xbf16, #tpu.memory_space<vmem>>, vector<16x16x32xbf16>
    tpu.vector_store %arg5[%c1, %c1_6, %c0_7], %3 {strides = array<i32>} : memref<18x18x32xbf16, #tpu.memory_space<vmem>>, vector<16x16x32xbf16>,
    %c0_8 = arith.constant 0 : index
    %c0_9 = arith.constant 0 : index
    %c0_10 = arith.constant 0 : index
    %5 = vector.load %arg5[%c0_8, %c0_9, %c0_10] : memref<18x18x32xbf16, #tpu.memory_space<vmem>>, vector<16x16x32xbf16>
    %6 = vector.shape_cast %5 : vector<16x16x32xbf16> to vector<256x32xbf16>
    %c0_11 = arith.constant 0 : index
    %c0_12 = arith.constant 0 : index
    %7 = vector.load %arg6[%c0_11, %c0_12] : memref<256x288xbf16, #tpu.memory_space<vmem>>, vector<256x32xbf16>
    tpu.vector_store %arg6[%c0_11, %c0_12], %6 {strides = array<i32>} : memref<256x288xbf16, #tpu.memory_space<vmem>>, vector<256x32xbf16>,
    %c0_13 = arith.constant 0 : index
    %c1_14 = arith.constant 1 : index
    %c0_15 = arith.constant 0 : index
    %8 = vector.load %arg5[%c0_13, %c1_14, %c0_15] : memref<18x18x32xbf16, #tpu.memory_space<vmem>>, vector<16x16x32xbf16>
    %9 = vector.shape_cast %8 : vector<16x16x32xbf16> to vector<256x32xbf16>
    %c0_16 = arith.constant 0 : index
    %c32 = arith.constant 32 : index
    %10 = vector.load %arg6[%c0_16, %c32] : memref<256x288xbf16, #tpu.memory_space<vmem>>, vector<256x32xbf16>
    tpu.vector_store %arg6[%c0_16, %c32], %9 {strides = array<i32>} : memref<256x288xbf16, #tpu.memory_space<vmem>>, vector<256x32xbf16>,
    %c0_17 = arith.constant 0 : index
    %c2 = arith.constant 2 : index
    %c0_18 = arith.constant 0 : index
    %11 = vector.load %arg5[%c0_17, %c2, %c0_18] : memref<18x18x32xbf16, #tpu.memory_space<vmem>>, vector<16x16x32xbf16>
    %12 = vector.shape_cast %11 : vector<16x16x32xbf16> to vector<256x32xbf16>
    %c0_19 = arith.constant 0 : index
    %c64 = arith.constant 64 : index
    %13 = vector.load %arg6[%c0_19, %c64] : memref<256x288xbf16, #tpu.memory_space<vmem>>, vector<256x32xbf16>
    tpu.vector_store %arg6[%c0_19, %c64], %12 {strides = array<i32>} : memref<256x288xbf16, #tpu.memory_space<vmem>>, vector<256x32xbf16>,
    %c1_20 = arith.constant 1 : index
    %c0_21 = arith.constant 0 : index
    %c0_22 = arith.constant 0 : index
    %14 = vector.load %arg5[%c1_20, %c0_21, %c0_22] : memref<18x18x32xbf16, #tpu.memory_space<vmem>>, vector<16x16x32xbf16>
    %15 = vector.shape_cast %14 : vector<16x16x32xbf16> to vector<256x32xbf16>
    %c0_23 = arith.constant 0 : index
    %c96 = arith.constant 96 : index
    %16 = vector.load %arg6[%c0_23, %c96] : memref<256x288xbf16, #tpu.memory_space<vmem>>, vector<256x32xbf16>
    tpu.vector_store %arg6[%c0_23, %c96], %15 {strides = array<i32>} : memref<256x288xbf16, #tpu.memory_space<vmem>>, vector<256x32xbf16>,
    %c1_24 = arith.constant 1 : index
    %c1_25 = arith.constant 1 : index
    %c0_26 = arith.constant 0 : index
    %17 = vector.load %arg5[%c1_24, %c1_25, %c0_26] : memref<18x18x32xbf16, #tpu.memory_space<vmem>>, vector<16x16x32xbf16>
    %18 = vector.shape_cast %17 : vector<16x16x32xbf16> to vector<256x32xbf16>
    %c0_27 = arith.constant 0 : index
    %c128 = arith.constant 128 : index
    %19 = vector.load %arg6[%c0_27, %c128] : memref<256x288xbf16, #tpu.memory_space<vmem>>, vector<256x32xbf16>
    tpu.vector_store %arg6[%c0_27, %c128], %18 {strides = array<i32>} : memref<256x288xbf16, #tpu.memory_space<vmem>>, vector<256x32xbf16>,
    %c1_28 = arith.constant 1 : index
    %c2_29 = arith.constant 2 : index
    %c0_30 = arith.constant 0 : index
    %20 = vector.load %arg5[%c1_28, %c2_29, %c0_30] : memref<18x18x32xbf16, #tpu.memory_space<vmem>>, vector<16x16x32xbf16>
    %21 = vector.shape_cast %20 : vector<16x16x32xbf16> to vector<256x32xbf16>
    %c0_31 = arith.constant 0 : index
    %c160 = arith.constant 160 : index
    %22 = vector.load %arg6[%c0_31, %c160] : memref<256x288xbf16, #tpu.memory_space<vmem>>, vector<256x32xbf16>
    tpu.vector_store %arg6[%c0_31, %c160], %21 {strides = array<i32>} : memref<256x288xbf16, #tpu.memory_space<vmem>>, vector<256x32xbf16>,
    %c2_32 = arith.constant 2 : index
    %c0_33 = arith.constant 0 : index
    %c0_34 = arith.constant 0 : index
    %23 = vector.load %arg5[%c2_32, %c0_33, %c0_34] : memref<18x18x32xbf16, #tpu.memory_space<vmem>>, vector<16x16x32xbf16>
    %24 = vector.shape_cast %23 : vector<16x16x32xbf16> to vector<256x32xbf16>
    %c0_35 = arith.constant 0 : index
    %c192 = arith.constant 192 : index
    %25 = vector.load %arg6[%c0_35, %c192] : memref<256x288xbf16, #tpu.memory_space<vmem>>, vector<256x32xbf16>
    tpu.vector_store %arg6[%c0_35, %c192], %24 {strides = array<i32>} : memref<256x288xbf16, #tpu.memory_space<vmem>>, vector<256x32xbf16>,
    %c2_36 = arith.constant 2 : index
    %c1_37 = arith.constant 1 : index
    %c0_38 = arith.constant 0 : index
    %26 = vector.load %arg5[%c2_36, %c1_37, %c0_38] : memref<18x18x32xbf16, #tpu.memory_space<vmem>>, vector<16x16x32xbf16>
    %27 = vector.shape_cast %26 : vector<16x16x32xbf16> to vector<256x32xbf16>
    %c0_39 = arith.constant 0 : index
    %c224 = arith.constant 224 : index
    %28 = vector.load %arg6[%c0_39, %c224] : memref<256x288xbf16, #tpu.memory_space<vmem>>, vector<256x32xbf16>
    tpu.vector_store %arg6[%c0_39, %c224], %27 {strides = array<i32>} : memref<256x288xbf16, #tpu.memory_space<vmem>>, vector<256x32xbf16>,
    %c2_40 = arith.constant 2 : index
    %c2_41 = arith.constant 2 : index
    %c0_42 = arith.constant 0 : index
    %29 = vector.load %arg5[%c2_40, %c2_41, %c0_42] : memref<18x18x32xbf16, #tpu.memory_space<vmem>>, vector<16x16x32xbf16>
    %30 = vector.shape_cast %29 : vector<16x16x32xbf16> to vector<256x32xbf16>
    %c0_43 = arith.constant 0 : index
    %c256 = arith.constant 256 : index
    %31 = vector.load %arg6[%c0_43, %c256] : memref<256x288xbf16, #tpu.memory_space<vmem>>, vector<256x32xbf16>
    tpu.vector_store %arg6[%c0_43, %c256], %30 {strides = array<i32>} : memref<256x288xbf16, #tpu.memory_space<vmem>>, vector<256x32xbf16>,
    %c0_44 = arith.constant 0 : index
    %c0_45 = arith.constant 0 : index
    %32 = vector.load %arg6[%c0_44, %c0_45] : memref<256x288xbf16, #tpu.memory_space<vmem>>, vector<256x288xbf16>
    %c0_46 = arith.constant 0 : index
    %c0_47 = arith.constant 0 : index
    %33 = vector.load %arg2[%c0_46, %c0_47] : memref<288x32xbf16, #tpu.memory_space<vmem>>, vector<288x32xbf16>
    %cst_48 = arith.constant dense<0.000000e+00> : vector<256x32xf32>
    %34 = tpu.matmul %32, %33, %cst_48 {dimension_numbers = #tpu.dot_dimension_numbers<[1], [0], [0], [1], [0, 0, 1, 1], [], []>} : vector<256x288xbf16>, vector<288x32xbf16>, vector<256x32xf32> -> vector<256x32xf32>
    %c0_49 = arith.constant 0 : index
    %c0_50 = arith.constant 0 : index
    %35 = vector.load %arg3[%c0_49, %c0_50] : memref<1x32xf32, #tpu.memory_space<vmem>>, vector<1x32xf32>
    %36 = vector.broadcast %35 : vector<1x32xf32> to vector<256x32xf32>
    %37 = arith.addf %34, %36 : vector<256x32xf32>
    %cst_51 = arith.constant 0.000000e+00 : f32
    %38 = vector.broadcast %cst_51 : f32 to vector<256x32xf32>
    %39 = arith.maximumf %37, %38 : vector<256x32xf32>
    %c0_52 = arith.constant 0 : index
    %c0_53 = arith.constant 0 : index
    %c0_54 = arith.constant 0 : index
    %40 = vector.load %arg4[%c0_52, %c0_53, %c0_54] : memref<1x256x32xf32, #tpu.memory_space<vmem>>, vector<1x256x32xf32>
    %41 = vector.shape_cast %40 : vector<1x256x32xf32> to vector<256x32xf32>
    %42 = vector.shape_cast %39 : vector<256x32xf32> to vector<1x256x32xf32>
    tpu.vector_store %arg4[%c0_52, %c0_53, %c0_54], %42 {strides = array<i32>} : memref<1x256x32xf32, #tpu.memory_space<vmem>>, vector<1x256x32xf32>,
    return
  }
  func.func @transform_0(%arg0: i32) -> (i32, i32, i32, i32) {
    %c0_i32 = arith.constant 0 : i32
    %c0_i32_0 = arith.constant 0 : i32
    %c0_i32_1 = arith.constant 0 : i32
    %c0_i32_2 = arith.constant 0 : i32
    return %arg0, %c0_i32, %c0_i32_0, %c0_i32_1 : i32, i32, i32, i32
  }
  func.func @transform_1(%arg0: i32) -> (i32, i32) {
    %c0_i32 = arith.constant 0 : i32
    %c0_i32_0 = arith.constant 0 : i32
    %c0_i32_1 = arith.constant 0 : i32
    return %c0_i32, %c0_i32_0 : i32, i32
  }
  func.func @transform_2(%arg0: i32) -> (i32, i32) {
    %c0_i32 = arith.constant 0 : i32
    %c0_i32_0 = arith.constant 0 : i32
    %c0_i32_1 = arith.constant 0 : i32
    return %c0_i32, %c0_i32_0 : i32, i32
  }
  func.func @transform_3(%arg0: i32) -> (i32, i32, i32) {
    %c0_i32 = arith.constant 0 : i32
    %c0_i32_0 = arith.constant 0 : i32
    %c0_i32_1 = arith.constant 0 : i32
    return %arg0, %c0_i32, %c0_i32_0 : i32, i32, i32
  }
}

</mosaic_0001>

<llo_original>
// kernel: mobileone_block_pallas.1
$region0: #{mobileone_block_pallas.1}
  #allocation0 [shape = 'u32[]', space=smem, size = 0x4, offset = 0x4, fixed_abs, tag = 'smem constant byte address 0x4 - core index']
  #allocation1 [shape = 'u32[72,128]{1,0:T(1,128)}', space=vmem, size = 0x9000, scoped, tag = 'internal scratch']
  #allocation2 [shape = 'bf16[18,18,32]{2,1,0:T(8,128)(2,1)}', space=vmem, size = 0x1b000, scoped, tag = 'scratch operand']
  #allocation3 [shape = 'bf16[256,288]{1,0:T(8,128)(2,1)}', space=vmem, size = 0x30000, scoped, tag = 'scratch operand']
  %s0 = inlined_call_operand.vmem [shape: bf16[2,16,16,32], index: 0, kind: input, shape index: {}]
  %s1 = inlined_call_operand.vmem [shape: bf16[288,32], index: 1, kind: input, shape index: {}]
  %s2 = inlined_call_operand.vmem [shape: f32[1,32], index: 2, kind: input, shape index: {}]
  %s3 = inlined_call_operand.hbm [shape: f32[2,256,32], index: 3, kind: output, shape index: {}]
  %s4 = sld [smem:[#allocation0]]
  $region45: #{mobileone_block_pallas.1} parent=0
    _
  %s6 = ssub.s32 1, %s4
  %s7 = scalar_select 0, %s6, %s4
  $region1: #{mobileone_block_pallas.1} parent=0
    #allocation4 [shape = 'u8[262144]{0}', space=vmem, size = 0x40000, scoped, tag = 'output window, operand 0']
    #allocation5 [shape = 's32[2]{0}', space=sflag, size = 0x8, scoped, tag = 'scoped memory for mobileone_block_pallas.1']
    %8 = vsyncpa [#allocation5], 0
    %s9 = scalar_lea.sflag [#allocation5], 1
    %10 = vsyncpa %s9, 0
    loop: start=0, step=1, limit=4
    $region2: #{mobileone_block_pallas.1} parent=1 // loop_pre_header
      _
    $region3: #{mobileone_block_pallas.1} parent=1 // loop_header
      %s12 = sphi 0, %s16
      %p13 = scmp.ge.s32.totalorder %s12, 4
      %s22 = sphi 0, %s24
      %s25 = sphi 0, %s22
      %s26 = sphi 0, %s25
      %s42 = sphi 0, %s26
      %s46 = sphi 0, %s46
      %s48 = sphi 0, %s46
      %s49 = sphi 0, %s48
      %s63 = sphi 0, %s49
      %s67 = sphi 0, %s67
      %s69 = sphi 0, %s67
      %s70 = sphi 0, %s69
      %s84 = sphi 0, %s70
      %s90 = sphi 0, %s92
      %s93 = sphi 0, %s90
      %s94 = sphi 0, %s93
      %s110 = sphi 0, %s94
    $region4: #{mobileone_block_pallas.1} parent=1 // loop_header_branch
      %15 = sbr.rel (%p13) target = $region8
    $region5: #{mobileone_block_pallas.1} parent=1 // loop_body
      %s17 = ssub.s32 %s12, 1
      %s18 = ssub.s32 %s12, 2
      %s19 = sadd.s32 %s12, 1
      %s20 = ssub.s32 %s12, %s19
      %p21 = scmp.eq.s32.totalorder %s20, 0
      %s23 = sadd.s32 %s22, 1
      %s24 = scalar_select %p21, %s22, %s23
      %p27 = pneg %p21
      %p28 = scmp.eq.s32.totalorder %s12, 1
      %p29 = por %p27, %p28
      %p30 = scmp.ne.s32.totalorder %s22, %s25
      %p31 = scmp.eq.s32.totalorder %s12, 0
      %p32 = por %p30, %p31
      %p33 = scmp.ne.s32.totalorder %s22, %s25
      %p34 = scmp.eq.s32.totalorder %s17, 1
      %p35 = por %p33, %p34
      %p36 = scmp.ne.s32.totalorder %s25, %s26
      %p37 = scmp.eq.s32.totalorder %s17, 0
      %p38 = por %p36, %p37
      %p39 = scmp.ne.s32.totalorder %s25, %s26
      %p40 = scmp.eq.s32.totalorder %s18, 1
      %p41 = por %p39, %p40
      %p43 = scmp.ne.s32.totalorder %s26, %s42
      %p44 = scmp.eq.s32.totalorder %s18, 0
      %p45 = por %p43, %p44
      %s47 = sadd.s32 %s46, 1
      %p50 = scmp.eq.s32.totalorder %s12, 1
      %p51 = scmp.ne.s32.totalorder %s46, %s48
      %p52 = scmp.eq.s32.totalorder %s12, 0
      %p53 = por %p51, %p52
      %p54 = scmp.ne.s32.totalorder %s46, %s48
      %p55 = scmp.eq.s32.totalorder %s17, 1
      %p56 = por %p54, %p55
      %p57 = scmp.ne.s32.totalorder %s48, %s49
      %p58 = scmp.eq.s32.totalorder %s17, 0
      %p59 = por %p57, %p58
      %p60 = scmp.ne.s32.totalorder %s48, %s49
      %p61 = scmp.eq.s32.totalorder %s18, 1
      %p62 = por %p60, %p61
      %p64 = scmp.ne.s32.totalorder %s49, %s63
      %p65 = scmp.eq.s32.totalorder %s18, 0
      %p66 = por %p64, %p65
      %s68 = sadd.s32 %s67, 1
      %p71 = scmp.eq.s32.totalorder %s12, 1
      %p72 = scmp.ne.s32.totalorder %s67, %s69
      %p73 = scmp.eq.s32.totalorder %s12, 0
      %p74 = por %p72, %p73
      %p75 = scmp.ne.s32.totalorder %s67, %s69
      %p76 = scmp.eq.s32.totalorder %s17, 1
      %p77 = por %p75, %p76
      %p78 = scmp.ne.s32.totalorder %s69, %s70
      %p79 = scmp.eq.s32.totalorder %s17, 0
      %p80 = por %p78, %p79
      %p81 = scmp.ne.s32.totalorder %s69, %s70
      %p82 = scmp.eq.s32.totalorder %s18, 1
      %p83 = por %p81, %p82
      %p85 = scmp.ne.s32.totalorder %s70, %s84
      %p86 = scmp.eq.s32.totalorder %s18, 0
      %p87 = por %p85, %p86
      %s88 = ssub.s32 %s12, %s19
      %p89 = scmp.eq.s32.totalorder %s88, 0
      %s91 = sadd.s32 %s90, 1
      %s92 = scalar_select %p89, %s90, %s91
      %p95 = pneg %p89
      %p96 = scmp.eq.s32.totalorder %s12, 1
      %p97 = por %p95, %p96
      %p98 = scmp.ne.s32.totalorder %s90, %s93
      %p99 = scmp.eq.s32.totalorder %s12, 0
      %p100 = por %p98, %p99
      %p101 = scmp.ne.s32.totalorder %s90, %s93
      %p102 = scmp.eq.s32.totalorder %s17, 1
      %p103 = por %p101, %p102
      %p104 = scmp.ne.s32.totalorder %s93, %s94
      %p105 = scmp.eq.s32.totalorder %s17, 0
      %p106 = por %p104, %p105
      %p107 = scmp.ne.s32.totalorder %s93, %s94
      %p108 = scmp.eq.s32.totalorder %s18, 1
      %p109 = por %p107, %p108
      %p111 = scmp.ne.s32.totalorder %s94, %s110
      %p112 = scmp.eq.s32.totalorder %s18, 0
      %p113 = por %p111, %p112
      %p114 = scmp.le.s32.totalorder 1, %s12
      %p115 = scmp.lt.s32.totalorder %s12, 3
      %p116 = pnand %p114, %p115
      %p117 = pneg %p116
      // Predicated region
      $region9: #{mobileone_block_pallas.1} parent=5 // pred_check
        _
      $region10: #{mobileone_block_pallas.1} parent=5 // pred_check_branch
        %119 = sbr.rel (%p116) target = $region12
      $region11: #{mobileone_block_pallas.1} parent=5 // pred_region
        %s120 = ssub.s32 %s12, 1
        // Predicated region
        $region13: #{mobileone_block_pallas.1} parent=11 // pred_check
          %p121 = pneg %p59
        $region14: #{mobileone_block_pallas.1} parent=11 // pred_check_branch
          %123 = sbr.rel (%p121) target = $region16
        $region15: #{mobileone_block_pallas.1} parent=11 // pred_region
          _
        $region16: #{mobileone_block_pallas.1} parent=11 // pred_fallthru
          _
        // Predicated region
        $region17: #{mobileone_block_pallas.1} parent=11 // pred_check
          %p124 = pneg %p80
        $region18: #{mobileone_block_pallas.1} parent=11 // pred_check_branch
          %126 = sbr.rel (%p124) target = $region20
        $region19: #{mobileone_block_pallas.1} parent=11 // pred_region
          _
        $region20: #{mobileone_block_pallas.1} parent=11 // pred_fallthru
          _
      $region12: #{mobileone_block_pallas.1} parent=5 // pred_fallthru
        _
      %p127 = scmp.lt.s32.totalorder %s12, 2
      // Predicated region
      $region21: #{mobileone_block_pallas.1} parent=5 // pred_check
        %p128 = pneg %p127
      $region22: #{mobileone_block_pallas.1} parent=5 // pred_check_branch
        %130 = sbr.rel (%p128) target = $region24
      $region23: #{mobileone_block_pallas.1} parent=5 // pred_region
        // Predicated region
        $region25: #{mobileone_block_pallas.1} parent=23 // pred_check
          %p131 = pneg %p32
        $region26: #{mobileone_block_pallas.1} parent=23 // pred_check_branch
          %133 = sbr.rel (%p131) target = $region28
        $region27: #{mobileone_block_pallas.1} parent=23 // pred_region
          %p134 = scmp.lt.s32.totalorder %s12, 1
          %s135 = scalar_select %p134, %s12, 1
          %s136 = smul.addr %s135, 32
          %s137 = smul.addr %s136, 4
          %s138 = scalar_lea.vmem %s0, %s137
        $region28: #{mobileone_block_pallas.1} parent=23 // pred_fallthru
          _
      $region24: #{mobileone_block_pallas.1} parent=5 // pred_fallthru
        _
      %p139 = scmp.le.s32.totalorder 1, %s12
      %p140 = scmp.lt.s32.totalorder %s12, 3
      %p141 = pnand %p139, %p140
      %p142 = pneg %p141
      // Predicated region
      $region29: #{mobileone_block_pallas.1} parent=5 // pred_check
        _
      $region30: #{mobileone_block_pallas.1} parent=5 // pred_check_branch
        %144 = sbr.rel (%p141) target = $region32
      $region31: #{mobileone_block_pallas.1} parent=5 // pred_region
        %s145 = ssub.s32 %s12, 1
        %p146 = scmp.lt.s32.totalorder %s17, 1
        %s147 = scalar_select %p146, %s17, 1
        %s148 = smul.addr %s147, 32
        %s149 = smul.addr %s148, 4
        %s150 = scalar_lea.vmem %s0, %s149
        %p151 = pneg %p38
        %p152 = pneg %p35
        %p153 = pneg %p59
        %p154 = pneg %p56
        %p155 = pneg %p80
        %p156 = pneg %p77
        %p157 = pneg %p106
        %p158 = pneg %p103
        %s159 = sand.u32 %s93, 1
        %s160 = scalar_lea.sflag [#allocation5], %s159
        %s161 = sand.u32 %s93, 1
        %s162 = smul.addr %s161, 256
        %s163 = scalar_lea.vmem [#allocation4], %s162
        %p164 = scmp.lt.s32.totalorder %s17, 1
        %s165 = scalar_select %p164, %s17, 1
        %s166 = smul.addr %s165, 32
        %s167 = smul.addr %s166, 4
        %s168 = scalar_lea.vmem %s0, %s167
        %vm170 = vcmask 257024
        %171 = vst.msk [vmem:[#allocation2] sm:$0xf] %vm170, 0
        %172 = vst.msk [vmem:[#allocation2 + $0x4] sm:$0xf] %vm170, 0
        %vm173 = vcmask 253952
        %174 = vst.msk [vmem:[#allocation2 + $0x8] sm:$0x1] %vm173, 0
        %175 = vst.msk [vmem:[#allocation2 + $0xc] sm:$0xf] %vm170, 0
        %176 = vst.msk [vmem:[#allocation2 + $0x10] sm:$0xf] %vm170, 0
        %177 = vst.msk [vmem:[#allocation2 + $0x14] sm:$0x1] %vm173, 0
        %178 = vst.msk [vmem:[#allocation2 + $0x18] sm:$0xf] %vm170, 0
        %179 = vst.msk [vmem:[#allocation2 + $0x1c] sm:$0xf] %vm170, 0
        %180 = vst.msk [vmem:[#allocation2 + $0x20] sm:$0x1] %vm173, 0
        %181 = vst.msk [vmem:[#allocation2 + $0x24] sm:$0xf] %vm170, 0
        %182 = vst.msk [vmem:[#allocation2 + $0x28] sm:$0xf] %vm170, 0
        %183 = vst.msk [vmem:[#allocation2 + $0x2c] sm:$0x1] %vm173, 0
        %184 = vst.msk [vmem:[#allocation2 + $0x30] sm:$0xf] %vm170, 0
        %185 = vst.msk [vmem:[#allocation2 + $0x34] sm:$0xf] %vm170, 0
        %186 = vst.msk [vmem:[#allocation2 + $0x38] sm:$0x1] %vm173, 0
        %187 = vst.msk [vmem:[#allocation2 + $0x3c] sm:$0xf] %vm170, 0
        %188 = vst.msk [vmem:[#allocation2 + $0x40] sm:$0xf] %vm170, 0
        %189 = vst.msk [vmem:[#allocation2 + $0x44] sm:$0x1] %vm173, 0
        %190 = vst.msk [vmem:[#allocation2 + $0x48] sm:$0xf] %vm170, 0
        %191 = vst.msk [vmem:[#allocation2 + $0x4c] sm:$0xf] %vm170, 0
        %192 = vst.msk [vmem:[#allocation2 + $0x50] sm:$0x1] %vm173, 0
        %193 = vst.msk [vmem:[#allocation2 + $0x54] sm:$0xf] %vm170, 0
        %194 = vst.msk [vmem:[#allocation2 + $0x58] sm:$0xf] %vm170, 0
        %195 = vst.msk [vmem:[#allocation2 + $0x5c] sm:$0x1] %vm173, 0
        %196 = vst.msk [vmem:[#allocation2 + $0x60] sm:$0xf] %vm170, 0
        %197 = vst.msk [vmem:[#allocation2 + $0x64] sm:$0xf] %vm170, 0
        %198 = vst.msk [vmem:[#allocation2 + $0x68] sm:$0x1] %vm173, 0
        %199 = vst.msk [vmem:[#allocation2 + $0x6c] sm:$0xf] %vm170, 0
        %200 = vst.msk [vmem:[#allocation2 + $0x70] sm:$0xf] %vm170, 0
        %201 = vst.msk [vmem:[#allocation2 + $0x74] sm:$0x1] %vm173, 0
        %202 = vst.msk [vmem:[#allocation2 + $0x78] sm:$0xf] %vm170, 0
        %203 = vst.msk [vmem:[#allocation2 + $0x7c] sm:$0xf] %vm170, 0
        %204 = vst.msk [vmem:[#allocation2 + $0x80] sm:$0x1] %vm173, 0
        %205 = vst.msk [vmem:[#allocation2 + $0x84] sm:$0xf] %vm170, 0
        %206 = vst.msk [vmem:[#allocation2 + $0x88] sm:$0xf] %vm170, 0
        %207 = vst.msk [vmem:[#allocation2 + $0x8c] sm:$0x1] %vm173, 0
        %208 = vst.msk [vmem:[#allocation2 + $0x90] sm:$0xf] %vm170, 0
        %209 = vst.msk [vmem:[#allocation2 + $0x94] sm:$0xf] %vm170, 0
        %210 = vst.msk [vmem:[#allocation2 + $0x98] sm:$0x1] %vm173, 0
        %211 = vst.msk [vmem:[#allocation2 + $0x9c] sm:$0xf] %vm170, 0
        %212 = vst.msk [vmem:[#allocation2 + $0xa0] sm:$0xf] %vm170, 0
        %213 = vst.msk [vmem:[#allocation2 + $0xa4] sm:$0x1] %vm173, 0
        %214 = vst.msk [vmem:[#allocation2 + $0xa8] sm:$0xf] %vm170, 0
        %215 = vst.msk [vmem:[#allocation2 + $0xac] sm:$0xf] %vm170, 0
        %216 = vst.msk [vmem:[#allocation2 + $0xb0] sm:$0x1] %vm173, 0
        %217 = vst.msk [vmem:[#allocation2 + $0xb4] sm:$0xf] %vm170, 0
        %218 = vst.msk [vmem:[#allocation2 + $0xb8] sm:$0xf] %vm170, 0
        %219 = vst.msk [vmem:[#allocation2 + $0xbc] sm:$0x1] %vm173, 0
        %220 = vst.msk [vmem:[#allocation2 + $0xc0] sm:$0xf] %vm170, 0
        %221 = vst.msk [vmem:[#allocation2 + $0xc4] sm:$0xf] %vm170, 0
        %222 = vst.msk [vmem:[#allocation2 + $0xc8] sm:$0x1] %vm173, 0
        %223 = vst.msk [vmem:[#allocation2 + $0xcc] sm:$0xf] %vm170, 0
        %224 = vst.msk [vmem:[#allocation2 + $0xd0] sm:$0xf] %vm170, 0
        %225 = vst.msk [vmem:[#allocation2 + $0xd4] sm:$0x1] %vm173, 0
        %v226 = vld [vmem:[%s168] sm:$0xf]
        %v227 = vld [vmem:[%s168 + $0x4] sm:$0xf]
        %v228 = vld [vmem:[%s168 + $0x8] sm:$0xf]
        %v229 = vld [vmem:[%s168 + $0xc] sm:$0xf]
        %v230 = vld [vmem:[%s168 + $0x10] sm:$0xf]
        %v231 = vld [vmem:[%s168 + $0x14] sm:$0xf]
        %v232 = vld [vmem:[%s168 + $0x18] sm:$0xf]
        %v233 = vld [vmem:[%s168 + $0x1c] sm:$0xf]
        %v234 = vld [vmem:[%s168 + $0x20] sm:$0xf]
        %v235 = vld [vmem:[%s168 + $0x24] sm:$0xf]
        %v236 = vld [vmem:[%s168 + $0x28] sm:$0xf]
        %v237 = vld [vmem:[%s168 + $0x2c] sm:$0xf]
        %v238 = vld [vmem:[%s168 + $0x30] sm:$0xf]
        %v239 = vld [vmem:[%s168 + $0x34] sm:$0xf]
        %v240 = vld [vmem:[%s168 + $0x38] sm:$0xf]
        %v241 = vld [vmem:[%s168 + $0x3c] sm:$0xf]
        %v242 = vld [vmem:[%s168 + $0x40] sm:$0xf]
        %v243 = vld [vmem:[%s168 + $0x44] sm:$0xf]
        %v244 = vld [vmem:[%s168 + $0x48] sm:$0xf]
        %v245 = vld [vmem:[%s168 + $0x4c] sm:$0xf]
        %v246 = vld [vmem:[%s168 + $0x50] sm:$0xf]
        %v247 = vld [vmem:[%s168 + $0x54] sm:$0xf]
        %v248 = vld [vmem:[%s168 + $0x58] sm:$0xf]
        %v249 = vld [vmem:[%s168 + $0x5c] sm:$0xf]
        %v250 = vld [vmem:[%s168 + $0x60] sm:$0xf]
        %v251 = vld [vmem:[%s168 + $0x64] sm:$0xf]
        %v252 = vld [vmem:[%s168 + $0x68] sm:$0xf]
        %v253 = vld [vmem:[%s168 + $0x6c] sm:$0xf]
        %v254 = vld [vmem:[%s168 + $0x70] sm:$0xf]
        %v255 = vld [vmem:[%s168 + $0x74] sm:$0xf]
        %v256 = vld [vmem:[%s168 + $0x78] sm:$0xf]
        %v257 = vld [vmem:[%s168 + $0x7c] sm:$0xf]
        %vm258 = vsmask.f32 256
        %vm259 = vsmask.f32 4368
        %vm260 = vmor %vm258, %vm259
        %v262 = vshrl.u32 %v226, 16
        %v264 = vrot.slane %v262, 7
        %v265 = vshll.u32 %v226, 16
        %v267 = vor.u32 %v264, %v265
        %v268 = vrot.slane %v264, 4
        %v270 = vshrl.u32 %v227, 16
        %v272 = vrot.slane %v270, 7
        %v273 = vshll.u32 %v227, 16
        %v275 = vor.u32 %v272, %v273
        %v276 = vsel %vm260, %v268, %v275
        %v277 = vrot.slane %v272, 4
        %v279 = vshrl.u32 %v228, 16
        %v281 = vrot.slane %v279, 7
        %v282 = vshll.u32 %v228, 16
        %v284 = vor.u32 %v281, %v282
        %v285 = vrot.slane %v281, 4
        %v287 = vshrl.u32 %v229, 16
        %v289 = vrot.slane %v287, 7
        %v290 = vshll.u32 %v229, 16
        %v292 = vor.u32 %v289, %v290
        %v293 = vsel %vm260, %v285, %v292
        %v294 = vrot.slane %v289, 4
        %v296 = vshrl.u32 %v230, 16
        %v298 = vrot.slane %v296, 7
        %v299 = vshll.u32 %v230, 16
        %v301 = vor.u32 %v298, %v299
        %v302 = vrot.slane %v298, 4
        %v304 = vshrl.u32 %v231, 16
        %v306 = vrot.slane %v304, 7
        %v307 = vshll.u32 %v231, 16
        %v309 = vor.u32 %v306, %v307
        %v310 = vsel %vm260, %v302, %v309
        %v311 = vrot.slane %v306, 4
        %v313 = vshrl.u32 %v232, 16
        %v315 = vrot.slane %v313, 7
        %v316 = vshll.u32 %v232, 16
        %v318 = vor.u32 %v315, %v316
        %v319 = vrot.slane %v315, 4
        %v321 = vshrl.u32 %v233, 16
        %v323 = vrot.slane %v321, 7
        %v324 = vshll.u32 %v233, 16
        %v326 = vor.u32 %v323, %v324
        %v327 = vsel %vm260, %v319, %v326
        %v328 = vrot.slane %v323, 4
        %v330 = vshrl.u32 %v234, 16
        %v332 = vrot.slane %v330, 7
        %v333 = vshll.u32 %v234, 16
        %v335 = vor.u32 %v332, %v333
        %v336 = vrot.slane %v332, 4
        %v338 = vshrl.u32 %v235, 16
        %v340 = vrot.slane %v338, 7
        %v341 = vshll.u32 %v235, 16
        %v343 = vor.u32 %v340, %v341
        %v344 = vsel %vm260, %v336, %v343
        %v345 = vrot.slane %v340, 4
        %v347 = vshrl.u32 %v236, 16
        %v349 = vrot.slane %v347, 7
        %v350 = vshll.u32 %v236, 16
        %v352 = vor.u32 %v349, %v350
        %v353 = vrot.slane %v349, 4
        %v355 = vshrl.u32 %v237, 16
        %v357 = vrot.slane %v355, 7
        %v358 = vshll.u32 %v237, 16
        %v360 = vor.u32 %v357, %v358
        %v361 = vsel %vm260, %v353, %v360
        %v362 = vrot.slane %v357, 4
        %v364 = vshrl.u32 %v238, 16
        %v366 = vrot.slane %v364, 7
        %v367 = vshll.u32 %v238, 16
        %v369 = vor.u32 %v366, %v367
        %v370 = vrot.slane %v366, 4
        %v372 = vshrl.u32 %v239, 16
        %v374 = vrot.slane %v372, 7
        %v375 = vshll.u32 %v239, 16
        %v377 = vor.u32 %v374, %v375
        %v378 = vsel %vm260, %v370, %v377
        %v379 = vrot.slane %v374, 4
        %v381 = vshrl.u32 %v240, 16
        %v383 = vrot.slane %v381, 7
        %v384 = vshll.u32 %v240, 16
        %v386 = vor.u32 %v383, %v384
        %v387 = vrot.slane %v383, 4
        %v389 = vshrl.u32 %v241, 16
        %v391 = vrot.slane %v389, 7
        %v392 = vshll.u32 %v241, 16
        %v394 = vor.u32 %v391, %v392
        %v395 = vsel %vm260, %v387, %v394
        %v396 = vrot.slane %v391, 4
        %v398 = vshrl.u32 %v242, 16
        %v400 = vrot.slane %v398, 7
        %v401 = vshll.u32 %v242, 16
        %v403 = vor.u32 %v400, %v401
        %v404 = vrot.slane %v400, 4
        %v406 = vshrl.u32 %v243, 16
        %v408 = vrot.slane %v406, 7
        %v409 = vshll.u32 %v243, 16
        %v411 = vor.u32 %v408, %v409
        %v412 = vsel %vm260, %v404, %v411
        %v413 = vrot.slane %v408, 4
        %v415 = vshrl.u32 %v244, 16
        %v417 = vrot.slane %v415, 7
        %v418 = vshll.u32 %v244, 16
        %v420 = vor.u32 %v417, %v418
        %v421 = vrot.slane %v417, 4
        %v423 = vshrl.u32 %v245, 16
        %v425 = vrot.slane %v423, 7
        %v426 = vshll.u32 %v245, 16
        %v428 = vor.u32 %v425, %v426
        %v429 = vsel %vm260, %v421, %v428
        %v430 = vrot.slane %v425, 4
        %v432 = vshrl.u32 %v246, 16
        %v434 = vrot.slane %v432, 7
        %v435 = vshll.u32 %v246, 16
        %v437 = vor.u32 %v434, %v435
        %v438 = vrot.slane %v434, 4
        %v440 = vshrl.u32 %v247, 16
        %v442 = vrot.slane %v440, 7
        %v443 = vshll.u32 %v247, 16
        %v445 = vor.u32 %v442, %v443
        %v446 = vsel %vm260, %v438, %v445
        %v447 = vrot.slane %v442, 4
        %v449 = vshrl.u32 %v248, 16
        %v451 = vrot.slane %v449, 7
        %v452 = vshll.u32 %v248, 16
        %v454 = vor.u32 %v451, %v452
        %v455 = vrot.slane %v451, 4
        %v457 = vshrl.u32 %v249, 16
        %v459 = vrot.slane %v457, 7
        %v460 = vshll.u32 %v249, 16
        %v462 = vor.u32 %v459, %v460
        %v463 = vsel %vm260, %v455, %v462
        %v464 = vrot.slane %v459, 4
        %v466 = vshrl.u32 %v250, 16
        %v468 = vrot.slane %v466, 7
        %v469 = vshll.u32 %v250, 16
        %v471 = vor.u32 %v468, %v469
        %v472 = vrot.slane %v468, 4
        %v474 = vshrl.u32 %v251, 16
        %v476 = vrot.slane %v474, 7
        %v477 = vshll.u32 %v251, 16
        %v479 = vor.u32 %v476, %v477
        %v480 = vsel %vm260, %v472, %v479
        %v481 = vrot.slane %v476, 4
        %v483 = vshrl.u32 %v252, 16
        %v485 = vrot.slane %v483, 7
        %v486 = vshll.u32 %v252, 16
        %v488 = vor.u32 %v485, %v486
        %v489 = vrot.slane %v485, 4
        %v491 = vshrl.u32 %v253, 16
        %v493 = vrot.slane %v491, 7
        %v494 = vshll.u32 %v253, 16
        %v496 = vor.u32 %v493, %v494
        %v497 = vsel %vm260, %v489, %v496
        %v498 = vrot.slane %v493, 4
        %v500 = vshrl.u32 %v254, 16
        %v502 = vrot.slane %v500, 7
        %v503 = vshll.u32 %v254, 16
        %v505 = vor.u32 %v502, %v503
        %v506 = vrot.slane %v502, 4
        %v508 = vshrl.u32 %v255, 16
        %v510 = vrot.slane %v508, 7
        %v511 = vshll.u32 %v255, 16
        %v513 = vor.u32 %v510, %v511
        %v514 = vsel %vm260, %v506, %v513
        %v515 = vrot.slane %v510, 4
        %v517 = vshrl.u32 %v256, 16
        %v519 = vrot.slane %v517, 7
        %v520 = vshll.u32 %v256, 16
        %v522 = vor.u32 %v519, %v520
        %v523 = vrot.slane %v519, 4
        %v525 = vshrl.u32 %v257, 16
        %v527 = vrot.slane %v525, 7
        %v528 = vshll.u32 %v257, 16
        %v530 = vor.u32 %v527, %v528
        %v531 = vsel %vm260, %v523, %v530
        %v532 = vrot.slane %v527, 4
        %s581 = scalar_lea.vmem [#allocation2], 12
        %vm582 = vcmask 257024
        %vm583 = vsmask.f32 7938
        %vm584 = vmand %vm582, %vm583
        %v585 = vld [vmem:[%s581] sm:$0xf]
        %v586 = vsel %vm584, %v267, %v585
        %587 = vst [vmem:[%s581] sm:$0xf] %v586
        %588 = vst.msk [vmem:[%s581 + $0x4] sm:$0xf] %vm170, %v276
        %vm589 = vcmask 253952
        %vm590 = vmand %vm589, %vm258
        %v591 = vld [vmem:[%s581 + $0x8] sm:$0x1]
        %v592 = vsel %vm590, %v277, %v591
        %593 = vst [vmem:[%s581 + $0x8] sm:$0x1] %v592
        %v594 = vld [vmem:[%s581 + $0xc] sm:$0xf]
        %v595 = vsel %vm584, %v284, %v594
        %596 = vst [vmem:[%s581 + $0xc] sm:$0xf] %v595
        %597 = vst.msk [vmem:[%s581 + $0x10] sm:$0xf] %vm170, %v293
        %v598 = vld [vmem:[%s581 + $0x14] sm:$0x1]
        %v599 = vsel %vm590, %v294, %v598
        %600 = vst [vmem:[%s581 + $0x14] sm:$0x1] %v599
        %v601 = vld [vmem:[%s581 + $0x18] sm:$0xf]
        %v602 = vsel %vm584, %v301, %v601
        %603 = vst [vmem:[%s581 + $0x18] sm:$0xf] %v602
        %604 = vst.msk [vmem:[%s581 + $0x1c] sm:$0xf] %vm170, %v310
        %v605 = vld [vmem:[%s581 + $0x20] sm:$0x1]
        %v606 = vsel %vm590, %v311, %v605
        %607 = vst [vmem:[%s581 + $0x20] sm:$0x1] %v606
        %v608 = vld [vmem:[%s581 + $0x24] sm:$0xf]
        %v609 = vsel %vm584, %v318, %v608
        %610 = vst [vmem:[%s581 + $0x24] sm:$0xf] %v609
        %611 = vst.msk [vmem:[%s581 + $0x28] sm:$0xf] %vm170, %v327
        %v612 = vld [vmem:[%s581 + $0x2c] sm:$0x1]
        %v613 = vsel %vm590, %v328, %v612
        %614 = vst [vmem:[%s581 + $0x2c] sm:$0x1] %v613
        %v615 = vld [vmem:[%s581 + $0x30] sm:$0xf]
        %v616 = vsel %vm584, %v335, %v615
        %617 = vst [vmem:[%s581 + $0x30] sm:$0xf] %v616
        %618 = vst.msk [vmem:[%s581 + $0x34] sm:$0xf] %vm170, %v344
        %v619 = vld [vmem:[%s581 + $0x38] sm:$0x1]
        %v620 = vsel %vm590, %v345, %v619
        %621 = vst [vmem:[%s581 + $0x38] sm:$0x1] %v620
        %v622 = vld [vmem:[%s581 + $0x3c] sm:$0xf]
        %v623 = vsel %vm584, %v352, %v622
        %624 = vst [vmem:[%s581 + $0x3c] sm:$0xf] %v623
        %625 = vst.msk [vmem:[%s581 + $0x40] sm:$0xf] %vm170, %v361
        %v626 = vld [vmem:[%s581 + $0x44] sm:$0x1]
        %v627 = vsel %vm590, %v362, %v626
        %628 = vst [vmem:[%s581 + $0x44] sm:$0x1] %v627
        %v629 = vld [vmem:[%s581 + $0x48] sm:$0xf]
        %v630 = vsel %vm584, %v369, %v629
        %631 = vst [vmem:[%s581 + $0x48] sm:$0xf] %v630
        %632 = vst.msk [vmem:[%s581 + $0x4c] sm:$0xf] %vm170, %v378
        %v633 = vld [vmem:[%s581 + $0x50] sm:$0x1]
        %v634 = vsel %vm590, %v379, %v633
        %635 = vst [vmem:[%s581 + $0x50] sm:$0x1] %v634
        %v636 = vld [vmem:[%s581 + $0x54] sm:$0xf]
        %v637 = vsel %vm584, %v386, %v636
        %638 = vst [vmem:[%s581 + $0x54] sm:$0xf] %v637
        %639 = vst.msk [vmem:[%s581 + $0x58] sm:$0xf] %vm170, %v395
        %v640 = vld [vmem:[%s581 + $0x5c] sm:$0x1]
        %v641 = vsel %vm590, %v396, %v640
        %642 = vst [vmem:[%s581 + $0x5c] sm:$0x1] %v641
        %v643 = vld [vmem:[%s581 + $0x60] sm:$0xf]
        %v644 = vsel %vm584, %v403, %v643
        %645 = vst [vmem:[%s581 + $0x60] sm:$0xf] %v644
        %646 = vst.msk [vmem:[%s581 + $0x64] sm:$0xf] %vm170, %v412
        %v647 = vld [vmem:[%s581 + $0x68] sm:$0x1]
        %v648 = vsel %vm590, %v413, %v647
        %649 = vst [vmem:[%s581 + $0x68] sm:$0x1] %v648
        %v650 = vld [vmem:[%s581 + $0x6c] sm:$0xf]
        %v651 = vsel %vm584, %v420, %v650
        %652 = vst [vmem:[%s581 + $0x6c] sm:$0xf] %v651
        %653 = vst.msk [vmem:[%s581 + $0x70] sm:$0xf] %vm170, %v429
        %v654 = vld [vmem:[%s581 + $0x74] sm:$0x1]
        %v655 = vsel %vm590, %v430, %v654
        %656 = vst [vmem:[%s581 + $0x74] sm:$0x1] %v655
        %v657 = vld [vmem:[%s581 + $0x78] sm:$0xf]
        %v658 = vsel %vm584, %v437, %v657
        %659 = vst [vmem:[%s581 + $0x78] sm:$0xf] %v658
        %660 = vst.msk [vmem:[%s581 + $0x7c] sm:$0xf] %vm170, %v446
        %v661 = vld [vmem:[%s581 + $0x80] sm:$0x1]
        %v662 = vsel %vm590, %v447, %v661
        %663 = vst [vmem:[%s581 + $0x80] sm:$0x1] %v662
        %v664 = vld [vmem:[%s581 + $0x84] sm:$0xf]
        %v665 = vsel %vm584, %v454, %v664
        %666 = vst [vmem:[%s581 + $0x84] sm:$0xf] %v665
        %667 = vst.msk [vmem:[%s581 + $0x88] sm:$0xf] %vm170, %v463
        %v668 = vld [vmem:[%s581 + $0x8c] sm:$0x1]
        %v669 = vsel %vm590, %v464, %v668
        %670 = vst [vmem:[%s581 + $0x8c] sm:$0x1] %v669
        %v671 = vld [vmem:[%s581 + $0x90] sm:$0xf]
        %v672 = vsel %vm584, %v471, %v671
        %673 = vst [vmem:[%s581 + $0x90] sm:$0xf] %v672
        %674 = vst.msk [vmem:[%s581 + $0x94] sm:$0xf] %vm170, %v480
        %v675 = vld [vmem:[%s581 + $0x98] sm:$0x1]
        %v676 = vsel %vm590, %v481, %v675
        %677 = vst [vmem:[%s581 + $0x98] sm:$0x1] %v676
        %v678 = vld [vmem:[%s581 + $0x9c] sm:$0xf]
        %v679 = vsel %vm584, %v488, %v678
        %680 = vst [vmem:[%s581 + $0x9c] sm:$0xf] %v679
        %681 = vst.msk [vmem:[%s581 + $0xa0] sm:$0xf] %vm170, %v497
        %v682 = vld [vmem:[%s581 + $0xa4] sm:$0x1]
        %v683 = vsel %vm590, %v498, %v682
        %684 = vst [vmem:[%s581 + $0xa4] sm:$0x1] %v683
        %v685 = vld [vmem:[%s581 + $0xa8] sm:$0xf]
        %v686 = vsel %vm584, %v505, %v685
        %687 = vst [vmem:[%s581 + $0xa8] sm:$0xf] %v686
        %688 = vst.msk [vmem:[%s581 + $0xac] sm:$0xf] %vm170, %v514
        %v689 = vld [vmem:[%s581 + $0xb0] sm:$0x1]
        %v690 = vsel %vm590, %v515, %v689
        %691 = vst [vmem:[%s581 + $0xb0] sm:$0x1] %v690
        %v692 = vld [vmem:[%s581 + $0xb4] sm:$0xf]
        %v693 = vsel %vm584, %v522, %v692
        %694 = vst [vmem:[%s581 + $0xb4] sm:$0xf] %v693
        %695 = vst.msk [vmem:[%s581 + $0xb8] sm:$0xf] %vm170, %v531
        %v696 = vld [vmem:[%s581 + $0xbc] sm:$0x1]
        %v697 = vsel %vm590, %v532, %v696
        %698 = vst [vmem:[%s581 + $0xbc] sm:$0x1] %v697
        %v699 = vld [vmem:[#allocation2] sm:$0xf]
        %v700 = vld [vmem:[#allocation2 + $0x4] sm:$0xf]
        %v701 = vld [vmem:[#allocation2 + $0xc] sm:$0xf]
        %v702 = vld [vmem:[#allocation2 + $0x10] sm:$0xf]
        %v703 = vld [vmem:[#allocation2 + $0x18] sm:$0xf]
        %v704 = vld [vmem:[#allocation2 + $0x1c] sm:$0xf]
        %v705 = vld [vmem:[#allocation2 + $0x24] sm:$0xf]
        %v706 = vld [vmem:[#allocation2 + $0x28] sm:$0xf]
        %v707 = vld [vmem:[#allocation2 + $0x30] sm:$0xf]
        %v708 = vld [vmem:[#allocation2 + $0x34] sm:$0xf]
        %v709 = vld [vmem:[#allocation2 + $0x3c] sm:$0xf]
        %v710 = vld [vmem:[#allocation2 + $0x40] sm:$0xf]
        %v711 = vld [vmem:[#allocation2 + $0x48] sm:$0xf]
        %v712 = vld [vmem:[#allocation2 + $0x4c] sm:$0xf]
        %v713 = vld [vmem:[#allocation2 + $0x54] sm:$0xf]
        %v714 = vld [vmem:[#allocation2 + $0x58] sm:$0xf]
        %v715 = vld [vmem:[#allocation2 + $0x60] sm:$0xf]
        %v716 = vld [vmem:[#allocation2 + $0x64] sm:$0xf]
        %v717 = vld [vmem:[#allocation2 + $0x6c] sm:$0xf]
        %v718 = vld [vmem:[#allocation2 + $0x70] sm:$0xf]
        %v719 = vld [vmem:[#allocation2 + $0x78] sm:$0xf]
        %v720 = vld [vmem:[#allocation2 + $0x7c] sm:$0xf]
        %v721 = vld [vmem:[#allocation2 + $0x84] sm:$0xf]
        %v722 = vld [vmem:[#allocation2 + $0x88] sm:$0xf]
        %v723 = vld [vmem:[#allocation2 + $0x90] sm:$0xf]
        %v724 = vld [vmem:[#allocation2 + $0x94] sm:$0xf]
        %v725 = vld [vmem:[#allocation2 + $0x9c] sm:$0xf]
        %v726 = vld [vmem:[#allocation2 + $0xa0] sm:$0xf]
        %v727 = vld [vmem:[#allocation2 + $0xa8] sm:$0xf]
        %v728 = vld [vmem:[#allocation2 + $0xac] sm:$0xf]
        %v729 = vld [vmem:[#allocation2 + $0xb4] sm:$0xf]
        %v730 = vld [vmem:[#allocation2 + $0xb8] sm:$0xf]
        %731 = vst.msk [vmem:[#allocation3] sm:$0xf] %vm170, %v699
        %732 = vst.msk [vmem:[#allocation3 + $0xc] sm:$0xf] %vm170, %v700
        %733 = vst.msk [vmem:[#allocation3 + $0x18] sm:$0xf] %vm170, %v701
        %734 = vst.msk [vmem:[#allocation3 + $0x24] sm:$0xf] %vm170, %v702
        %735 = vst.msk [vmem:[#allocation3 + $0x30] sm:$0xf] %vm170, %v703
        %736 = vst.msk [vmem:[#allocation3 + $0x3c] sm:$0xf] %vm170, %v704
        %737 = vst.msk [vmem:[#allocation3 + $0x48] sm:$0xf] %vm170, %v705
        %738 = vst.msk [vmem:[#allocation3 + $0x54] sm:$0xf] %vm170, %v706
        %739 = vst.msk [vmem:[#allocation3 + $0x60] sm:$0xf] %vm170, %v707
        %740 = vst.msk [vmem:[#allocation3 + $0x6c] sm:$0xf] %vm170, %v708
        %741 = vst.msk [vmem:[#allocation3 + $0x78] sm:$0xf] %vm170, %v709
        %742 = vst.msk [vmem:[#allocation3 + $0x84] sm:$0xf] %vm170, %v710
        %743 = vst.msk [vmem:[#allocation3 + $0x90] sm:$0xf] %vm170, %v711
        %744 = vst.msk [vmem:[#allocation3 + $0x9c] sm:$0xf] %vm170, %v712
        %745 = vst.msk [vmem:[#allocation3 + $0xa8] sm:$0xf] %vm170, %v713
        %746 = vst.msk [vmem:[#allocation3 + $0xb4] sm:$0xf] %vm170, %v714
        %747 = vst.msk [vmem:[#allocation3 + $0xc0] sm:$0xf] %vm170, %v715
        %748 = vst.msk [vmem:[#allocation3 + $0xcc] sm:$0xf] %vm170, %v716
        %749 = vst.msk [vmem:[#allocation3 + $0xd8] sm:$0xf] %vm170, %v717
        %750 = vst.msk [vmem:[#allocation3 + $0xe4] sm:$0xf] %vm170, %v718
        %751 = vst.msk [vmem:[#allocation3 + $0xf0] sm:$0xf] %vm170, %v719
        %752 = vst.msk [vmem:[#allocation3 + $0xfc] sm:$0xf] %vm170, %v720
        %753 = vst.msk [vmem:[#allocation3 + $0x108] sm:$0xf] %vm170, %v721
        %754 = vst.msk [vmem:[#allocation3 + $0x114] sm:$0xf] %vm170, %v722
        %755 = vst.msk [vmem:[#allocation3 + $0x120] sm:$0xf] %vm170, %v723
        %756 = vst.msk [vmem:[#allocation3 + $0x12c] sm:$0xf] %vm170, %v724
        %757 = vst.msk [vmem:[#allocation3 + $0x138] sm:$0xf] %vm170, %v725
        %758 = vst.msk [vmem:[#allocation3 + $0x144] sm:$0xf] %vm170, %v726
        %759 = vst.msk [vmem:[#allocation3 + $0x150] sm:$0xf] %vm170, %v727
        %760 = vst.msk [vmem:[#allocation3 + $0x15c] sm:$0xf] %vm170, %v728
        %761 = vst.msk [vmem:[#allocation3 + $0x168] sm:$0xf] %vm170, %v729
        %762 = vst.msk [vmem:[#allocation3 + $0x174] sm:$0xf] %vm170, %v730
        %v763 = vld [vmem:[#allocation2] sm:$0xf]
        %v764 = vld [vmem:[#allocation2 + $0x4] sm:$0xf]
        %v765 = vld [vmem:[#allocation2 + $0x8] sm:$0x1]
        %v766 = vld [vmem:[#allocation2 + $0xc] sm:$0xf]
        %v767 = vld [vmem:[#allocation2 + $0x10] sm:$0xf]
        %v768 = vld [vmem:[#allocation2 + $0x14] sm:$0x1]
        %v769 = vld [vmem:[#allocation2 + $0x18] sm:$0xf]
        %v770 = vld [vmem:[#allocation2 + $0x1c] sm:$0xf]
        %v771 = vld [vmem:[#allocation2 + $0x20] sm:$0x1]
        %v772 = vld [vmem:[#allocation2 + $0x24] sm:$0xf]
        %v773 = vld [vmem:[#allocation2 + $0x28] sm:$0xf]
        %v774 = vld [vmem:[#allocation2 + $0x2c] sm:$0x1]
        %v775 = vld [vmem:[#allocation2 + $0x30] sm:$0xf]
        %v776 = vld [vmem:[#allocation2 + $0x34] sm:$0xf]
        %v777 = vld [vmem:[#allocation2 + $0x38] sm:$0x1]
        %v778 = vld [vmem:[#allocation2 + $0x3c] sm:$0xf]
        %v779 = vld [vmem:[#allocation2 + $0x40] sm:$0xf]
        %v780 = vld [vmem:[#allocation2 + $0x44] sm:$0x1]
        %v781 = vld [vmem:[#allocation2 + $0x48] sm:$0xf]
        %v782 = vld [vmem:[#allocation2 + $0x4c] sm:$0xf]
        %v783 = vld [vmem:[#allocation2 + $0x50] sm:$0x1]
        %v784 = vld [vmem:[#allocation2 + $0x54] sm:$0xf]
        %v785 = vld [vmem:[#allocation2 + $0x58] sm:$0xf]
        %v786 = vld [vmem:[#allocation2 + $0x5c] sm:$0x1]
        %v787 = vld [vmem:[#allocation2 + $0x60] sm:$0xf]
        %v788 = vld [vmem:[#allocation2 + $0x64] sm:$0xf]
        %v789 = vld [vmem:[#allocation2 + $0x68] sm:$0x1]
        %v790 = vld [vmem:[#allocation2 + $0x6c] sm:$0xf]
        %v791 = vld [vmem:[#allocation2 + $0x70] sm:$0xf]
        %v792 = vld [vmem:[#allocation2 + $0x74] sm:$0x1]
        %v793 = vld [vmem:[#allocation2 + $0x78] sm:$0xf]
        %v794 = vld [vmem:[#allocation2 + $0x7c] sm:$0xf]
        %v795 = vld [vmem:[#allocation2 + $0x80] sm:$0x1]
        %v796 = vld [vmem:[#allocation2 + $0x84] sm:$0xf]
        %v797 = vld [vmem:[#allocation2 + $0x88] sm:$0xf]
        %v798 = vld [vmem:[#allocation2 + $0x8c] sm:$0x1]
        %v799 = vld [vmem:[#allocation2 + $0x90] sm:$0xf]
        %v800 = vld [vmem:[#allocation2 + $0x94] sm:$0xf]
        %v801 = vld [vmem:[#allocation2 + $0x98] sm:$0x1]
        %v802 = vld [vmem:[#allocation2 + $0x9c] sm:$0xf]
        %v803 = vld [vmem:[#allocation2 + $0xa0] sm:$0xf]
        %v804 = vld [vmem:[#allocation2 + $0xa4] sm:$0x1]
        %v805 = vld [vmem:[#allocation2 + $0xa8] sm:$0xf]
        %v806 = vld [vmem:[#allocation2 + $0xac] sm:$0xf]
        %v807 = vld [vmem:[#allocation2 + $0xb0] sm:$0x1]
        %v808 = vld [vmem:[#allocation2 + $0xb4] sm:$0xf]
        %v809 = vld [vmem:[#allocation2 + $0xb8] sm:$0xf]
        %v810 = vld [vmem:[#allocation2 + $0xbc] sm:$0x1]
        %vm811 = vsmask.f32 3328
        %vm812 = vsmask.f32 7440
        %vm813 = vmor %vm811, %vm812
        %v815 = vshrl.u32 %v763, 16
        %v817 = vrot.slane %v815, 4
        %v818 = vshll.u32 %v763, 16
        %v820 = vrot.slane %v818, 5
        %v821 = vor.u32 %v817, %v820
        %v822 = vrot.slane %v821, 4
        %v824 = vshll.u32 %v764, 16
        %v826 = vrot.slane %v824, 5
        %v827 = vsel %vm813, %v822, %v826
        %v828 = vshrl.u32 %v764, 16
        %v830 = vrot.slane %v828, 4
        %v831 = vor.u32 %v830, %v826
        %v832 = vrot.slane %v831, 4
        %v834 = vshll.u32 %v765, 16
        %v836 = vrot.slane %v834, 5
        %v837 = vsel %vm813, %v832, %v836
        %v839 = vshrl.u32 %v766, 16
        %v841 = vrot.slane %v839, 4
        %v842 = vshll.u32 %v766, 16
        %v844 = vrot.slane %v842, 5
        %v845 = vor.u32 %v841, %v844
        %v846 = vrot.slane %v845, 4
        %v848 = vshll.u32 %v767, 16
        %v850 = vrot.slane %v848, 5
        %v851 = vsel %vm813, %v846, %v850
        %v852 = vshrl.u32 %v767, 16
        %v854 = vrot.slane %v852, 4
        %v855 = vor.u32 %v854, %v850
        %v856 = vrot.slane %v855, 4
        %v858 = vshll.u32 %v768, 16
        %v860 = vrot.slane %v858, 5
        %v861 = vsel %vm813, %v856, %v860
        %v863 = vshrl.u32 %v769, 16
        %v865 = vrot.slane %v863, 4
        %v866 = vshll.u32 %v769, 16
        %v868 = vrot.slane %v866, 5
        %v869 = vor.u32 %v865, %v868
        %v870 = vrot.slane %v869, 4
        %v872 = vshll.u32 %v770, 16
        %v874 = vrot.slane %v872, 5
        %v875 = vsel %vm813, %v870, %v874
        %v876 = vshrl.u32 %v770, 16
        %v878 = vrot.slane %v876, 4
        %v879 = vor.u32 %v878, %v874
        %v880 = vrot.slane %v879, 4
        %v882 = vshll.u32 %v771, 16
        %v884 = vrot.slane %v882, 5
        %v885 = vsel %vm813, %v880, %v884
        %v887 = vshrl.u32 %v772, 16
        %v889 = vrot.slane %v887, 4
        %v890 = vshll.u32 %v772, 16
        %v892 = vrot.slane %v890, 5
        %v893 = vor.u32 %v889, %v892
        %v894 = vrot.slane %v893, 4
        %v896 = vshll.u32 %v773, 16
        %v898 = vrot.slane %v896, 5
        %v899 = vsel %vm813, %v894, %v898
        %v900 = vshrl.u32 %v773, 16
        %v902 = vrot.slane %v900, 4
        %v903 = vor.u32 %v902, %v898
        %v904 = vrot.slane %v903, 4
        %v906 = vshll.u32 %v774, 16
        %v908 = vrot.slane %v906, 5
        %v909 = vsel %vm813, %v904, %v908
        %v911 = vshrl.u32 %v775, 16
        %v913 = vrot.slane %v911, 4
        %v914 = vshll.u32 %v775, 16
        %v916 = vrot.slane %v914, 5
        %v917 = vor.u32 %v913, %v916
        %v918 = vrot.slane %v917, 4
        %v920 = vshll.u32 %v776, 16
        %v922 = vrot.slane %v920, 5
        %v923 = vsel %vm813, %v918, %v922
        %v924 = vshrl.u32 %v776, 16
        %v926 = vrot.slane %v924, 4
        %v927 = vor.u32 %v926, %v922
        %v928 = vrot.slane %v927, 4
        %v930 = vshll.u32 %v777, 16
        %v932 = vrot.slane %v930, 5
        %v933 = vsel %vm813, %v928, %v932
        %v935 = vshrl.u32 %v778, 16
        %v937 = vrot.slane %v935, 4
        %v938 = vshll.u32 %v778, 16
        %v940 = vrot.slane %v938, 5
        %v941 = vor.u32 %v937, %v940
        %v942 = vrot.slane %v941, 4
        %v944 = vshll.u32 %v779, 16
        %v946 = vrot.slane %v944, 5
        %v947 = vsel %vm813, %v942, %v946
        %v948 = vshrl.u32 %v779, 16
        %v950 = vrot.slane %v948, 4
        %v951 = vor.u32 %v950, %v946
        %v952 = vrot.slane %v951, 4
        %v954 = vshll.u32 %v780, 16
        %v956 = vrot.slane %v954, 5
        %v957 = vsel %vm813, %v952, %v956
        %v959 = vshrl.u32 %v781, 16
        %v961 = vrot.slane %v959, 4
        %v962 = vshll.u32 %v781, 16
        %v964 = vrot.slane %v962, 5
        %v965 = vor.u32 %v961, %v964
        %v966 = vrot.slane %v965, 4
        %v968 = vshll.u32 %v782, 16
        %v970 = vrot.slane %v968, 5
        %v971 = vsel %vm813, %v966, %v970
        %v972 = vshrl.u32 %v782, 16
        %v974 = vrot.slane %v972, 4
        %v975 = vor.u32 %v974, %v970
        %v976 = vrot.slane %v975, 4
        %v978 = vshll.u32 %v783, 16
        %v980 = vrot.slane %v978, 5
        %v981 = vsel %vm813, %v976, %v980
        %v983 = vshrl.u32 %v784, 16
        %v985 = vrot.slane %v983, 4
        %v986 = vshll.u32 %v784, 16
        %v988 = vrot.slane %v986, 5
        %v989 = vor.u32 %v985, %v988
        %v990 = vrot.slane %v989, 4
        %v992 = vshll.u32 %v785, 16
        %v994 = vrot.slane %v992, 5
        %v995 = vsel %vm813, %v990, %v994
        %v996 = vshrl.u32 %v785, 16
        %v998 = vrot.slane %v996, 4
        %v999 = vor.u32 %v998, %v994
        %v1000 = vrot.slane %v999, 4
        %v1002 = vshll.u32 %v786, 16
        %v1004 = vrot.slane %v1002, 5
        %v1005 = vsel %vm813, %v1000, %v1004
        %v1007 = vshrl.u32 %v787, 16
        %v1009 = vrot.slane %v1007, 4
        %v1010 = vshll.u32 %v787, 16
        %v1012 = vrot.slane %v1010, 5
        %v1013 = vor.u32 %v1009, %v1012
        %v1014 = vrot.slane %v1013, 4
        %v1016 = vshll.u32 %v788, 16
        %v1018 = vrot.slane %v1016, 5
        %v1019 = vsel %vm813, %v1014, %v1018
        %v1020 = vshrl.u32 %v788, 16
        %v1022 = vrot.slane %v1020, 4
        %v1023 = vor.u32 %v1022, %v1018
        %v1024 = vrot.slane %v1023, 4
        %v1026 = vshll.u32 %v789, 16
        %v1028 = vrot.slane %v1026, 5
        %v1029 = vsel %vm813, %v1024, %v1028
        %v1031 = vshrl.u32 %v790, 16
        %v1033 = vrot.slane %v1031, 4
        %v1034 = vshll.u32 %v790, 16
        %v1036 = vrot.slane %v1034, 5
        %v1037 = vor.u32 %v1033, %v1036
        %v1038 = vrot.slane %v1037, 4
        %v1040 = vshll.u32 %v791, 16
        %v1042 = vrot.slane %v1040, 5
        %v1043 = vsel %vm813, %v1038, %v1042
        %v1044 = vshrl.u32 %v791, 16
        %v1046 = vrot.slane %v1044, 4
        %v1047 = vor.u32 %v1046, %v1042
        %v1048 = vrot.slane %v1047, 4
        %v1050 = vshll.u32 %v792, 16
        %v1052 = vrot.slane %v1050, 5
        %v1053 = vsel %vm813, %v1048, %v1052
        %v1055 = vshrl.u32 %v793, 16
        %v1057 = vrot.slane %v1055, 4
        %v1058 = vshll.u32 %v793, 16
        %v1060 = vrot.slane %v1058, 5
        %v1061 = vor.u32 %v1057, %v1060
        %v1062 = vrot.slane %v1061, 4
        %v1064 = vshll.u32 %v794, 16
        %v1066 = vrot.slane %v1064, 5
        %v1067 = vsel %vm813, %v1062, %v1066
        %v1068 = vshrl.u32 %v794, 16
        %v1070 = vrot.slane %v1068, 4
        %v1071 = vor.u32 %v1070, %v1066
        %v1072 = vrot.slane %v1071, 4
        %v1074 = vshll.u32 %v795, 16
        %v1076 = vrot.slane %v1074, 5
        %v1077 = vsel %vm813, %v1072, %v1076
        %v1079 = vshrl.u32 %v796, 16
        %v1081 = vrot.slane %v1079, 4
        %v1082 = vshll.u32 %v796, 16
        %v1084 = vrot.slane %v1082, 5
        %v1085 = vor.u32 %v1081, %v1084
        %v1086 = vrot.slane %v1085, 4
        %v1088 = vshll.u32 %v797, 16
        %v1090 = vrot.slane %v1088, 5
        %v1091 = vsel %vm813, %v1086, %v1090
        %v1092 = vshrl.u32 %v797, 16
        %v1094 = vrot.slane %v1092, 4
        %v1095 = vor.u32 %v1094, %v1090
        %v1096 = vrot.slane %v1095, 4
        %v1098 = vshll.u32 %v798, 16
        %v1100 = vrot.slane %v1098, 5
        %v1101 = vsel %vm813, %v1096, %v1100
        %v1103 = vshrl.u32 %v799, 16
        %v1105 = vrot.slane %v1103, 4
        %v1106 = vshll.u32 %v799, 16
        %v1108 = vrot.slane %v1106, 5
        %v1109 = vor.u32 %v1105, %v1108
        %v1110 = vrot.slane %v1109, 4
        %v1112 = vshll.u32 %v800, 16
        %v1114 = vrot.slane %v1112, 5
        %v1115 = vsel %vm813, %v1110, %v1114
        %v1116 = vshrl.u32 %v800, 16
        %v1118 = vrot.slane %v1116, 4
        %v1119 = vor.u32 %v1118, %v1114
        %v1120 = vrot.slane %v1119, 4
        %v1122 = vshll.u32 %v801, 16
        %v1124 = vrot.slane %v1122, 5
        %v1125 = vsel %vm813, %v1120, %v1124
        %v1127 = vshrl.u32 %v802, 16
        %v1129 = vrot.slane %v1127, 4
        %v1130 = vshll.u32 %v802, 16
        %v1132 = vrot.slane %v1130, 5
        %v1133 = vor.u32 %v1129, %v1132
        %v1134 = vrot.slane %v1133, 4
        %v1136 = vshll.u32 %v803, 16
        %v1138 = vrot.slane %v1136, 5
        %v1139 = vsel %vm813, %v1134, %v1138
        %v1140 = vshrl.u32 %v803, 16
        %v1142 = vrot.slane %v1140, 4
        %v1143 = vor.u32 %v1142, %v1138
        %v1144 = vrot.slane %v1143, 4
        %v1146 = vshll.u32 %v804, 16
        %v1148 = vrot.slane %v1146, 5
        %v1149 = vsel %vm813, %v1144, %v1148
        %v1151 = vshrl.u32 %v805, 16
        %v1153 = vrot.slane %v1151, 4
        %v1154 = vshll.u32 %v805, 16
        %v1156 = vrot.slane %v1154, 5
        %v1157 = vor.u32 %v1153, %v1156
        %v1158 = vrot.slane %v1157, 4
        %v1160 = vshll.u32 %v806, 16
        %v1162 = vrot.slane %v1160, 5
        %v1163 = vsel %vm813, %v1158, %v1162
        %v1164 = vshrl.u32 %v806, 16
        %v1166 = vrot.slane %v1164, 4
        %v1167 = vor.u32 %v1166, %v1162
        %v1168 = vrot.slane %v1167, 4
        %v1170 = vshll.u32 %v807, 16
        %v1172 = vrot.slane %v1170, 5
        %v1173 = vsel %vm813, %v1168, %v1172
        %v1175 = vshrl.u32 %v808, 16
        %v1177 = vrot.slane %v1175, 4
        %v1178 = vshll.u32 %v808, 16
        %v1180 = vrot.slane %v1178, 5
        %v1181 = vor.u32 %v1177, %v1180
        %v1182 = vrot.slane %v1181, 4
        %v1184 = vshll.u32 %v809, 16
        %v1186 = vrot.slane %v1184, 5
        %v1187 = vsel %vm813, %v1182, %v1186
        %v1188 = vshrl.u32 %v809, 16
        %v1190 = vrot.slane %v1188, 4
        %v1191 = vor.u32 %v1190, %v1186
        %v1192 = vrot.slane %v1191, 4
        %v1194 = vshll.u32 %v810, 16
        %v1196 = vrot.slane %v1194, 5
        %v1197 = vsel %vm813, %v1192, %v1196
        %1198 = vrot.lane.b32.xlu0 %v827, 32
        %v1199 = vpop.permute.xlu0 %1198
        %1200 = vrot.lane.b32.xlu0 %v837, 32
        %v1201 = vpop.permute.xlu0 %1200
        %1202 = vrot.lane.b32.xlu0 %v851, 32
        %v1203 = vpop.permute.xlu0 %1202
        %1204 = vrot.lane.b32.xlu0 %v861, 32
        %v1205 = vpop.permute.xlu0 %1204
        %1206 = vrot.lane.b32.xlu0 %v875, 32
        %v1207 = vpop.permute.xlu0 %1206
        %1208 = vrot.lane.b32.xlu0 %v885, 32
        %v1209 = vpop.permute.xlu0 %1208
        %1210 = vrot.lane.b32.xlu0 %v899, 32
        %v1211 = vpop.permute.xlu0 %1210
        %1212 = vrot.lane.b32.xlu0 %v909, 32
        %v1213 = vpop.permute.xlu0 %1212
        %1214 = vrot.lane.b32.xlu0 %v923, 32
        %v1215 = vpop.permute.xlu0 %1214
        %1216 = vrot.lane.b32.xlu0 %v933, 32
        %v1217 = vpop.permute.xlu0 %1216
        %1218 = vrot.lane.b32.xlu0 %v947, 32
        %v1219 = vpop.permute.xlu0 %1218
        %1220 = vrot.lane.b32.xlu0 %v957, 32
        %v1221 = vpop.permute.xlu0 %1220
        %1222 = vrot.lane.b32.xlu0 %v971, 32
        %v1223 = vpop.permute.xlu0 %1222
        %1224 = vrot.lane.b32.xlu0 %v981, 32
        %v1225 = vpop.permute.xlu0 %1224
        %1226 = vrot.lane.b32.xlu0 %v995, 32
        %v1227 = vpop.permute.xlu0 %1226
        %1228 = vrot.lane.b32.xlu0 %v1005, 32
        %v1229 = vpop.permute.xlu0 %1228
        %1230 = vrot.lane.b32.xlu0 %v1019, 32
        %v1231 = vpop.permute.xlu0 %1230
        %1232 = vrot.lane.b32.xlu0 %v1029, 32
        %v1233 = vpop.permute.xlu0 %1232
        %1234 = vrot.lane.b32.xlu0 %v1043, 32
        %v1235 = vpop.permute.xlu0 %1234
        %1236 = vrot.lane.b32.xlu0 %v1053, 32
        %v1237 = vpop.permute.xlu0 %1236
        %1238 = vrot.lane.b32.xlu0 %v1067, 32
        %v1239 = vpop.permute.xlu0 %1238
        %1240 = vrot.lane.b32.xlu0 %v1077, 32
        %v1241 = vpop.permute.xlu0 %1240
        %1242 = vrot.lane.b32.xlu0 %v1091, 32
        %v1243 = vpop.permute.xlu0 %1242
        %1244 = vrot.lane.b32.xlu0 %v1101, 32
        %v1245 = vpop.permute.xlu0 %1244
        %1246 = vrot.lane.b32.xlu0 %v1115, 32
        %v1247 = vpop.permute.xlu0 %1246
        %1248 = vrot.lane.b32.xlu0 %v1125, 32
        %v1249 = vpop.permute.xlu0 %1248
        %1250 = vrot.lane.b32.xlu0 %v1139, 32
        %v1251 = vpop.permute.xlu0 %1250
        %1252 = vrot.lane.b32.xlu0 %v1149, 32
        %v1253 = vpop.permute.xlu0 %1252
        %1254 = vrot.lane.b32.xlu0 %v1163, 32
        %v1255 = vpop.permute.xlu0 %1254
        %1256 = vrot.lane.b32.xlu0 %v1173, 32
        %v1257 = vpop.permute.xlu0 %1256
        %1258 = vrot.lane.b32.xlu0 %v1187, 32
        %v1259 = vpop.permute.xlu0 %1258
        %1260 = vrot.lane.b32.xlu0 %v1197, 32
        %v1261 = vpop.permute.xlu0 %1260
        %vm1294 = vcmask 519424
        %1295 = vst.msk [vmem:[#allocation3] sm:$0xf] %vm1294, %v1199
        %1296 = vst.msk [vmem:[#allocation3 + $0xc] sm:$0xf] %vm1294, %v1201
        %1297 = vst.msk [vmem:[#allocation3 + $0x18] sm:$0xf] %vm1294, %v1203
        %1298 = vst.msk [vmem:[#allocation3 + $0x24] sm:$0xf] %vm1294, %v1205
        %1299 = vst.msk [vmem:[#allocation3 + $0x30] sm:$0xf] %vm1294, %v1207
        %1300 = vst.msk [vmem:[#allocation3 + $0x3c] sm:$0xf] %vm1294, %v1209
        %1301 = vst.msk [vmem:[#allocation3 + $0x48] sm:$0xf] %vm1294, %v1211
        %1302 = vst.msk [vmem:[#allocation3 + $0x54] sm:$0xf] %vm1294, %v1213
        %1303 = vst.msk [vmem:[#allocation3 + $0x60] sm:$0xf] %vm1294, %v1215
        %1304 = vst.msk [vmem:[#allocation3 + $0x6c] sm:$0xf] %vm1294, %v1217
        %1305 = vst.msk [vmem:[#allocation3 + $0x78] sm:$0xf] %vm1294, %v1219
        %1306 = vst.msk [vmem:[#allocation3 + $0x84] sm:$0xf] %vm1294, %v1221
        %1307 = vst.msk [vmem:[#allocation3 + $0x90] sm:$0xf] %vm1294, %v1223
        %1308 = vst.msk [vmem:[#allocation3 + $0x9c] sm:$0xf] %vm1294, %v1225
        %1309 = vst.msk [vmem:[#allocation3 + $0xa8] sm:$0xf] %vm1294, %v1227
        %1310 = vst.msk [vmem:[#allocation3 + $0xb4] sm:$0xf] %vm1294, %v1229
        %1311 = vst.msk [vmem:[#allocation3 + $0xc0] sm:$0xf] %vm1294, %v1231
        %1312 = vst.msk [vmem:[#allocation3 + $0xcc] sm:$0xf] %vm1294, %v1233
        %1313 = vst.msk [vmem:[#allocation3 + $0xd8] sm:$0xf] %vm1294, %v1235
        %1314 = vst.msk [vmem:[#allocation3 + $0xe4] sm:$0xf] %vm1294, %v1237
        %1315 = vst.msk [vmem:[#allocation3 + $0xf0] sm:$0xf] %vm1294, %v1239
        %1316 = vst.msk [vmem:[#allocation3 + $0xfc] sm:$0xf] %vm1294, %v1241
        %1317 = vst.msk [vmem:[#allocation3 + $0x108] sm:$0xf] %vm1294, %v1243
        %1318 = vst.msk [vmem:[#allocation3 + $0x114] sm:$0xf] %vm1294, %v1245
        %1319 = vst.msk [vmem:[#allocation3 + $0x120] sm:$0xf] %vm1294, %v1247
        %1320 = vst.msk [vmem:[#allocation3 + $0x12c] sm:$0xf] %vm1294, %v1249
        %1321 = vst.msk [vmem:[#allocation3 + $0x138] sm:$0xf] %vm1294, %v1251
        %1322 = vst.msk [vmem:[#allocation3 + $0x144] sm:$0xf] %vm1294, %v1253
        %1323 = vst.msk [vmem:[#allocation3 + $0x150] sm:$0xf] %vm1294, %v1255
        %1324 = vst.msk [vmem:[#allocation3 + $0x15c] sm:$0xf] %vm1294, %v1257
        %1325 = vst.msk [vmem:[#allocation3 + $0x168] sm:$0xf] %vm1294, %v1259
        %1326 = vst.msk [vmem:[#allocation3 + $0x174] sm:$0xf] %vm1294, %v1261
        %v1327 = vld [vmem:[#allocation2] sm:$0xe]
        %v1328 = vld [vmem:[#allocation2 + $0x4] sm:$0xf]
        %v1329 = vld [vmem:[#allocation2 + $0x8] sm:$0x1]
        %v1330 = vld [vmem:[#allocation2 + $0xc] sm:$0xe]
        %v1331 = vld [vmem:[#allocation2 + $0x10] sm:$0xf]
        %v1332 = vld [vmem:[#allocation2 + $0x14] sm:$0x1]
        %v1333 = vld [vmem:[#allocation2 + $0x18] sm:$0xe]
        %v1334 = vld [vmem:[#allocation2 + $0x1c] sm:$0xf]
        %v1335 = vld [vmem:[#allocation2 + $0x20] sm:$0x1]
        %v1336 = vld [vmem:[#allocation2 + $0x24] sm:$0xe]
        %v1337 = vld [vmem:[#allocation2 + $0x28] sm:$0xf]
        %v1338 = vld [vmem:[#allocation2 + $0x2c] sm:$0x1]
        %v1339 = vld [vmem:[#allocation2 + $0x30] sm:$0xe]
        %v1340 = vld [vmem:[#allocation2 + $0x34] sm:$0xf]
        %v1341 = vld [vmem:[#allocation2 + $0x38] sm:$0x1]
        %v1342 = vld [vmem:[#allocation2 + $0x3c] sm:$0xe]
        %v1343 = vld [vmem:[#allocation2 + $0x40] sm:$0xf]
        %v1344 = vld [vmem:[#allocation2 + $0x44] sm:$0x1]
        %v1345 = vld [vmem:[#allocation2 + $0x48] sm:$0xe]
        %v1346 = vld [vmem:[#allocation2 + $0x4c] sm:$0xf]
        %v1347 = vld [vmem:[#allocation2 + $0x50] sm:$0x1]
        %v1348 = vld [vmem:[#allocation2 + $0x54] sm:$0xe]
        %v1349 = vld [vmem:[#allocation2 + $0x58] sm:$0xf]
        %v1350 = vld [vmem:[#allocation2 + $0x5c] sm:$0x1]
        %v1351 = vld [vmem:[#allocation2 + $0x60] sm:$0xe]
        %v1352 = vld [vmem:[#allocation2 + $0x64] sm:$0xf]
        %v1353 = vld [vmem:[#allocation2 + $0x68] sm:$0x1]
        %v1354 = vld [vmem:[#allocation2 + $0x6c] sm:$0xe]
        %v1355 = vld [vmem:[#allocation2 + $0x70] sm:$0xf]
        %v1356 = vld [vmem:[#allocation2 + $0x74] sm:$0x1]
        %v1357 = vld [vmem:[#allocation2 + $0x78] sm:$0xe]
        %v1358 = vld [vmem:[#allocation2 + $0x7c] sm:$0xf]
        %v1359 = vld [vmem:[#allocation2 + $0x80] sm:$0x1]
        %v1360 = vld [vmem:[#allocation2 + $0x84] sm:$0xe]
        %v1361 = vld [vmem:[#allocation2 + $0x88] sm:$0xf]
        %v1362 = vld [vmem:[#allocation2 + $0x8c] sm:$0x1]
        %v1363 = vld [vmem:[#allocation2 + $0x90] sm:$0xe]
        %v1364 = vld [vmem:[#allocation2 + $0x94] sm:$0xf]
        %v1365 = vld [vmem:[#allocation2 + $0x98] sm:$0x1]
        %v1366 = vld [vmem:[#allocation2 + $0x9c] sm:$0xe]
        %v1367 = vld [vmem:[#allocation2 + $0xa0] sm:$0xf]
        %v1368 = vld [vmem:[#allocation2 + $0xa4] sm:$0x1]
        %v1369 = vld [vmem:[#allocation2 + $0xa8] sm:$0xe]
        %v1370 = vld [vmem:[#allocation2 + $0xac] sm:$0xf]
        %v1371 = vld [vmem:[#allocation2 + $0xb0] sm:$0x1]
        %v1372 = vld [vmem:[#allocation2 + $0xb4] sm:$0xe]
        %v1373 = vld [vmem:[#allocation2 + $0xb8] sm:$0xf]
        %v1374 = vld [vmem:[#allocation2 + $0xbc] sm:$0x1]
        %vm1423 = vcmask 1042432
        %vm1424 = vcmask 1046532
        %vm1425 = vmor %vm1423, %vm1424
        %v1426 = vrot.slane %v1327, 5
        %v1427 = vrot.slane %v1426, 4
        %v1428 = vrot.slane %v1328, 5
        %v1429 = vsel %vm1425, %v1427, %v1428
        %v1430 = vrot.slane %v1428, 4
        %v1431 = vrot.slane %v1329, 5
        %v1432 = vsel %vm1425, %v1430, %v1431
        %v1433 = vrot.slane %v1330, 5
        %v1434 = vrot.slane %v1433, 4
        %v1435 = vrot.slane %v1331, 5
        %v1436 = vsel %vm1425, %v1434, %v1435
        %v1437 = vrot.slane %v1435, 4
        %v1438 = vrot.slane %v1332, 5
        %v1439 = vsel %vm1425, %v1437, %v1438
        %v1440 = vrot.slane %v1333, 5
        %v1441 = vrot.slane %v1440, 4
        %v1442 = vrot.slane %v1334, 5
        %v1443 = vsel %vm1425, %v1441, %v1442
        %v1444 = vrot.slane %v1442, 4
        %v1445 = vrot.slane %v1335, 5
        %v1446 = vsel %vm1425, %v1444, %v1445
        %v1447 = vrot.slane %v1336, 5
        %v1448 = vrot.slane %v1447, 4
        %v1449 = vrot.slane %v1337, 5
        %v1450 = vsel %vm1425, %v1448, %v1449
        %v1451 = vrot.slane %v1449, 4
        %v1452 = vrot.slane %v1338, 5
        %v1453 = vsel %vm1425, %v1451, %v1452
        %v1454 = vrot.slane %v1339, 5
        %v1455 = vrot.slane %v1454, 4
        %v1456 = vrot.slane %v1340, 5
        %v1457 = vsel %vm1425, %v1455, %v1456
        %v1458 = vrot.slane %v1456, 4
        %v1459 = vrot.slane %v1341, 5
        %v1460 = vsel %vm1425, %v1458, %v1459
        %v1461 = vrot.slane %v1342, 5
        %v1462 = vrot.slane %v1461, 4
        %v1463 = vrot.slane %v1343, 5
        %v1464 = vsel %vm1425, %v1462, %v1463
        %v1465 = vrot.slane %v1463, 4
        %v1466 = vrot.slane %v1344, 5
        %v1467 = vsel %vm1425, %v1465, %v1466
        %v1468 = vrot.slane %v1345, 5
        %v1469 = vrot.slane %v1468, 4
        %v1470 = vrot.slane %v1346, 5
        %v1471 = vsel %vm1425, %v1469, %v1470
        %v1472 = vrot.slane %v1470, 4
        %v1473 = vrot.slane %v1347, 5
        %v1474 = vsel %vm1425, %v1472, %v1473
        %v1475 = vrot.slane %v1348, 5
        %v1476 = vrot.slane %v1475, 4
        %v1477 = vrot.slane %v1349, 5
        %v1478 = vsel %vm1425, %v1476, %v1477
        %v1479 = vrot.slane %v1477, 4
        %v1480 = vrot.slane %v1350, 5
        %v1481 = vsel %vm1425, %v1479, %v1480
        %v1482 = vrot.slane %v1351, 5
        %v1483 = vrot.slane %v1482, 4
        %v1484 = vrot.slane %v1352, 5
        %v1485 = vsel %vm1425, %v1483, %v1484
        %v1486 = vrot.slane %v1484, 4
        %v1487 = vrot.slane %v1353, 5
        %v1488 = vsel %vm1425, %v1486, %v1487
        %v1489 = vrot.slane %v1354, 5
        %v1490 = vrot.slane %v1489, 4
        %v1491 = vrot.slane %v1355, 5
        %v1492 = vsel %vm1425, %v1490, %v1491
        %v1493 = vrot.slane %v1491, 4
        %v1494 = vrot.slane %v1356, 5
        %v1495 = vsel %vm1425, %v1493, %v1494
        %v1496 = vrot.slane %v1357, 5
        %v1497 = vrot.slane %v1496, 4
        %v1498 = vrot.slane %v1358, 5
        %v1499 = vsel %vm1425, %v1497, %v1498
        %v1500 = vrot.slane %v1498, 4
        %v1501 = vrot.slane %v1359, 5
        %v1502 = vsel %vm1425, %v1500, %v1501
        %v1503 = vrot.slane %v1360, 5
        %v1504 = vrot.slane %v1503, 4
        %v1505 = vrot.slane %v1361, 5
        %v1506 = vsel %vm1425, %v1504, %v1505
        %v1507 = vrot.slane %v1505, 4
        %v1508 = vrot.slane %v1362, 5
        %v1509 = vsel %vm1425, %v1507, %v1508
        %v1510 = vrot.slane %v1363, 5
        %v1511 = vrot.slane %v1510, 4
        %v1512 = vrot.slane %v1364, 5
        %v1513 = vsel %vm1425, %v1511, %v1512
        %v1514 = vrot.slane %v1512, 4
        %v1515 = vrot.slane %v1365, 5
        %v1516 = vsel %vm1425, %v1514, %v1515
        %v1517 = vrot.slane %v1366, 5
        %v1518 = vrot.slane %v1517, 4
        %v1519 = vrot.slane %v1367, 5
        %v1520 = vsel %vm1425, %v1518, %v1519
        %v1521 = vrot.slane %v1519, 4
        %v1522 = vrot.slane %v1368, 5
        %v1523 = vsel %vm1425, %v1521, %v1522
        %v1524 = vrot.slane %v1369, 5
        %v1525 = vrot.slane %v1524, 4
        %v1526 = vrot.slane %v1370, 5
        %v1527 = vsel %vm1425, %v1525, %v1526
        %v1528 = vrot.slane %v1526, 4
        %v1529 = vrot.slane %v1371, 5
        %v1530 = vsel %vm1425, %v1528, %v1529
        %v1531 = vrot.slane %v1372, 5
        %v1532 = vrot.slane %v1531, 4
        %v1533 = vrot.slane %v1373, 5
        %v1534 = vsel %vm1425, %v1532, %v1533
        %v1535 = vrot.slane %v1533, 4
        %v1536 = vrot.slane %v1374, 5
        %v1537 = vsel %vm1425, %v1535, %v1536
        %1538 = vrot.lane.b32.xlu0 %v1429, 64
        %v1539 = vpop.permute.xlu0 %1538
        %1540 = vrot.lane.b32.xlu0 %v1432, 64
        %v1541 = vpop.permute.xlu0 %1540
        %1542 = vrot.lane.b32.xlu0 %v1436, 64
        %v1543 = vpop.permute.xlu0 %1542
        %1544 = vrot.lane.b32.xlu0 %v1439, 64
        %v1545 = vpop.permute.xlu0 %1544
        %1546 = vrot.lane.b32.xlu0 %v1443, 64
        %v1547 = vpop.permute.xlu0 %1546
        %1548 = vrot.lane.b32.xlu0 %v1446, 64
        %v1549 = vpop.permute.xlu0 %1548
        %1550 = vrot.lane.b32.xlu0 %v1450, 64
        %v1551 = vpop.permute.xlu0 %1550
        %1552 = vrot.lane.b32.xlu0 %v1453, 64
        %v1553 = vpop.permute.xlu0 %1552
        %1554 = vrot.lane.b32.xlu0 %v1457, 64
        %v1555 = vpop.permute.xlu0 %1554
        %1556 = vrot.lane.b32.xlu0 %v1460, 64
        %v1557 = vpop.permute.xlu0 %1556
        %1558 = vrot.lane.b32.xlu0 %v1464, 64
        %v1559 = vpop.permute.xlu0 %1558
        %1560 = vrot.lane.b32.xlu0 %v1467, 64
        %v1561 = vpop.permute.xlu0 %1560
        %1562 = vrot.lane.b32.xlu0 %v1471, 64
        %v1563 = vpop.permute.xlu0 %1562
        %1564 = vrot.lane.b32.xlu0 %v1474, 64
        %v1565 = vpop.permute.xlu0 %1564
        %1566 = vrot.lane.b32.xlu0 %v1478, 64
        %v1567 = vpop.permute.xlu0 %1566
        %1568 = vrot.lane.b32.xlu0 %v1481, 64
        %v1569 = vpop.permute.xlu0 %1568
        %1570 = vrot.lane.b32.xlu0 %v1485, 64
        %v1571 = vpop.permute.xlu0 %1570
        %1572 = vrot.lane.b32.xlu0 %v1488, 64
        %v1573 = vpop.permute.xlu0 %1572
        %1574 = vrot.lane.b32.xlu0 %v1492, 64
        %v1575 = vpop.permute.xlu0 %1574
        %1576 = vrot.lane.b32.xlu0 %v1495, 64
        %v1577 = vpop.permute.xlu0 %1576
        %1578 = vrot.lane.b32.xlu0 %v1499, 64
        %v1579 = vpop.permute.xlu0 %1578
        %1580 = vrot.lane.b32.xlu0 %v1502, 64
        %v1581 = vpop.permute.xlu0 %1580
        %1582 = vrot.lane.b32.xlu0 %v1506, 64
        %v1583 = vpop.permute.xlu0 %1582
        %1584 = vrot.lane.b32.xlu0 %v1509, 64
        %v1585 = vpop.permute.xlu0 %1584
        %1586 = vrot.lane.b32.xlu0 %v1513, 64
        %v1587 = vpop.permute.xlu0 %1586
        %1588 = vrot.lane.b32.xlu0 %v1516, 64
        %v1589 = vpop.permute.xlu0 %1588
        %1590 = vrot.lane.b32.xlu0 %v1520, 64
        %v1591 = vpop.permute.xlu0 %1590
        %1592 = vrot.lane.b32.xlu0 %v1523, 64
        %v1593 = vpop.permute.xlu0 %1592
        %1594 = vrot.lane.b32.xlu0 %v1527, 64
        %v1595 = vpop.permute.xlu0 %1594
        %1596 = vrot.lane.b32.xlu0 %v1530, 64
        %v1597 = vpop.permute.xlu0 %1596
        %1598 = vrot.lane.b32.xlu0 %v1534, 64
        %v1599 = vpop.permute.xlu0 %1598
        %1600 = vrot.lane.b32.xlu0 %v1537, 64
        %v1601 = vpop.permute.xlu0 %1600
        %vm1634 = vcmask 781824
        %1635 = vst.msk [vmem:[#allocation3] sm:$0xf] %vm1634, %v1539
        %1636 = vst.msk [vmem:[#allocation3 + $0xc] sm:$0xf] %vm1634, %v1541
        %1637 = vst.msk [vmem:[#allocation3 + $0x18] sm:$0xf] %vm1634, %v1543
        %1638 = vst.msk [vmem:[#allocation3 + $0x24] sm:$0xf] %vm1634, %v1545
        %1639 = vst.msk [vmem:[#allocation3 + $0x30] sm:$0xf] %vm1634, %v1547
        %1640 = vst.msk [vmem:[#allocation3 + $0x3c] sm:$0xf] %vm1634, %v1549
        %1641 = vst.msk [vmem:[#allocation3 + $0x48] sm:$0xf] %vm1634, %v1551
        %1642 = vst.msk [vmem:[#allocation3 + $0x54] sm:$0xf] %vm1634, %v1553
        %1643 = vst.msk [vmem:[#allocation3 + $0x60] sm:$0xf] %vm1634, %v1555
        %1644 = vst.msk [vmem:[#allocation3 + $0x6c] sm:$0xf] %vm1634, %v1557
        %1645 = vst.msk [vmem:[#allocation3 + $0x78] sm:$0xf] %vm1634, %v1559
        %1646 = vst.msk [vmem:[#allocation3 + $0x84] sm:$0xf] %vm1634, %v1561
        %1647 = vst.msk [vmem:[#allocation3 + $0x90] sm:$0xf] %vm1634, %v1563
        %1648 = vst.msk [vmem:[#allocation3 + $0x9c] sm:$0xf] %vm1634, %v1565
        %1649 = vst.msk [vmem:[#allocation3 + $0xa8] sm:$0xf] %vm1634, %v1567
        %1650 = vst.msk [vmem:[#allocation3 + $0xb4] sm:$0xf] %vm1634, %v1569
        %1651 = vst.msk [vmem:[#allocation3 + $0xc0] sm:$0xf] %vm1634, %v1571
        %1652 = vst.msk [vmem:[#allocation3 + $0xcc] sm:$0xf] %vm1634, %v1573
        %1653 = vst.msk [vmem:[#allocation3 + $0xd8] sm:$0xf] %vm1634, %v1575
        %1654 = vst.msk [vmem:[#allocation3 + $0xe4] sm:$0xf] %vm1634, %v1577
        %1655 = vst.msk [vmem:[#allocation3 + $0xf0] sm:$0xf] %vm1634, %v1579
        %1656 = vst.msk [vmem:[#allocation3 + $0xfc] sm:$0xf] %vm1634, %v1581
        %1657 = vst.msk [vmem:[#allocation3 + $0x108] sm:$0xf] %vm1634, %v1583
        %1658 = vst.msk [vmem:[#allocation3 + $0x114] sm:$0xf] %vm1634, %v1585
        %1659 = vst.msk [vmem:[#allocation3 + $0x120] sm:$0xf] %vm1634, %v1587
        %1660 = vst.msk [vmem:[#allocation3 + $0x12c] sm:$0xf] %vm1634, %v1589
        %1661 = vst.msk [vmem:[#allocation3 + $0x138] sm:$0xf] %vm1634, %v1591
        %1662 = vst.msk [vmem:[#allocation3 + $0x144] sm:$0xf] %vm1634, %v1593
        %1663 = vst.msk [vmem:[#allocation3 + $0x150] sm:$0xf] %vm1634, %v1595
        %1664 = vst.msk [vmem:[#allocation3 + $0x15c] sm:$0xf] %vm1634, %v1597
        %1665 = vst.msk [vmem:[#allocation3 + $0x168] sm:$0xf] %vm1634, %v1599
        %1666 = vst.msk [vmem:[#allocation3 + $0x174] sm:$0xf] %vm1634, %v1601
        %v1667 = vld [vmem:[%s581] sm:$0xf]
        %v1668 = vld [vmem:[%s581 + $0x4] sm:$0xf]
        %v1669 = vld [vmem:[%s581 + $0xc] sm:$0xf]
        %v1670 = vld [vmem:[%s581 + $0x10] sm:$0xf]
        %v1671 = vld [vmem:[%s581 + $0x18] sm:$0xf]
        %v1672 = vld [vmem:[%s581 + $0x1c] sm:$0xf]
        %v1673 = vld [vmem:[%s581 + $0x24] sm:$0xf]
        %v1674 = vld [vmem:[%s581 + $0x28] sm:$0xf]
        %v1675 = vld [vmem:[%s581 + $0x30] sm:$0xf]
        %v1676 = vld [vmem:[%s581 + $0x34] sm:$0xf]
        %v1677 = vld [vmem:[%s581 + $0x3c] sm:$0xf]
        %v1678 = vld [vmem:[%s581 + $0x40] sm:$0xf]
        %v1679 = vld [vmem:[%s581 + $0x48] sm:$0xf]
        %v1680 = vld [vmem:[%s581 + $0x4c] sm:$0xf]
        %v1681 = vld [vmem:[%s581 + $0x54] sm:$0xf]
        %v1682 = vld [vmem:[%s581 + $0x58] sm:$0xf]
        %v1683 = vld [vmem:[%s581 + $0x60] sm:$0xf]
        %v1684 = vld [vmem:[%s581 + $0x64] sm:$0xf]
        %v1685 = vld [vmem:[%s581 + $0x6c] sm:$0xf]
        %v1686 = vld [vmem:[%s581 + $0x70] sm:$0xf]
        %v1687 = vld [vmem:[%s581 + $0x78] sm:$0xf]
        %v1688 = vld [vmem:[%s581 + $0x7c] sm:$0xf]
        %v1689 = vld [vmem:[%s581 + $0x84] sm:$0xf]
        %v1690 = vld [vmem:[%s581 + $0x88] sm:$0xf]
        %v1691 = vld [vmem:[%s581 + $0x90] sm:$0xf]
        %v1692 = vld [vmem:[%s581 + $0x94] sm:$0xf]
        %v1693 = vld [vmem:[%s581 + $0x9c] sm:$0xf]
        %v1694 = vld [vmem:[%s581 + $0xa0] sm:$0xf]
        %v1695 = vld [vmem:[%s581 + $0xa8] sm:$0xf]
        %v1696 = vld [vmem:[%s581 + $0xac] sm:$0xf]
        %v1697 = vld [vmem:[%s581 + $0xb4] sm:$0xf]
        %v1698 = vld [vmem:[%s581 + $0xb8] sm:$0xf]
        %1731 = vrot.lane.b32.xlu0 %v1667, 96
        %v1732 = vpop.permute.xlu0 %1731
        %1733 = vrot.lane.b32.xlu0 %v1668, 96
        %v1734 = vpop.permute.xlu0 %1733
        %1735 = vrot.lane.b32.xlu0 %v1669, 96
        %v1736 = vpop.permute.xlu0 %1735
        %1737 = vrot.lane.b32.xlu0 %v1670, 96
        %v1738 = vpop.permute.xlu0 %1737
        %1739 = vrot.lane.b32.xlu0 %v1671, 96
        %v1740 = vpop.permute.xlu0 %1739
        %1741 = vrot.lane.b32.xlu0 %v1672, 96
        %v1742 = vpop.permute.xlu0 %1741
        %1743 = vrot.lane.b32.xlu0 %v1673, 96
        %v1744 = vpop.permute.xlu0 %1743
        %1745 = vrot.lane.b32.xlu0 %v1674, 96
        %v1746 = vpop.permute.xlu0 %1745
        %1747 = vrot.lane.b32.xlu0 %v1675, 96
        %v1748 = vpop.permute.xlu0 %1747
        %1749 = vrot.lane.b32.xlu0 %v1676, 96
        %v1750 = vpop.permute.xlu0 %1749
        %1751 = vrot.lane.b32.xlu0 %v1677, 96
        %v1752 = vpop.permute.xlu0 %1751
        %1753 = vrot.lane.b32.xlu0 %v1678, 96
        %v1754 = vpop.permute.xlu0 %1753
        %1755 = vrot.lane.b32.xlu0 %v1679, 96
        %v1756 = vpop.permute.xlu0 %1755
        %1757 = vrot.lane.b32.xlu0 %v1680, 96
        %v1758 = vpop.permute.xlu0 %1757
        %1759 = vrot.lane.b32.xlu0 %v1681, 96
        %v1760 = vpop.permute.xlu0 %1759
        %1761 = vrot.lane.b32.xlu0 %v1682, 96
        %v1762 = vpop.permute.xlu0 %1761
        %1763 = vrot.lane.b32.xlu0 %v1683, 96
        %v1764 = vpop.permute.xlu0 %1763
        %1765 = vrot.lane.b32.xlu0 %v1684, 96
        %v1766 = vpop.permute.xlu0 %1765
        %1767 = vrot.lane.b32.xlu0 %v1685, 96
        %v1768 = vpop.permute.xlu0 %1767
        %1769 = vrot.lane.b32.xlu0 %v1686, 96
        %v1770 = vpop.permute.xlu0 %1769
        %1771 = vrot.lane.b32.xlu0 %v1687, 96
        %v1772 = vpop.permute.xlu0 %1771
        %1773 = vrot.lane.b32.xlu0 %v1688, 96
        %v1774 = vpop.permute.xlu0 %1773
        %1775 = vrot.lane.b32.xlu0 %v1689, 96
        %v1776 = vpop.permute.xlu0 %1775
        %1777 = vrot.lane.b32.xlu0 %v1690, 96
        %v1778 = vpop.permute.xlu0 %1777
        %1779 = vrot.lane.b32.xlu0 %v1691, 96
        %v1780 = vpop.permute.xlu0 %1779
        %1781 = vrot.lane.b32.xlu0 %v1692, 96
        %v1782 = vpop.permute.xlu0 %1781
        %1783 = vrot.lane.b32.xlu0 %v1693, 96
        %v1784 = vpop.permute.xlu0 %1783
        %1785 = vrot.lane.b32.xlu0 %v1694, 96
        %v1786 = vpop.permute.xlu0 %1785
        %1787 = vrot.lane.b32.xlu0 %v1695, 96
        %v1788 = vpop.permute.xlu0 %1787
        %1789 = vrot.lane.b32.xlu0 %v1696, 96
        %v1790 = vpop.permute.xlu0 %1789
        %1791 = vrot.lane.b32.xlu0 %v1697, 96
        %v1792 = vpop.permute.xlu0 %1791
        %1793 = vrot.lane.b32.xlu0 %v1698, 96
        %v1794 = vpop.permute.xlu0 %1793
        %vm1827 = vcmask 1044224
        %1828 = vst.msk [vmem:[#allocation3] sm:$0xf] %vm1827, %v1732
        %1829 = vst.msk [vmem:[#allocation3 + $0xc] sm:$0xf] %vm1827, %v1734
        %1830 = vst.msk [vmem:[#allocation3 + $0x18] sm:$0xf] %vm1827, %v1736
        %1831 = vst.msk [vmem:[#allocation3 + $0x24] sm:$0xf] %vm1827, %v1738
        %1832 = vst.msk [vmem:[#allocation3 + $0x30] sm:$0xf] %vm1827, %v1740
        %1833 = vst.msk [vmem:[#allocation3 + $0x3c] sm:$0xf] %vm1827, %v1742
        %1834 = vst.msk [vmem:[#allocation3 + $0x48] sm:$0xf] %vm1827, %v1744
        %1835 = vst.msk [vmem:[#allocation3 + $0x54] sm:$0xf] %vm1827, %v1746
        %1836 = vst.msk [vmem:[#allocation3 + $0x60] sm:$0xf] %vm1827, %v1748
        %1837 = vst.msk [vmem:[#allocation3 + $0x6c] sm:$0xf] %vm1827, %v1750
        %1838 = vst.msk [vmem:[#allocation3 + $0x78] sm:$0xf] %vm1827, %v1752
        %1839 = vst.msk [vmem:[#allocation3 + $0x84] sm:$0xf] %vm1827, %v1754
        %1840 = vst.msk [vmem:[#allocation3 + $0x90] sm:$0xf] %vm1827, %v1756
        %1841 = vst.msk [vmem:[#allocation3 + $0x9c] sm:$0xf] %vm1827, %v1758
        %1842 = vst.msk [vmem:[#allocation3 + $0xa8] sm:$0xf] %vm1827, %v1760
        %1843 = vst.msk [vmem:[#allocation3 + $0xb4] sm:$0xf] %vm1827, %v1762
        %1844 = vst.msk [vmem:[#allocation3 + $0xc0] sm:$0xf] %vm1827, %v1764
        %1845 = vst.msk [vmem:[#allocation3 + $0xcc] sm:$0xf] %vm1827, %v1766
        %1846 = vst.msk [vmem:[#allocation3 + $0xd8] sm:$0xf] %vm1827, %v1768
        %1847 = vst.msk [vmem:[#allocation3 + $0xe4] sm:$0xf] %vm1827, %v1770
        %1848 = vst.msk [vmem:[#allocation3 + $0xf0] sm:$0xf] %vm1827, %v1772
        %1849 = vst.msk [vmem:[#allocation3 + $0xfc] sm:$0xf] %vm1827, %v1774
        %1850 = vst.msk [vmem:[#allocation3 + $0x108] sm:$0xf] %vm1827, %v1776
        %1851 = vst.msk [vmem:[#allocation3 + $0x114] sm:$0xf] %vm1827, %v1778
        %1852 = vst.msk [vmem:[#allocation3 + $0x120] sm:$0xf] %vm1827, %v1780
        %1853 = vst.msk [vmem:[#allocation3 + $0x12c] sm:$0xf] %vm1827, %v1782
        %1854 = vst.msk [vmem:[#allocation3 + $0x138] sm:$0xf] %vm1827, %v1784
        %1855 = vst.msk [vmem:[#allocation3 + $0x144] sm:$0xf] %vm1827, %v1786
        %1856 = vst.msk [vmem:[#allocation3 + $0x150] sm:$0xf] %vm1827, %v1788
        %1857 = vst.msk [vmem:[#allocation3 + $0x15c] sm:$0xf] %vm1827, %v1790
        %1858 = vst.msk [vmem:[#allocation3 + $0x168] sm:$0xf] %vm1827, %v1792
        %1859 = vst.msk [vmem:[#allocation3 + $0x174] sm:$0xf] %vm1827, %v1794
        %v1860 = vld [vmem:[%s581] sm:$0xf]
        %v1861 = vld [vmem:[%s581 + $0x4] sm:$0xf]
        %v1862 = vld [vmem:[%s581 + $0x8] sm:$0x1]
        %v1863 = vld [vmem:[%s581 + $0xc] sm:$0xf]
        %v1864 = vld [vmem:[%s581 + $0x10] sm:$0xf]
        %v1865 = vld [vmem:[%s581 + $0x14] sm:$0x1]
        %v1866 = vld [vmem:[%s581 + $0x18] sm:$0xf]
        %v1867 = vld [vmem:[%s581 + $0x1c] sm:$0xf]
        %v1868 = vld [vmem:[%s581 + $0x20] sm:$0x1]
        %v1869 = vld [vmem:[%s581 + $0x24] sm:$0xf]
        %v1870 = vld [vmem:[%s581 + $0x28] sm:$0xf]
        %v1871 = vld [vmem:[%s581 + $0x2c] sm:$0x1]
        %v1872 = vld [vmem:[%s581 + $0x30] sm:$0xf]
        %v1873 = vld [vmem:[%s581 + $0x34] sm:$0xf]
        %v1874 = vld [vmem:[%s581 + $0x38] sm:$0x1]
        %v1875 = vld [vmem:[%s581 + $0x3c] sm:$0xf]
        %v1876 = vld [vmem:[%s581 + $0x40] sm:$0xf]
        %v1877 = vld [vmem:[%s581 + $0x44] sm:$0x1]
        %v1878 = vld [vmem:[%s581 + $0x48] sm:$0xf]
        %v1879 = vld [vmem:[%s581 + $0x4c] sm:$0xf]
        %v1880 = vld [vmem:[%s581 + $0x50] sm:$0x1]
        %v1881 = vld [vmem:[%s581 + $0x54] sm:$0xf]
        %v1882 = vld [vmem:[%s581 + $0x58] sm:$0xf]
        %v1883 = vld [vmem:[%s581 + $0x5c] sm:$0x1]
        %v1884 = vld [vmem:[%s581 + $0x60] sm:$0xf]
        %v1885 = vld [vmem:[%s581 + $0x64] sm:$0xf]
        %v1886 = vld [vmem:[%s581 + $0x68] sm:$0x1]
        %v1887 = vld [vmem:[%s581 + $0x6c] sm:$0xf]
        %v1888 = vld [vmem:[%s581 + $0x70] sm:$0xf]
        %v1889 = vld [vmem:[%s581 + $0x74] sm:$0x1]
        %v1890 = vld [vmem:[%s581 + $0x78] sm:$0xf]
        %v1891 = vld [vmem:[%s581 + $0x7c] sm:$0xf]
        %v1892 = vld [vmem:[%s581 + $0x80] sm:$0x1]
        %v1893 = vld [vmem:[%s581 + $0x84] sm:$0xf]
        %v1894 = vld [vmem:[%s581 + $0x88] sm:$0xf]
        %v1895 = vld [vmem:[%s581 + $0x8c] sm:$0x1]
        %v1896 = vld [vmem:[%s581 + $0x90] sm:$0xf]
        %v1897 = vld [vmem:[%s581 + $0x94] sm:$0xf]
        %v1898 = vld [vmem:[%s581 + $0x98] sm:$0x1]
        %v1899 = vld [vmem:[%s581 + $0x9c] sm:$0xf]
        %v1900 = vld [vmem:[%s581 + $0xa0] sm:$0xf]
        %v1901 = vld [vmem:[%s581 + $0xa4] sm:$0x1]
        %v1902 = vld [vmem:[%s581 + $0xa8] sm:$0xf]
        %v1903 = vld [vmem:[%s581 + $0xac] sm:$0xf]
        %v1904 = vld [vmem:[%s581 + $0xb0] sm:$0x1]
        %v1905 = vld [vmem:[%s581 + $0xb4] sm:$0xf]
        %v1906 = vld [vmem:[%s581 + $0xb8] sm:$0xf]
        %v1907 = vld [vmem:[%s581 + $0xbc] sm:$0x1]
        %v1909 = vshrl.u32 %v1860, 16
        %v1911 = vrot.slane %v1909, 4
        %v1912 = vshll.u32 %v1860, 16
        %v1914 = vrot.slane %v1912, 5
        %v1915 = vor.u32 %v1911, %v1914
        %v1916 = vrot.slane %v1915, 4
        %v1918 = vshll.u32 %v1861, 16
        %v1920 = vrot.slane %v1918, 5
        %v1921 = vsel %vm813, %v1916, %v1920
        %v1922 = vshrl.u32 %v1861, 16
        %v1924 = vrot.slane %v1922, 4
        %v1925 = vor.u32 %v1924, %v1920
        %v1926 = vrot.slane %v1925, 4
        %v1928 = vshll.u32 %v1862, 16
        %v1930 = vrot.slane %v1928, 5
        %v1931 = vsel %vm813, %v1926, %v1930
        %v1933 = vshrl.u32 %v1863, 16
        %v1935 = vrot.slane %v1933, 4
        %v1936 = vshll.u32 %v1863, 16
        %v1938 = vrot.slane %v1936, 5
        %v1939 = vor.u32 %v1935, %v1938
        %v1940 = vrot.slane %v1939, 4
        %v1942 = vshll.u32 %v1864, 16
        %v1944 = vrot.slane %v1942, 5
        %v1945 = vsel %vm813, %v1940, %v1944
        %v1946 = vshrl.u32 %v1864, 16
        %v1948 = vrot.slane %v1946, 4
        %v1949 = vor.u32 %v1948, %v1944
        %v1950 = vrot.slane %v1949, 4
        %v1952 = vshll.u32 %v1865, 16
        %v1954 = vrot.slane %v1952, 5
        %v1955 = vsel %vm813, %v1950, %v1954
        %v1957 = vshrl.u32 %v1866, 16
        %v1959 = vrot.slane %v1957, 4
        %v1960 = vshll.u32 %v1866, 16
        %v1962 = vrot.slane %v1960, 5
        %v1963 = vor.u32 %v1959, %v1962
        %v1964 = vrot.slane %v1963, 4
        %v1966 = vshll.u32 %v1867, 16
        %v1968 = vrot.slane %v1966, 5
        %v1969 = vsel %vm813, %v1964, %v1968
        %v1970 = vshrl.u32 %v1867, 16
        %v1972 = vrot.slane %v1970, 4
        %v1973 = vor.u32 %v1972, %v1968
        %v1974 = vrot.slane %v1973, 4
        %v1976 = vshll.u32 %v1868, 16
        %v1978 = vrot.slane %v1976, 5
        %v1979 = vsel %vm813, %v1974, %v1978
        %v1981 = vshrl.u32 %v1869, 16
        %v1983 = vrot.slane %v1981, 4
        %v1984 = vshll.u32 %v1869, 16
        %v1986 = vrot.slane %v1984, 5
        %v1987 = vor.u32 %v1983, %v1986
        %v1988 = vrot.slane %v1987, 4
        %v1990 = vshll.u32 %v1870, 16
        %v1992 = vrot.slane %v1990, 5
        %v1993 = vsel %vm813, %v1988, %v1992
        %v1994 = vshrl.u32 %v1870, 16
        %v1996 = vrot.slane %v1994, 4
        %v1997 = vor.u32 %v1996, %v1992
        %v1998 = vrot.slane %v1997, 4
        %v2000 = vshll.u32 %v1871, 16
        %v2002 = vrot.slane %v2000, 5
        %v2003 = vsel %vm813, %v1998, %v2002
        %v2005 = vshrl.u32 %v1872, 16
        %v2007 = vrot.slane %v2005, 4
        %v2008 = vshll.u32 %v1872, 16
        %v2010 = vrot.slane %v2008, 5
        %v2011 = vor.u32 %v2007, %v2010
        %v2012 = vrot.slane %v2011, 4
        %v2014 = vshll.u32 %v1873, 16
        %v2016 = vrot.slane %v2014, 5
        %v2017 = vsel %vm813, %v2012, %v2016
        %v2018 = vshrl.u32 %v1873, 16
        %v2020 = vrot.slane %v2018, 4
        %v2021 = vor.u32 %v2020, %v2016
        %v2022 = vrot.slane %v2021, 4
        %v2024 = vshll.u32 %v1874, 16
        %v2026 = vrot.slane %v2024, 5
        %v2027 = vsel %vm813, %v2022, %v2026
        %v2029 = vshrl.u32 %v1875, 16
        %v2031 = vrot.slane %v2029, 4
        %v2032 = vshll.u32 %v1875, 16
        %v2034 = vrot.slane %v2032, 5
        %v2035 = vor.u32 %v2031, %v2034
        %v2036 = vrot.slane %v2035, 4
        %v2038 = vshll.u32 %v1876, 16
        %v2040 = vrot.slane %v2038, 5
        %v2041 = vsel %vm813, %v2036, %v2040
        %v2042 = vshrl.u32 %v1876, 16
        %v2044 = vrot.slane %v2042, 4
        %v2045 = vor.u32 %v2044, %v2040
        %v2046 = vrot.slane %v2045, 4
        %v2048 = vshll.u32 %v1877, 16
        %v2050 = vrot.slane %v2048, 5
        %v2051 = vsel %vm813, %v2046, %v2050
        %v2053 = vshrl.u32 %v1878, 16
        %v2055 = vrot.slane %v2053, 4
        %v2056 = vshll.u32 %v1878, 16
        %v2058 = vrot.slane %v2056, 5
        %v2059 = vor.u32 %v2055, %v2058
        %v2060 = vrot.slane %v2059, 4
        %v2062 = vshll.u32 %v1879, 16
        %v2064 = vrot.slane %v2062, 5
        %v2065 = vsel %vm813, %v2060, %v2064
        %v2066 = vshrl.u32 %v1879, 16
        %v2068 = vrot.slane %v2066, 4
        %v2069 = vor.u32 %v2068, %v2064
        %v2070 = vrot.slane %v2069, 4
        %v2072 = vshll.u32 %v1880, 16
        %v2074 = vrot.slane %v2072, 5
        %v2075 = vsel %vm813, %v2070, %v2074
        %v2077 = vshrl.u32 %v1881, 16
        %v2079 = vrot.slane %v2077, 4
        %v2080 = vshll.u32 %v1881, 16
        %v2082 = vrot.slane %v2080, 5
        %v2083 = vor.u32 %v2079, %v2082
        %v2084 = vrot.slane %v2083, 4
        %v2086 = vshll.u32 %v1882, 16
        %v2088 = vrot.slane %v2086, 5
        %v2089 = vsel %vm813, %v2084, %v2088
        %v2090 = vshrl.u32 %v1882, 16
        %v2092 = vrot.slane %v2090, 4
        %v2093 = vor.u32 %v2092, %v2088
        %v2094 = vrot.slane %v2093, 4
        %v2096 = vshll.u32 %v1883, 16
        %v2098 = vrot.slane %v2096, 5
        %v2099 = vsel %vm813, %v2094, %v2098
        %v2101 = vshrl.u32 %v1884, 16
        %v2103 = vrot.slane %v2101, 4
        %v2104 = vshll.u32 %v1884, 16
        %v2106 = vrot.slane %v2104, 5
        %v2107 = vor.u32 %v2103, %v2106
        %v2108 = vrot.slane %v2107, 4
        %v2110 = vshll.u32 %v1885, 16
        %v2112 = vrot.slane %v2110, 5
        %v2113 = vsel %vm813, %v2108, %v2112
        %v2114 = vshrl.u32 %v1885, 16
        %v2116 = vrot.slane %v2114, 4
        %v2117 = vor.u32 %v2116, %v2112
        %v2118 = vrot.slane %v2117, 4
        %v2120 = vshll.u32 %v1886, 16
        %v2122 = vrot.slane %v2120, 5
        %v2123 = vsel %vm813, %v2118, %v2122
        %v2125 = vshrl.u32 %v1887, 16
        %v2127 = vrot.slane %v2125, 4
        %v2128 = vshll.u32 %v1887, 16
        %v2130 = vrot.slane %v2128, 5
        %v2131 = vor.u32 %v2127, %v2130
        %v2132 = vrot.slane %v2131, 4
        %v2134 = vshll.u32 %v1888, 16
        %v2136 = vrot.slane %v2134, 5
        %v2137 = vsel %vm813, %v2132, %v2136
        %v2138 = vshrl.u32 %v1888, 16
        %v2140 = vrot.slane %v2138, 4
        %v2141 = vor.u32 %v2140, %v2136
        %v2142 = vrot.slane %v2141, 4
        %v2144 = vshll.u32 %v1889, 16
        %v2146 = vrot.slane %v2144, 5
        %v2147 = vsel %vm813, %v2142, %v2146
        %v2149 = vshrl.u32 %v1890, 16
        %v2151 = vrot.slane %v2149, 4
        %v2152 = vshll.u32 %v1890, 16
        %v2154 = vrot.slane %v2152, 5
        %v2155 = vor.u32 %v2151, %v2154
        %v2156 = vrot.slane %v2155, 4
        %v2158 = vshll.u32 %v1891, 16
        %v2160 = vrot.slane %v2158, 5
        %v2161 = vsel %vm813, %v2156, %v2160
        %v2162 = vshrl.u32 %v1891, 16
        %v2164 = vrot.slane %v2162, 4
        %v2165 = vor.u32 %v2164, %v2160
        %v2166 = vrot.slane %v2165, 4
        %v2168 = vshll.u32 %v1892, 16
        %v2170 = vrot.slane %v2168, 5
        %v2171 = vsel %vm813, %v2166, %v2170
        %v2173 = vshrl.u32 %v1893, 16
        %v2175 = vrot.slane %v2173, 4
        %v2176 = vshll.u32 %v1893, 16
        %v2178 = vrot.slane %v2176, 5
        %v2179 = vor.u32 %v2175, %v2178
        %v2180 = vrot.slane %v2179, 4
        %v2182 = vshll.u32 %v1894, 16
        %v2184 = vrot.slane %v2182, 5
        %v2185 = vsel %vm813, %v2180, %v2184
        %v2186 = vshrl.u32 %v1894, 16
        %v2188 = vrot.slane %v2186, 4
        %v2189 = vor.u32 %v2188, %v2184
        %v2190 = vrot.slane %v2189, 4
        %v2192 = vshll.u32 %v1895, 16
        %v2194 = vrot.slane %v2192, 5
        %v2195 = vsel %vm813, %v2190, %v2194
        %v2197 = vshrl.u32 %v1896, 16
        %v2199 = vrot.slane %v2197, 4
        %v2200 = vshll.u32 %v1896, 16
        %v2202 = vrot.slane %v2200, 5
        %v2203 = vor.u32 %v2199, %v2202
        %v2204 = vrot.slane %v2203, 4
        %v2206 = vshll.u32 %v1897, 16
        %v2208 = vrot.slane %v2206, 5
        %v2209 = vsel %vm813, %v2204, %v2208
        %v2210 = vshrl.u32 %v1897, 16
        %v2212 = vrot.slane %v2210, 4
        %v2213 = vor.u32 %v2212, %v2208
        %v2214 = vrot.slane %v2213, 4
        %v2216 = vshll.u32 %v1898, 16
        %v2218 = vrot.slane %v2216, 5
        %v2219 = vsel %vm813, %v2214, %v2218
        %v2221 = vshrl.u32 %v1899, 16
        %v2223 = vrot.slane %v2221, 4
        %v2224 = vshll.u32 %v1899, 16
        %v2226 = vrot.slane %v2224, 5
        %v2227 = vor.u32 %v2223, %v2226
        %v2228 = vrot.slane %v2227, 4
        %v2230 = vshll.u32 %v1900, 16
        %v2232 = vrot.slane %v2230, 5
        %v2233 = vsel %vm813, %v2228, %v2232
        %v2234 = vshrl.u32 %v1900, 16
        %v2236 = vrot.slane %v2234, 4
        %v2237 = vor.u32 %v2236, %v2232
        %v2238 = vrot.slane %v2237, 4
        %v2240 = vshll.u32 %v1901, 16
        %v2242 = vrot.slane %v2240, 5
        %v2243 = vsel %vm813, %v2238, %v2242
        %v2245 = vshrl.u32 %v1902, 16
        %v2247 = vrot.slane %v2245, 4
        %v2248 = vshll.u32 %v1902, 16
        %v2250 = vrot.slane %v2248, 5
        %v2251 = vor.u32 %v2247, %v2250
        %v2252 = vrot.slane %v2251, 4
        %v2254 = vshll.u32 %v1903, 16
        %v2256 = vrot.slane %v2254, 5
        %v2257 = vsel %vm813, %v2252, %v2256
        %v2258 = vshrl.u32 %v1903, 16
        %v2260 = vrot.slane %v2258, 4
        %v2261 = vor.u32 %v2260, %v2256
        %v2262 = vrot.slane %v2261, 4
        %v2264 = vshll.u32 %v1904, 16
        %v2266 = vrot.slane %v2264, 5
        %v2267 = vsel %vm813, %v2262, %v2266
        %v2269 = vshrl.u32 %v1905, 16
        %v2271 = vrot.slane %v2269, 4
        %v2272 = vshll.u32 %v1905, 16
        %v2274 = vrot.slane %v2272, 5
        %v2275 = vor.u32 %v2271, %v2274
        %v2276 = vrot.slane %v2275, 4
        %v2278 = vshll.u32 %v1906, 16
        %v2280 = vrot.slane %v2278, 5
        %v2281 = vsel %vm813, %v2276, %v2280
        %v2282 = vshrl.u32 %v1906, 16
        %v2284 = vrot.slane %v2282, 4
        %v2285 = vor.u32 %v2284, %v2280
        %v2286 = vrot.slane %v2285, 4
        %v2288 = vshll.u32 %v1907, 16
        %v2290 = vrot.slane %v2288, 5
        %v2291 = vsel %vm813, %v2286, %v2290
        %2324 = vst.msk [vmem:[#allocation3 + $0x4] sm:$0xf] %vm170, %v1921
        %2325 = vst.msk [vmem:[#allocation3 + $0x10] sm:$0xf] %vm170, %v1931
        %2326 = vst.msk [vmem:[#allocation3 + $0x1c] sm:$0xf] %vm170, %v1945
        %2327 = vst.msk [vmem:[#allocation3 + $0x28] sm:$0xf] %vm170, %v1955
        %2328 = vst.msk [vmem:[#allocation3 + $0x34] sm:$0xf] %vm170, %v1969
        %2329 = vst.msk [vmem:[#allocation3 + $0x40] sm:$0xf] %vm170, %v1979
        %2330 = vst.msk [vmem:[#allocation3 + $0x4c] sm:$0xf] %vm170, %v1993
        %2331 = vst.msk [vmem:[#allocation3 + $0x58] sm:$0xf] %vm170, %v2003
        %2332 = vst.msk [vmem:[#allocation3 + $0x64] sm:$0xf] %vm170, %v2017
        %2333 = vst.msk [vmem:[#allocation3 + $0x70] sm:$0xf] %vm170, %v2027
        %2334 = vst.msk [vmem:[#allocation3 + $0x7c] sm:$0xf] %vm170, %v2041
        %2335 = vst.msk [vmem:[#allocation3 + $0x88] sm:$0xf] %vm170, %v2051
        %2336 = vst.msk [vmem:[#allocation3 + $0x94] sm:$0xf] %vm170, %v2065
        %2337 = vst.msk [vmem:[#allocation3 + $0xa0] sm:$0xf] %vm170, %v2075
        %2338 = vst.msk [vmem:[#allocation3 + $0xac] sm:$0xf] %vm170, %v2089
        %2339 = vst.msk [vmem:[#allocation3 + $0xb8] sm:$0xf] %vm170, %v2099
        %2340 = vst.msk [vmem:[#allocation3 + $0xc4] sm:$0xf] %vm170, %v2113
        %2341 = vst.msk [vmem:[#allocation3 + $0xd0] sm:$0xf] %vm170, %v2123
        %2342 = vst.msk [vmem:[#allocation3 + $0xdc] sm:$0xf] %vm170, %v2137
        %2343 = vst.msk [vmem:[#allocation3 + $0xe8] sm:$0xf] %vm170, %v2147
        %2344 = vst.msk [vmem:[#allocation3 + $0xf4] sm:$0xf] %vm170, %v2161
        %2345 = vst.msk [vmem:[#allocation3 + $0x100] sm:$0xf] %vm170, %v2171
        %2346 = vst.msk [vmem:[#allocation3 + $0x10c] sm:$0xf] %vm170, %v2185
        %2347 = vst.msk [vmem:[#allocation3 + $0x118] sm:$0xf] %vm170, %v2195
        %2348 = vst.msk [vmem:[#allocation3 + $0x124] sm:$0xf] %vm170, %v2209
        %2349 = vst.msk [vmem:[#allocation3 + $0x130] sm:$0xf] %vm170, %v2219
        %2350 = vst.msk [vmem:[#allocation3 + $0x13c] sm:$0xf] %vm170, %v2233
        %2351 = vst.msk [vmem:[#allocation3 + $0x148] sm:$0xf] %vm170, %v2243
        %2352 = vst.msk [vmem:[#allocation3 + $0x154] sm:$0xf] %vm170, %v2257
        %2353 = vst.msk [vmem:[#allocation3 + $0x160] sm:$0xf] %vm170, %v2267
        %2354 = vst.msk [vmem:[#allocation3 + $0x16c] sm:$0xf] %vm170, %v2281
        %2355 = vst.msk [vmem:[#allocation3 + $0x178] sm:$0xf] %vm170, %v2291
        %v2356 = vld [vmem:[%s581] sm:$0xe]
        %v2357 = vld [vmem:[%s581 + $0x4] sm:$0xf]
        %v2358 = vld [vmem:[%s581 + $0x8] sm:$0x1]
        %v2359 = vld [vmem:[%s581 + $0xc] sm:$0xe]
        %v2360 = vld [vmem:[%s581 + $0x10] sm:$0xf]
        %v2361 = vld [vmem:[%s581 + $0x14] sm:$0x1]
        %v2362 = vld [vmem:[%s581 + $0x18] sm:$0xe]
        %v2363 = vld [vmem:[%s581 + $0x1c] sm:$0xf]
        %v2364 = vld [vmem:[%s581 + $0x20] sm:$0x1]
        %v2365 = vld [vmem:[%s581 + $0x24] sm:$0xe]
        %v2366 = vld [vmem:[%s581 + $0x28] sm:$0xf]
        %v2367 = vld [vmem:[%s581 + $0x2c] sm:$0x1]
        %v2368 = vld [vmem:[%s581 + $0x30] sm:$0xe]
        %v2369 = vld [vmem:[%s581 + $0x34] sm:$0xf]
        %v2370 = vld [vmem:[%s581 + $0x38] sm:$0x1]
        %v2371 = vld [vmem:[%s581 + $0x3c] sm:$0xe]
        %v2372 = vld [vmem:[%s581 + $0x40] sm:$0xf]
        %v2373 = vld [vmem:[%s581 + $0x44] sm:$0x1]
        %v2374 = vld [vmem:[%s581 + $0x48] sm:$0xe]
        %v2375 = vld [vmem:[%s581 + $0x4c] sm:$0xf]
        %v2376 = vld [vmem:[%s581 + $0x50] sm:$0x1]
        %v2377 = vld [vmem:[%s581 + $0x54] sm:$0xe]
        %v2378 = vld [vmem:[%s581 + $0x58] sm:$0xf]
        %v2379 = vld [vmem:[%s581 + $0x5c] sm:$0x1]
        %v2380 = vld [vmem:[%s581 + $0x60] sm:$0xe]
        %v2381 = vld [vmem:[%s581 + $0x64] sm:$0xf]
        %v2382 = vld [vmem:[%s581 + $0x68] sm:$0x1]
        %v2383 = vld [vmem:[%s581 + $0x6c] sm:$0xe]
        %v2384 = vld [vmem:[%s581 + $0x70] sm:$0xf]
        %v2385 = vld [vmem:[%s581 + $0x74] sm:$0x1]
        %v2386 = vld [vmem:[%s581 + $0x78] sm:$0xe]
        %v2387 = vld [vmem:[%s581 + $0x7c] sm:$0xf]
        %v2388 = vld [vmem:[%s581 + $0x80] sm:$0x1]
        %v2389 = vld [vmem:[%s581 + $0x84] sm:$0xe]
        %v2390 = vld [vmem:[%s581 + $0x88] sm:$0xf]
        %v2391 = vld [vmem:[%s581 + $0x8c] sm:$0x1]
        %v2392 = vld [vmem:[%s581 + $0x90] sm:$0xe]
        %v2393 = vld [vmem:[%s581 + $0x94] sm:$0xf]
        %v2394 = vld [vmem:[%s581 + $0x98] sm:$0x1]
        %v2395 = vld [vmem:[%s581 + $0x9c] sm:$0xe]
        %v2396 = vld [vmem:[%s581 + $0xa0] sm:$0xf]
        %v2397 = vld [vmem:[%s581 + $0xa4] sm:$0x1]
        %v2398 = vld [vmem:[%s581 + $0xa8] sm:$0xe]
        %v2399 = vld [vmem:[%s581 + $0xac] sm:$0xf]
        %v2400 = vld [vmem:[%s581 + $0xb0] sm:$0x1]
        %v2401 = vld [vmem:[%s581 + $0xb4] sm:$0xe]
        %v2402 = vld [vmem:[%s581 + $0xb8] sm:$0xf]
        %v2403 = vld [vmem:[%s581 + $0xbc] sm:$0x1]
        %v2452 = vrot.slane %v2356, 5
        %v2453 = vrot.slane %v2452, 4
        %v2454 = vrot.slane %v2357, 5
        %v2455 = vsel %vm1425, %v2453, %v2454
        %v2456 = vrot.slane %v2454, 4
        %v2457 = vrot.slane %v2358, 5
        %v2458 = vsel %vm1425, %v2456, %v2457
        %v2459 = vrot.slane %v2359, 5
        %v2460 = vrot.slane %v2459, 4
        %v2461 = vrot.slane %v2360, 5
        %v2462 = vsel %vm1425, %v2460, %v2461
        %v2463 = vrot.slane %v2461, 4
        %v2464 = vrot.slane %v2361, 5
        %v2465 = vsel %vm1425, %v2463, %v2464
        %v2466 = vrot.slane %v2362, 5
        %v2467 = vrot.slane %v2466, 4
        %v2468 = vrot.slane %v2363, 5
        %v2469 = vsel %vm1425, %v2467, %v2468
        %v2470 = vrot.slane %v2468, 4
        %v2471 = vrot.slane %v2364, 5
        %v2472 = vsel %vm1425, %v2470, %v2471
        %v2473 = vrot.slane %v2365, 5
        %v2474 = vrot.slane %v2473, 4
        %v2475 = vrot.slane %v2366, 5
        %v2476 = vsel %vm1425, %v2474, %v2475
        %v2477 = vrot.slane %v2475, 4
        %v2478 = vrot.slane %v2367, 5
        %v2479 = vsel %vm1425, %v2477, %v2478
        %v2480 = vrot.slane %v2368, 5
        %v2481 = vrot.slane %v2480, 4
        %v2482 = vrot.slane %v2369, 5
        %v2483 = vsel %vm1425, %v2481, %v2482
        %v2484 = vrot.slane %v2482, 4
        %v2485 = vrot.slane %v2370, 5
        %v2486 = vsel %vm1425, %v2484, %v2485
        %v2487 = vrot.slane %v2371, 5
        %v2488 = vrot.slane %v2487, 4
        %v2489 = vrot.slane %v2372, 5
        %v2490 = vsel %vm1425, %v2488, %v2489
        %v2491 = vrot.slane %v2489, 4
        %v2492 = vrot.slane %v2373, 5
        %v2493 = vsel %vm1425, %v2491, %v2492
        %v2494 = vrot.slane %v2374, 5
        %v2495 = vrot.slane %v2494, 4
        %v2496 = vrot.slane %v2375, 5
        %v2497 = vsel %vm1425, %v2495, %v2496
        %v2498 = vrot.slane %v2496, 4
        %v2499 = vrot.slane %v2376, 5
        %v2500 = vsel %vm1425, %v2498, %v2499
        %v2501 = vrot.slane %v2377, 5
        %v2502 = vrot.slane %v2501, 4
        %v2503 = vrot.slane %v2378, 5
        %v2504 = vsel %vm1425, %v2502, %v2503
        %v2505 = vrot.slane %v2503, 4
        %v2506 = vrot.slane %v2379, 5
        %v2507 = vsel %vm1425, %v2505, %v2506
        %v2508 = vrot.slane %v2380, 5
        %v2509 = vrot.slane %v2508, 4
        %v2510 = vrot.slane %v2381, 5
        %v2511 = vsel %vm1425, %v2509, %v2510
        %v2512 = vrot.slane %v2510, 4
        %v2513 = vrot.slane %v2382, 5
        %v2514 = vsel %vm1425, %v2512, %v2513
        %v2515 = vrot.slane %v2383, 5
        %v2516 = vrot.slane %v2515, 4
        %v2517 = vrot.slane %v2384, 5
        %v2518 = vsel %vm1425, %v2516, %v2517
        %v2519 = vrot.slane %v2517, 4
        %v2520 = vrot.slane %v2385, 5
        %v2521 = vsel %vm1425, %v2519, %v2520
        %v2522 = vrot.slane %v2386, 5
        %v2523 = vrot.slane %v2522, 4
        %v2524 = vrot.slane %v2387, 5
        %v2525 = vsel %vm1425, %v2523, %v2524
        %v2526 = vrot.slane %v2524, 4
        %v2527 = vrot.slane %v2388, 5
        %v2528 = vsel %vm1425, %v2526, %v2527
        %v2529 = vrot.slane %v2389, 5
        %v2530 = vrot.slane %v2529, 4
        %v2531 = vrot.slane %v2390, 5
        %v2532 = vsel %vm1425, %v2530, %v2531
        %v2533 = vrot.slane %v2531, 4
        %v2534 = vrot.slane %v2391, 5
        %v2535 = vsel %vm1425, %v2533, %v2534
        %v2536 = vrot.slane %v2392, 5
        %v2537 = vrot.slane %v2536, 4
        %v2538 = vrot.slane %v2393, 5
        %v2539 = vsel %vm1425, %v2537, %v2538
        %v2540 = vrot.slane %v2538, 4
        %v2541 = vrot.slane %v2394, 5
        %v2542 = vsel %vm1425, %v2540, %v2541
        %v2543 = vrot.slane %v2395, 5
        %v2544 = vrot.slane %v2543, 4
        %v2545 = vrot.slane %v2396, 5
        %v2546 = vsel %vm1425, %v2544, %v2545
        %v2547 = vrot.slane %v2545, 4
        %v2548 = vrot.slane %v2397, 5
        %v2549 = vsel %vm1425, %v2547, %v2548
        %v2550 = vrot.slane %v2398, 5
        %v2551 = vrot.slane %v2550, 4
        %v2552 = vrot.slane %v2399, 5
        %v2553 = vsel %vm1425, %v2551, %v2552
        %v2554 = vrot.slane %v2552, 4
        %v2555 = vrot.slane %v2400, 5
        %v2556 = vsel %vm1425, %v2554, %v2555
        %v2557 = vrot.slane %v2401, 5
        %v2558 = vrot.slane %v2557, 4
        %v2559 = vrot.slane %v2402, 5
        %v2560 = vsel %vm1425, %v2558, %v2559
        %v2561 = vrot.slane %v2559, 4
        %v2562 = vrot.slane %v2403, 5
        %v2563 = vsel %vm1425, %v2561, %v2562
        %2564 = vrot.lane.b32.xlu0 %v2455, 32
        %v2565 = vpop.permute.xlu0 %2564
        %2566 = vrot.lane.b32.xlu0 %v2458, 32
        %v2567 = vpop.permute.xlu0 %2566
        %2568 = vrot.lane.b32.xlu0 %v2462, 32
        %v2569 = vpop.permute.xlu0 %2568
        %2570 = vrot.lane.b32.xlu0 %v2465, 32
        %v2571 = vpop.permute.xlu0 %2570
        %2572 = vrot.lane.b32.xlu0 %v2469, 32
        %v2573 = vpop.permute.xlu0 %2572
        %2574 = vrot.lane.b32.xlu0 %v2472, 32
        %v2575 = vpop.permute.xlu0 %2574
        %2576 = vrot.lane.b32.xlu0 %v2476, 32
        %v2577 = vpop.permute.xlu0 %2576
        %2578 = vrot.lane.b32.xlu0 %v2479, 32
        %v2579 = vpop.permute.xlu0 %2578
        %2580 = vrot.lane.b32.xlu0 %v2483, 32
        %v2581 = vpop.permute.xlu0 %2580
        %2582 = vrot.lane.b32.xlu0 %v2486, 32
        %v2583 = vpop.permute.xlu0 %2582
        %2584 = vrot.lane.b32.xlu0 %v2490, 32
        %v2585 = vpop.permute.xlu0 %2584
        %2586 = vrot.lane.b32.xlu0 %v2493, 32
        %v2587 = vpop.permute.xlu0 %2586
        %2588 = vrot.lane.b32.xlu0 %v2497, 32
        %v2589 = vpop.permute.xlu0 %2588
        %2590 = vrot.lane.b32.xlu0 %v2500, 32
        %v2591 = vpop.permute.xlu0 %2590
        %2592 = vrot.lane.b32.xlu0 %v2504, 32
        %v2593 = vpop.permute.xlu0 %2592
        %2594 = vrot.lane.b32.xlu0 %v2507, 32
        %v2595 = vpop.permute.xlu0 %2594
        %2596 = vrot.lane.b32.xlu0 %v2511, 32
        %v2597 = vpop.permute.xlu0 %2596
        %2598 = vrot.lane.b32.xlu0 %v2514, 32
        %v2599 = vpop.permute.xlu0 %2598
        %2600 = vrot.lane.b32.xlu0 %v2518, 32
        %v2601 = vpop.permute.xlu0 %2600
        %2602 = vrot.lane.b32.xlu0 %v2521, 32
        %v2603 = vpop.permute.xlu0 %2602
        %2604 = vrot.lane.b32.xlu0 %v2525, 32
        %v2605 = vpop.permute.xlu0 %2604
        %2606 = vrot.lane.b32.xlu0 %v2528, 32
        %v2607 = vpop.permute.xlu0 %2606
        %2608 = vrot.lane.b32.xlu0 %v2532, 32
        %v2609 = vpop.permute.xlu0 %2608
        %2610 = vrot.lane.b32.xlu0 %v2535, 32
        %v2611 = vpop.permute.xlu0 %2610
        %2612 = vrot.lane.b32.xlu0 %v2539, 32
        %v2613 = vpop.permute.xlu0 %2612
        %2614 = vrot.lane.b32.xlu0 %v2542, 32
        %v2615 = vpop.permute.xlu0 %2614
        %2616 = vrot.lane.b32.xlu0 %v2546, 32
        %v2617 = vpop.permute.xlu0 %2616
        %2618 = vrot.lane.b32.xlu0 %v2549, 32
        %v2619 = vpop.permute.xlu0 %2618
        %2620 = vrot.lane.b32.xlu0 %v2553, 32
        %v2621 = vpop.permute.xlu0 %2620
        %2622 = vrot.lane.b32.xlu0 %v2556, 32
        %v2623 = vpop.permute.xlu0 %2622
        %2624 = vrot.lane.b32.xlu0 %v2560, 32
        %v2625 = vpop.permute.xlu0 %2624
        %2626 = vrot.lane.b32.xlu0 %v2563, 32
        %v2627 = vpop.permute.xlu0 %2626
        %2660 = vst.msk [vmem:[#allocation3 + $0x4] sm:$0xf] %vm1294, %v2565
        %2661 = vst.msk [vmem:[#allocation3 + $0x10] sm:$0xf] %vm1294, %v2567
        %2662 = vst.msk [vmem:[#allocation3 + $0x1c] sm:$0xf] %vm1294, %v2569
        %2663 = vst.msk [vmem:[#allocation3 + $0x28] sm:$0xf] %vm1294, %v2571
        %2664 = vst.msk [vmem:[#allocation3 + $0x34] sm:$0xf] %vm1294, %v2573
        %2665 = vst.msk [vmem:[#allocation3 + $0x40] sm:$0xf] %vm1294, %v2575
        %2666 = vst.msk [vmem:[#allocation3 + $0x4c] sm:$0xf] %vm1294, %v2577
        %2667 = vst.msk [vmem:[#allocation3 + $0x58] sm:$0xf] %vm1294, %v2579
        %2668 = vst.msk [vmem:[#allocation3 + $0x64] sm:$0xf] %vm1294, %v2581
        %2669 = vst.msk [vmem:[#allocation3 + $0x70] sm:$0xf] %vm1294, %v2583
        %2670 = vst.msk [vmem:[#allocation3 + $0x7c] sm:$0xf] %vm1294, %v2585
        %2671 = vst.msk [vmem:[#allocation3 + $0x88] sm:$0xf] %vm1294, %v2587
        %2672 = vst.msk [vmem:[#allocation3 + $0x94] sm:$0xf] %vm1294, %v2589
        %2673 = vst.msk [vmem:[#allocation3 + $0xa0] sm:$0xf] %vm1294, %v2591
        %2674 = vst.msk [vmem:[#allocation3 + $0xac] sm:$0xf] %vm1294, %v2593
        %2675 = vst.msk [vmem:[#allocation3 + $0xb8] sm:$0xf] %vm1294, %v2595
        %2676 = vst.msk [vmem:[#allocation3 + $0xc4] sm:$0xf] %vm1294, %v2597
        %2677 = vst.msk [vmem:[#allocation3 + $0xd0] sm:$0xf] %vm1294, %v2599
        %2678 = vst.msk [vmem:[#allocation3 + $0xdc] sm:$0xf] %vm1294, %v2601
        %2679 = vst.msk [vmem:[#allocation3 + $0xe8] sm:$0xf] %vm1294, %v2603
        %2680 = vst.msk [vmem:[#allocation3 + $0xf4] sm:$0xf] %vm1294, %v2605
        %2681 = vst.msk [vmem:[#allocation3 + $0x100] sm:$0xf] %vm1294, %v2607
        %2682 = vst.msk [vmem:[#allocation3 + $0x10c] sm:$0xf] %vm1294, %v2609
        %2683 = vst.msk [vmem:[#allocation3 + $0x118] sm:$0xf] %vm1294, %v2611
        %2684 = vst.msk [vmem:[#allocation3 + $0x124] sm:$0xf] %vm1294, %v2613
        %2685 = vst.msk [vmem:[#allocation3 + $0x130] sm:$0xf] %vm1294, %v2615
        %2686 = vst.msk [vmem:[#allocation3 + $0x13c] sm:$0xf] %vm1294, %v2617
        %2687 = vst.msk [vmem:[#allocation3 + $0x148] sm:$0xf] %vm1294, %v2619
        %2688 = vst.msk [vmem:[#allocation3 + $0x154] sm:$0xf] %vm1294, %v2621
        %2689 = vst.msk [vmem:[#allocation3 + $0x160] sm:$0xf] %vm1294, %v2623
        %2690 = vst.msk [vmem:[#allocation3 + $0x16c] sm:$0xf] %vm1294, %v2625
        %2691 = vst.msk [vmem:[#allocation3 + $0x178] sm:$0xf] %vm1294, %v2627
        %s2692 = scalar_lea.vmem [#allocation2], 24
        %v2693 = vld [vmem:[%s2692] sm:$0xf]
        %v2694 = vld [vmem:[%s2692 + $0x4] sm:$0xf]
        %v2695 = vld [vmem:[%s2692 + $0xc] sm:$0xf]
        %v2696 = vld [vmem:[%s2692 + $0x10] sm:$0xf]
        %v2697 = vld [vmem:[%s2692 + $0x18] sm:$0xf]
        %v2698 = vld [vmem:[%s2692 + $0x1c] sm:$0xf]
        %v2699 = vld [vmem:[%s2692 + $0x24] sm:$0xf]
        %v2700 = vld [vmem:[%s2692 + $0x28] sm:$0xf]
        %v2701 = vld [vmem:[%s2692 + $0x30] sm:$0xf]
        %v2702 = vld [vmem:[%s2692 + $0x34] sm:$0xf]
        %v2703 = vld [vmem:[%s2692 + $0x3c] sm:$0xf]
        %v2704 = vld [vmem:[%s2692 + $0x40] sm:$0xf]
        %v2705 = vld [vmem:[%s2692 + $0x48] sm:$0xf]
        %v2706 = vld [vmem:[%s2692 + $0x4c] sm:$0xf]
        %v2707 = vld [vmem:[%s2692 + $0x54] sm:$0xf]
        %v2708 = vld [vmem:[%s2692 + $0x58] sm:$0xf]
        %v2709 = vld [vmem:[%s2692 + $0x60] sm:$0xf]
        %v2710 = vld [vmem:[%s2692 + $0x64] sm:$0xf]
        %v2711 = vld [vmem:[%s2692 + $0x6c] sm:$0xf]
        %v2712 = vld [vmem:[%s2692 + $0x70] sm:$0xf]
        %v2713 = vld [vmem:[%s2692 + $0x78] sm:$0xf]
        %v2714 = vld [vmem:[%s2692 + $0x7c] sm:$0xf]
        %v2715 = vld [vmem:[%s2692 + $0x84] sm:$0xf]
        %v2716 = vld [vmem:[%s2692 + $0x88] sm:$0xf]
        %v2717 = vld [vmem:[%s2692 + $0x90] sm:$0xf]
        %v2718 = vld [vmem:[%s2692 + $0x94] sm:$0xf]
        %v2719 = vld [vmem:[%s2692 + $0x9c] sm:$0xf]
        %v2720 = vld [vmem:[%s2692 + $0xa0] sm:$0xf]
        %v2721 = vld [vmem:[%s2692 + $0xa8] sm:$0xf]
        %v2722 = vld [vmem:[%s2692 + $0xac] sm:$0xf]
        %v2723 = vld [vmem:[%s2692 + $0xb4] sm:$0xf]
        %v2724 = vld [vmem:[%s2692 + $0xb8] sm:$0xf]
        %2757 = vrot.lane.b32.xlu0 %v2693, 64
        %v2758 = vpop.permute.xlu0 %2757
        %2759 = vrot.lane.b32.xlu0 %v2694, 64
        %v2760 = vpop.permute.xlu0 %2759
        %2761 = vrot.lane.b32.xlu0 %v2695, 64
        %v2762 = vpop.permute.xlu0 %2761
        %2763 = vrot.lane.b32.xlu0 %v2696, 64
        %v2764 = vpop.permute.xlu0 %2763
        %2765 = vrot.lane.b32.xlu0 %v2697, 64
        %v2766 = vpop.permute.xlu0 %2765
        %2767 = vrot.lane.b32.xlu0 %v2698, 64
        %v2768 = vpop.permute.xlu0 %2767
        %2769 = vrot.lane.b32.xlu0 %v2699, 64
        %v2770 = vpop.permute.xlu0 %2769
        %2771 = vrot.lane.b32.xlu0 %v2700, 64
        %v2772 = vpop.permute.xlu0 %2771
        %2773 = vrot.lane.b32.xlu0 %v2701, 64
        %v2774 = vpop.permute.xlu0 %2773
        %2775 = vrot.lane.b32.xlu0 %v2702, 64
        %v2776 = vpop.permute.xlu0 %2775
        %2777 = vrot.lane.b32.xlu0 %v2703, 64
        %v2778 = vpop.permute.xlu0 %2777
        %2779 = vrot.lane.b32.xlu0 %v2704, 64
        %v2780 = vpop.permute.xlu0 %2779
        %2781 = vrot.lane.b32.xlu0 %v2705, 64
        %v2782 = vpop.permute.xlu0 %2781
        %2783 = vrot.lane.b32.xlu0 %v2706, 64
        %v2784 = vpop.permute.xlu0 %2783
        %2785 = vrot.lane.b32.xlu0 %v2707, 64
        %v2786 = vpop.permute.xlu0 %2785
        %2787 = vrot.lane.b32.xlu0 %v2708, 64
        %v2788 = vpop.permute.xlu0 %2787
        %2789 = vrot.lane.b32.xlu0 %v2709, 64
        %v2790 = vpop.permute.xlu0 %2789
        %2791 = vrot.lane.b32.xlu0 %v2710, 64
        %v2792 = vpop.permute.xlu0 %2791
        %2793 = vrot.lane.b32.xlu0 %v2711, 64
        %v2794 = vpop.permute.xlu0 %2793
        %2795 = vrot.lane.b32.xlu0 %v2712, 64
        %v2796 = vpop.permute.xlu0 %2795
        %2797 = vrot.lane.b32.xlu0 %v2713, 64
        %v2798 = vpop.permute.xlu0 %2797
        %2799 = vrot.lane.b32.xlu0 %v2714, 64
        %v2800 = vpop.permute.xlu0 %2799
        %2801 = vrot.lane.b32.xlu0 %v2715, 64
        %v2802 = vpop.permute.xlu0 %2801
        %2803 = vrot.lane.b32.xlu0 %v2716, 64
        %v2804 = vpop.permute.xlu0 %2803
        %2805 = vrot.lane.b32.xlu0 %v2717, 64
        %v2806 = vpop.permute.xlu0 %2805
        %2807 = vrot.lane.b32.xlu0 %v2718, 64
        %v2808 = vpop.permute.xlu0 %2807
        %2809 = vrot.lane.b32.xlu0 %v2719, 64
        %v2810 = vpop.permute.xlu0 %2809
        %2811 = vrot.lane.b32.xlu0 %v2720, 64
        %v2812 = vpop.permute.xlu0 %2811
        %2813 = vrot.lane.b32.xlu0 %v2721, 64
        %v2814 = vpop.permute.xlu0 %2813
        %2815 = vrot.lane.b32.xlu0 %v2722, 64
        %v2816 = vpop.permute.xlu0 %2815
        %2817 = vrot.lane.b32.xlu0 %v2723, 64
        %v2818 = vpop.permute.xlu0 %2817
        %2819 = vrot.lane.b32.xlu0 %v2724, 64
        %v2820 = vpop.permute.xlu0 %2819
        %2853 = vst.msk [vmem:[#allocation3 + $0x4] sm:$0xf] %vm1634, %v2758
        %2854 = vst.msk [vmem:[#allocation3 + $0x10] sm:$0xf] %vm1634, %v2760
        %2855 = vst.msk [vmem:[#allocation3 + $0x1c] sm:$0xf] %vm1634, %v2762
        %2856 = vst.msk [vmem:[#allocation3 + $0x28] sm:$0xf] %vm1634, %v2764
        %2857 = vst.msk [vmem:[#allocation3 + $0x34] sm:$0xf] %vm1634, %v2766
        %2858 = vst.msk [vmem:[#allocation3 + $0x40] sm:$0xf] %vm1634, %v2768
        %2859 = vst.msk [vmem:[#allocation3 + $0x4c] sm:$0xf] %vm1634, %v2770
        %2860 = vst.msk [vmem:[#allocation3 + $0x58] sm:$0xf] %vm1634, %v2772
        %2861 = vst.msk [vmem:[#allocation3 + $0x64] sm:$0xf] %vm1634, %v2774
        %2862 = vst.msk [vmem:[#allocation3 + $0x70] sm:$0xf] %vm1634, %v2776
        %2863 = vst.msk [vmem:[#allocation3 + $0x7c] sm:$0xf] %vm1634, %v2778
        %2864 = vst.msk [vmem:[#allocation3 + $0x88] sm:$0xf] %vm1634, %v2780
        %2865 = vst.msk [vmem:[#allocation3 + $0x94] sm:$0xf] %vm1634, %v2782
        %2866 = vst.msk [vmem:[#allocation3 + $0xa0] sm:$0xf] %vm1634, %v2784
        %2867 = vst.msk [vmem:[#allocation3 + $0xac] sm:$0xf] %vm1634, %v2786
        %2868 = vst.msk [vmem:[#allocation3 + $0xb8] sm:$0xf] %vm1634, %v2788
        %2869 = vst.msk [vmem:[#allocation3 + $0xc4] sm:$0xf] %vm1634, %v2790
        %2870 = vst.msk [vmem:[#allocation3 + $0xd0] sm:$0xf] %vm1634, %v2792
        %2871 = vst.msk [vmem:[#allocation3 + $0xdc] sm:$0xf] %vm1634, %v2794
        %2872 = vst.msk [vmem:[#allocation3 + $0xe8] sm:$0xf] %vm1634, %v2796
        %2873 = vst.msk [vmem:[#allocation3 + $0xf4] sm:$0xf] %vm1634, %v2798
        %2874 = vst.msk [vmem:[#allocation3 + $0x100] sm:$0xf] %vm1634, %v2800
        %2875 = vst.msk [vmem:[#allocation3 + $0x10c] sm:$0xf] %vm1634, %v2802
        %2876 = vst.msk [vmem:[#allocation3 + $0x118] sm:$0xf] %vm1634, %v2804
        %2877 = vst.msk [vmem:[#allocation3 + $0x124] sm:$0xf] %vm1634, %v2806
        %2878 = vst.msk [vmem:[#allocation3 + $0x130] sm:$0xf] %vm1634, %v2808
        %2879 = vst.msk [vmem:[#allocation3 + $0x13c] sm:$0xf] %vm1634, %v2810
        %2880 = vst.msk [vmem:[#allocation3 + $0x148] sm:$0xf] %vm1634, %v2812
        %2881 = vst.msk [vmem:[#allocation3 + $0x154] sm:$0xf] %vm1634, %v2814
        %2882 = vst.msk [vmem:[#allocation3 + $0x160] sm:$0xf] %vm1634, %v2816
        %2883 = vst.msk [vmem:[#allocation3 + $0x16c] sm:$0xf] %vm1634, %v2818
        %2884 = vst.msk [vmem:[#allocation3 + $0x178] sm:$0xf] %vm1634, %v2820
        %v2885 = vld [vmem:[%s2692] sm:$0xf]
        %v2886 = vld [vmem:[%s2692 + $0x4] sm:$0xf]
        %v2887 = vld [vmem:[%s2692 + $0x8] sm:$0x1]
        %v2888 = vld [vmem:[%s2692 + $0xc] sm:$0xf]
        %v2889 = vld [vmem:[%s2692 + $0x10] sm:$0xf]
        %v2890 = vld [vmem:[%s2692 + $0x14] sm:$0x1]
        %v2891 = vld [vmem:[%s2692 + $0x18] sm:$0xf]
        %v2892 = vld [vmem:[%s2692 + $0x1c] sm:$0xf]
        %v2893 = vld [vmem:[%s2692 + $0x20] sm:$0x1]
        %v2894 = vld [vmem:[%s2692 + $0x24] sm:$0xf]
        %v2895 = vld [vmem:[%s2692 + $0x28] sm:$0xf]
        %v2896 = vld [vmem:[%s2692 + $0x2c] sm:$0x1]
        %v2897 = vld [vmem:[%s2692 + $0x30] sm:$0xf]
        %v2898 = vld [vmem:[%s2692 + $0x34] sm:$0xf]
        %v2899 = vld [vmem:[%s2692 + $0x38] sm:$0x1]
        %v2900 = vld [vmem:[%s2692 + $0x3c] sm:$0xf]
        %v2901 = vld [vmem:[%s2692 + $0x40] sm:$0xf]
        %v2902 = vld [vmem:[%s2692 + $0x44] sm:$0x1]
        %v2903 = vld [vmem:[%s2692 + $0x48] sm:$0xf]
        %v2904 = vld [vmem:[%s2692 + $0x4c] sm:$0xf]
        %v2905 = vld [vmem:[%s2692 + $0x50] sm:$0x1]
        %v2906 = vld [vmem:[%s2692 + $0x54] sm:$0xf]
        %v2907 = vld [vmem:[%s2692 + $0x58] sm:$0xf]
        %v2908 = vld [vmem:[%s2692 + $0x5c] sm:$0x1]
        %v2909 = vld [vmem:[%s2692 + $0x60] sm:$0xf]
        %v2910 = vld [vmem:[%s2692 + $0x64] sm:$0xf]
        %v2911 = vld [vmem:[%s2692 + $0x68] sm:$0x1]
        %v2912 = vld [vmem:[%s2692 + $0x6c] sm:$0xf]
        %v2913 = vld [vmem:[%s2692 + $0x70] sm:$0xf]
        %v2914 = vld [vmem:[%s2692 + $0x74] sm:$0x1]
        %v2915 = vld [vmem:[%s2692 + $0x78] sm:$0xf]
        %v2916 = vld [vmem:[%s2692 + $0x7c] sm:$0xf]
        %v2917 = vld [vmem:[%s2692 + $0x80] sm:$0x1]
        %v2918 = vld [vmem:[%s2692 + $0x84] sm:$0xf]
        %v2919 = vld [vmem:[%s2692 + $0x88] sm:$0xf]
        %v2920 = vld [vmem:[%s2692 + $0x8c] sm:$0x1]
        %v2921 = vld [vmem:[%s2692 + $0x90] sm:$0xf]
        %v2922 = vld [vmem:[%s2692 + $0x94] sm:$0xf]
        %v2923 = vld [vmem:[%s2692 + $0x98] sm:$0x1]
        %v2924 = vld [vmem:[%s2692 + $0x9c] sm:$0xf]
        %v2925 = vld [vmem:[%s2692 + $0xa0] sm:$0xf]
        %v2926 = vld [vmem:[%s2692 + $0xa4] sm:$0x1]
        %v2927 = vld [vmem:[%s2692 + $0xa8] sm:$0xf]
        %v2928 = vld [vmem:[%s2692 + $0xac] sm:$0xf]
        %v2929 = vld [vmem:[%s2692 + $0xb0] sm:$0x1]
        %v2930 = vld [vmem:[%s2692 + $0xb4] sm:$0xf]
        %v2931 = vld [vmem:[%s2692 + $0xb8] sm:$0xf]
        %v2932 = vld [vmem:[%s2692 + $0xbc] sm:$0x1]
        %v2934 = vshrl.u32 %v2885, 16
        %v2936 = vrot.slane %v2934, 4
        %v2937 = vshll.u32 %v2885, 16
        %v2939 = vrot.slane %v2937, 5
        %v2940 = vor.u32 %v2936, %v2939
        %v2941 = vrot.slane %v2940, 4
        %v2943 = vshll.u32 %v2886, 16
        %v2945 = vrot.slane %v2943, 5
        %v2946 = vsel %vm813, %v2941, %v2945
        %v2947 = vshrl.u32 %v2886, 16
        %v2949 = vrot.slane %v2947, 4
        %v2950 = vor.u32 %v2949, %v2945
        %v2951 = vrot.slane %v2950, 4
        %v2953 = vshll.u32 %v2887, 16
        %v2955 = vrot.slane %v2953, 5
        %v2956 = vsel %vm813, %v2951, %v2955
        %v2958 = vshrl.u32 %v2888, 16
        %v2960 = vrot.slane %v2958, 4
        %v2961 = vshll.u32 %v2888, 16
        %v2963 = vrot.slane %v2961, 5
        %v2964 = vor.u32 %v2960, %v2963
        %v2965 = vrot.slane %v2964, 4
        %v2967 = vshll.u32 %v2889, 16
        %v2969 = vrot.slane %v2967, 5
        %v2970 = vsel %vm813, %v2965, %v2969
        %v2971 = vshrl.u32 %v2889, 16
        %v2973 = vrot.slane %v2971, 4
        %v2974 = vor.u32 %v2973, %v2969
        %v2975 = vrot.slane %v2974, 4
        %v2977 = vshll.u32 %v2890, 16
        %v2979 = vrot.slane %v2977, 5
        %v2980 = vsel %vm813, %v2975, %v2979
        %v2982 = vshrl.u32 %v2891, 16
        %v2984 = vrot.slane %v2982, 4
        %v2985 = vshll.u32 %v2891, 16
        %v2987 = vrot.slane %v2985, 5
        %v2988 = vor.u32 %v2984, %v2987
        %v2989 = vrot.slane %v2988, 4
        %v2991 = vshll.u32 %v2892, 16
        %v2993 = vrot.slane %v2991, 5
        %v2994 = vsel %vm813, %v2989, %v2993
        %v2995 = vshrl.u32 %v2892, 16
        %v2997 = vrot.slane %v2995, 4
        %v2998 = vor.u32 %v2997, %v2993
        %v2999 = vrot.slane %v2998, 4
        %v3001 = vshll.u32 %v2893, 16
        %v3003 = vrot.slane %v3001, 5
        %v3004 = vsel %vm813, %v2999, %v3003
        %v3006 = vshrl.u32 %v2894, 16
        %v3008 = vrot.slane %v3006, 4
        %v3009 = vshll.u32 %v2894, 16
        %v3011 = vrot.slane %v3009, 5
        %v3012 = vor.u32 %v3008, %v3011
        %v3013 = vrot.slane %v3012, 4
        %v3015 = vshll.u32 %v2895, 16
        %v3017 = vrot.slane %v3015, 5
        %v3018 = vsel %vm813, %v3013, %v3017
        %v3019 = vshrl.u32 %v2895, 16
        %v3021 = vrot.slane %v3019, 4
        %v3022 = vor.u32 %v3021, %v3017
        %v3023 = vrot.slane %v3022, 4
        %v3025 = vshll.u32 %v2896, 16
        %v3027 = vrot.slane %v3025, 5
        %v3028 = vsel %vm813, %v3023, %v3027
        %v3030 = vshrl.u32 %v2897, 16
        %v3032 = vrot.slane %v3030, 4
        %v3033 = vshll.u32 %v2897, 16
        %v3035 = vrot.slane %v3033, 5
        %v3036 = vor.u32 %v3032, %v3035
        %v3037 = vrot.slane %v3036, 4
        %v3039 = vshll.u32 %v2898, 16
        %v3041 = vrot.slane %v3039, 5
        %v3042 = vsel %vm813, %v3037, %v3041
        %v3043 = vshrl.u32 %v2898, 16
        %v3045 = vrot.slane %v3043, 4
        %v3046 = vor.u32 %v3045, %v3041
        %v3047 = vrot.slane %v3046, 4
        %v3049 = vshll.u32 %v2899, 16
        %v3051 = vrot.slane %v3049, 5
        %v3052 = vsel %vm813, %v3047, %v3051
        %v3054 = vshrl.u32 %v2900, 16
        %v3056 = vrot.slane %v3054, 4
        %v3057 = vshll.u32 %v2900, 16
        %v3059 = vrot.slane %v3057, 5
        %v3060 = vor.u32 %v3056, %v3059
        %v3061 = vrot.slane %v3060, 4
        %v3063 = vshll.u32 %v2901, 16
        %v3065 = vrot.slane %v3063, 5
        %v3066 = vsel %vm813, %v3061, %v3065
        %v3067 = vshrl.u32 %v2901, 16
        %v3069 = vrot.slane %v3067, 4
        %v3070 = vor.u32 %v3069, %v3065
        %v3071 = vrot.slane %v3070, 4
        %v3073 = vshll.u32 %v2902, 16
        %v3075 = vrot.slane %v3073, 5
        %v3076 = vsel %vm813, %v3071, %v3075
        %v3078 = vshrl.u32 %v2903, 16
        %v3080 = vrot.slane %v3078, 4
        %v3081 = vshll.u32 %v2903, 16
        %v3083 = vrot.slane %v3081, 5
        %v3084 = vor.u32 %v3080, %v3083
        %v3085 = vrot.slane %v3084, 4
        %v3087 = vshll.u32 %v2904, 16
        %v3089 = vrot.slane %v3087, 5
        %v3090 = vsel %vm813, %v3085, %v3089
        %v3091 = vshrl.u32 %v2904, 16
        %v3093 = vrot.slane %v3091, 4
        %v3094 = vor.u32 %v3093, %v3089
        %v3095 = vrot.slane %v3094, 4
        %v3097 = vshll.u32 %v2905, 16
        %v3099 = vrot.slane %v3097, 5
        %v3100 = vsel %vm813, %v3095, %v3099
        %v3102 = vshrl.u32 %v2906, 16
        %v3104 = vrot.slane %v3102, 4
        %v3105 = vshll.u32 %v2906, 16
        %v3107 = vrot.slane %v3105, 5
        %v3108 = vor.u32 %v3104, %v3107
        %v3109 = vrot.slane %v3108, 4
        %v3111 = vshll.u32 %v2907, 16
        %v3113 = vrot.slane %v3111, 5
        %v3114 = vsel %vm813, %v3109, %v3113
        %v3115 = vshrl.u32 %v2907, 16
        %v3117 = vrot.slane %v3115, 4
        %v3118 = vor.u32 %v3117, %v3113
        %v3119 = vrot.slane %v3118, 4
        %v3121 = vshll.u32 %v2908, 16
        %v3123 = vrot.slane %v3121, 5
        %v3124 = vsel %vm813, %v3119, %v3123
        %v3126 = vshrl.u32 %v2909, 16
        %v3128 = vrot.slane %v3126, 4
        %v3129 = vshll.u32 %v2909, 16
        %v3131 = vrot.slane %v3129, 5
        %v3132 = vor.u32 %v3128, %v3131
        %v3133 = vrot.slane %v3132, 4
        %v3135 = vshll.u32 %v2910, 16
        %v3137 = vrot.slane %v3135, 5
        %v3138 = vsel %vm813, %v3133, %v3137
        %v3139 = vshrl.u32 %v2910, 16
        %v3141 = vrot.slane %v3139, 4
        %v3142 = vor.u32 %v3141, %v3137
        %v3143 = vrot.slane %v3142, 4
        %v3145 = vshll.u32 %v2911, 16
        %v3147 = vrot.slane %v3145, 5
        %v3148 = vsel %vm813, %v3143, %v3147
        %v3150 = vshrl.u32 %v2912, 16
        %v3152 = vrot.slane %v3150, 4
        %v3153 = vshll.u32 %v2912, 16
        %v3155 = vrot.slane %v3153, 5
        %v3156 = vor.u32 %v3152, %v3155
        %v3157 = vrot.slane %v3156, 4
        %v3159 = vshll.u32 %v2913, 16
        %v3161 = vrot.slane %v3159, 5
        %v3162 = vsel %vm813, %v3157, %v3161
        %v3163 = vshrl.u32 %v2913, 16
        %v3165 = vrot.slane %v3163, 4
        %v3166 = vor.u32 %v3165, %v3161
        %v3167 = vrot.slane %v3166, 4
        %v3169 = vshll.u32 %v2914, 16
        %v3171 = vrot.slane %v3169, 5
        %v3172 = vsel %vm813, %v3167, %v3171
        %v3174 = vshrl.u32 %v2915, 16
        %v3176 = vrot.slane %v3174, 4
        %v3177 = vshll.u32 %v2915, 16
        %v3179 = vrot.slane %v3177, 5
        %v3180 = vor.u32 %v3176, %v3179
        %v3181 = vrot.slane %v3180, 4
        %v3183 = vshll.u32 %v2916, 16
        %v3185 = vrot.slane %v3183, 5
        %v3186 = vsel %vm813, %v3181, %v3185
        %v3187 = vshrl.u32 %v2916, 16
        %v3189 = vrot.slane %v3187, 4
        %v3190 = vor.u32 %v3189, %v3185
        %v3191 = vrot.slane %v3190, 4
        %v3193 = vshll.u32 %v2917, 16
        %v3195 = vrot.slane %v3193, 5
        %v3196 = vsel %vm813, %v3191, %v3195
        %v3198 = vshrl.u32 %v2918, 16
        %v3200 = vrot.slane %v3198, 4
        %v3201 = vshll.u32 %v2918, 16
        %v3203 = vrot.slane %v3201, 5
        %v3204 = vor.u32 %v3200, %v3203
        %v3205 = vrot.slane %v3204, 4
        %v3207 = vshll.u32 %v2919, 16
        %v3209 = vrot.slane %v3207, 5
        %v3210 = vsel %vm813, %v3205, %v3209
        %v3211 = vshrl.u32 %v2919, 16
        %v3213 = vrot.slane %v3211, 4
        %v3214 = vor.u32 %v3213, %v3209
        %v3215 = vrot.slane %v3214, 4
        %v3217 = vshll.u32 %v2920, 16
        %v3219 = vrot.slane %v3217, 5
        %v3220 = vsel %vm813, %v3215, %v3219
        %v3222 = vshrl.u32 %v2921, 16
        %v3224 = vrot.slane %v3222, 4
        %v3225 = vshll.u32 %v2921, 16
        %v3227 = vrot.slane %v3225, 5
        %v3228 = vor.u32 %v3224, %v3227
        %v3229 = vrot.slane %v3228, 4
        %v3231 = vshll.u32 %v2922, 16
        %v3233 = vrot.slane %v3231, 5
        %v3234 = vsel %vm813, %v3229, %v3233
        %v3235 = vshrl.u32 %v2922, 16
        %v3237 = vrot.slane %v3235, 4
        %v3238 = vor.u32 %v3237, %v3233
        %v3239 = vrot.slane %v3238, 4
        %v3241 = vshll.u32 %v2923, 16
        %v3243 = vrot.slane %v3241, 5
        %v3244 = vsel %vm813, %v3239, %v3243
        %v3246 = vshrl.u32 %v2924, 16
        %v3248 = vrot.slane %v3246, 4
        %v3249 = vshll.u32 %v2924, 16
        %v3251 = vrot.slane %v3249, 5
        %v3252 = vor.u32 %v3248, %v3251
        %v3253 = vrot.slane %v3252, 4
        %v3255 = vshll.u32 %v2925, 16
        %v3257 = vrot.slane %v3255, 5
        %v3258 = vsel %vm813, %v3253, %v3257
        %v3259 = vshrl.u32 %v2925, 16
        %v3261 = vrot.slane %v3259, 4
        %v3262 = vor.u32 %v3261, %v3257
        %v3263 = vrot.slane %v3262, 4
        %v3265 = vshll.u32 %v2926, 16
        %v3267 = vrot.slane %v3265, 5
        %v3268 = vsel %vm813, %v3263, %v3267
        %v3270 = vshrl.u32 %v2927, 16
        %v3272 = vrot.slane %v3270, 4
        %v3273 = vshll.u32 %v2927, 16
        %v3275 = vrot.slane %v3273, 5
        %v3276 = vor.u32 %v3272, %v3275
        %v3277 = vrot.slane %v3276, 4
        %v3279 = vshll.u32 %v2928, 16
        %v3281 = vrot.slane %v3279, 5
        %v3282 = vsel %vm813, %v3277, %v3281
        %v3283 = vshrl.u32 %v2928, 16
        %v3285 = vrot.slane %v3283, 4
        %v3286 = vor.u32 %v3285, %v3281
        %v3287 = vrot.slane %v3286, 4
        %v3289 = vshll.u32 %v2929, 16
        %v3291 = vrot.slane %v3289, 5
        %v3292 = vsel %vm813, %v3287, %v3291
        %v3294 = vshrl.u32 %v2930, 16
        %v3296 = vrot.slane %v3294, 4
        %v3297 = vshll.u32 %v2930, 16
        %v3299 = vrot.slane %v3297, 5
        %v3300 = vor.u32 %v3296, %v3299
        %v3301 = vrot.slane %v3300, 4
        %v3303 = vshll.u32 %v2931, 16
        %v3305 = vrot.slane %v3303, 5
        %v3306 = vsel %vm813, %v3301, %v3305
        %v3307 = vshrl.u32 %v2931, 16
        %v3309 = vrot.slane %v3307, 4
        %v3310 = vor.u32 %v3309, %v3305
        %v3311 = vrot.slane %v3310, 4
        %v3313 = vshll.u32 %v2932, 16
        %v3315 = vrot.slane %v3313, 5
        %v3316 = vsel %vm813, %v3311, %v3315
        %3317 = vrot.lane.b32.xlu0 %v2946, 96
        %v3318 = vpop.permute.xlu0 %3317
        %3319 = vrot.lane.b32.xlu0 %v2956, 96
        %v3320 = vpop.permute.xlu0 %3319
        %3321 = vrot.lane.b32.xlu0 %v2970, 96
        %v3322 = vpop.permute.xlu0 %3321
        %3323 = vrot.lane.b32.xlu0 %v2980, 96
        %v3324 = vpop.permute.xlu0 %3323
        %3325 = vrot.lane.b32.xlu0 %v2994, 96
        %v3326 = vpop.permute.xlu0 %3325
        %3327 = vrot.lane.b32.xlu0 %v3004, 96
        %v3328 = vpop.permute.xlu0 %3327
        %3329 = vrot.lane.b32.xlu0 %v3018, 96
        %v3330 = vpop.permute.xlu0 %3329
        %3331 = vrot.lane.b32.xlu0 %v3028, 96
        %v3332 = vpop.permute.xlu0 %3331
        %3333 = vrot.lane.b32.xlu0 %v3042, 96
        %v3334 = vpop.permute.xlu0 %3333
        %3335 = vrot.lane.b32.xlu0 %v3052, 96
        %v3336 = vpop.permute.xlu0 %3335
        %3337 = vrot.lane.b32.xlu0 %v3066, 96
        %v3338 = vpop.permute.xlu0 %3337
        %3339 = vrot.lane.b32.xlu0 %v3076, 96
        %v3340 = vpop.permute.xlu0 %3339
        %3341 = vrot.lane.b32.xlu0 %v3090, 96
        %v3342 = vpop.permute.xlu0 %3341
        %3343 = vrot.lane.b32.xlu0 %v3100, 96
        %v3344 = vpop.permute.xlu0 %3343
        %3345 = vrot.lane.b32.xlu0 %v3114, 96
        %v3346 = vpop.permute.xlu0 %3345
        %3347 = vrot.lane.b32.xlu0 %v3124, 96
        %v3348 = vpop.permute.xlu0 %3347
        %3349 = vrot.lane.b32.xlu0 %v3138, 96
        %v3350 = vpop.permute.xlu0 %3349
        %3351 = vrot.lane.b32.xlu0 %v3148, 96
        %v3352 = vpop.permute.xlu0 %3351
        %3353 = vrot.lane.b32.xlu0 %v3162, 96
        %v3354 = vpop.permute.xlu0 %3353
        %3355 = vrot.lane.b32.xlu0 %v3172, 96
        %v3356 = vpop.permute.xlu0 %3355
        %3357 = vrot.lane.b32.xlu0 %v3186, 96
        %v3358 = vpop.permute.xlu0 %3357
        %3359 = vrot.lane.b32.xlu0 %v3196, 96
        %v3360 = vpop.permute.xlu0 %3359
        %3361 = vrot.lane.b32.xlu0 %v3210, 96
        %v3362 = vpop.permute.xlu0 %3361
        %3363 = vrot.lane.b32.xlu0 %v3220, 96
        %v3364 = vpop.permute.xlu0 %3363
        %3365 = vrot.lane.b32.xlu0 %v3234, 96
        %v3366 = vpop.permute.xlu0 %3365
        %3367 = vrot.lane.b32.xlu0 %v3244, 96
        %v3368 = vpop.permute.xlu0 %3367
        %3369 = vrot.lane.b32.xlu0 %v3258, 96
        %v3370 = vpop.permute.xlu0 %3369
        %3371 = vrot.lane.b32.xlu0 %v3268, 96
        %v3372 = vpop.permute.xlu0 %3371
        %3373 = vrot.lane.b32.xlu0 %v3282, 96
        %v3374 = vpop.permute.xlu0 %3373
        %3375 = vrot.lane.b32.xlu0 %v3292, 96
        %v3376 = vpop.permute.xlu0 %3375
        %3377 = vrot.lane.b32.xlu0 %v3306, 96
        %v3378 = vpop.permute.xlu0 %3377
        %3379 = vrot.lane.b32.xlu0 %v3316, 96
        %v3380 = vpop.permute.xlu0 %3379
        %3413 = vst.msk [vmem:[#allocation3 + $0x4] sm:$0xf] %vm1827, %v3318
        %3414 = vst.msk [vmem:[#allocation3 + $0x10] sm:$0xf] %vm1827, %v3320
        %3415 = vst.msk [vmem:[#allocation3 + $0x1c] sm:$0xf] %vm1827, %v3322
        %3416 = vst.msk [vmem:[#allocation3 + $0x28] sm:$0xf] %vm1827, %v3324
        %3417 = vst.msk [vmem:[#allocation3 + $0x34] sm:$0xf] %vm1827, %v3326
        %3418 = vst.msk [vmem:[#allocation3 + $0x40] sm:$0xf] %vm1827, %v3328
        %3419 = vst.msk [vmem:[#allocation3 + $0x4c] sm:$0xf] %vm1827, %v3330
        %3420 = vst.msk [vmem:[#allocation3 + $0x58] sm:$0xf] %vm1827, %v3332
        %3421 = vst.msk [vmem:[#allocation3 + $0x64] sm:$0xf] %vm1827, %v3334
        %3422 = vst.msk [vmem:[#allocation3 + $0x70] sm:$0xf] %vm1827, %v3336
        %3423 = vst.msk [vmem:[#allocation3 + $0x7c] sm:$0xf] %vm1827, %v3338
        %3424 = vst.msk [vmem:[#allocation3 + $0x88] sm:$0xf] %vm1827, %v3340
        %3425 = vst.msk [vmem:[#allocation3 + $0x94] sm:$0xf] %vm1827, %v3342
        %3426 = vst.msk [vmem:[#allocation3 + $0xa0] sm:$0xf] %vm1827, %v3344
        %3427 = vst.msk [vmem:[#allocation3 + $0xac] sm:$0xf] %vm1827, %v3346
        %3428 = vst.msk [vmem:[#allocation3 + $0xb8] sm:$0xf] %vm1827, %v3348
        %3429 = vst.msk [vmem:[#allocation3 + $0xc4] sm:$0xf] %vm1827, %v3350
        %3430 = vst.msk [vmem:[#allocation3 + $0xd0] sm:$0xf] %vm1827, %v3352
        %3431 = vst.msk [vmem:[#allocation3 + $0xdc] sm:$0xf] %vm1827, %v3354
        %3432 = vst.msk [vmem:[#allocation3 + $0xe8] sm:$0xf] %vm1827, %v3356
        %3433 = vst.msk [vmem:[#allocation3 + $0xf4] sm:$0xf] %vm1827, %v3358
        %3434 = vst.msk [vmem:[#allocation3 + $0x100] sm:$0xf] %vm1827, %v3360
        %3435 = vst.msk [vmem:[#allocation3 + $0x10c] sm:$0xf] %vm1827, %v3362
        %3436 = vst.msk [vmem:[#allocation3 + $0x118] sm:$0xf] %vm1827, %v3364
        %3437 = vst.msk [vmem:[#allocation3 + $0x124] sm:$0xf] %vm1827, %v3366
        %3438 = vst.msk [vmem:[#allocation3 + $0x130] sm:$0xf] %vm1827, %v3368
        %3439 = vst.msk [vmem:[#allocation3 + $0x13c] sm:$0xf] %vm1827, %v3370
        %3440 = vst.msk [vmem:[#allocation3 + $0x148] sm:$0xf] %vm1827, %v3372
        %3441 = vst.msk [vmem:[#allocation3 + $0x154] sm:$0xf] %vm1827, %v3374
        %3442 = vst.msk [vmem:[#allocation3 + $0x160] sm:$0xf] %vm1827, %v3376
        %3443 = vst.msk [vmem:[#allocation3 + $0x16c] sm:$0xf] %vm1827, %v3378
        %3444 = vst.msk [vmem:[#allocation3 + $0x178] sm:$0xf] %vm1827, %v3380
        %v3445 = vld [vmem:[%s2692] sm:$0xe]
        %v3446 = vld [vmem:[%s2692 + $0x4] sm:$0xf]
        %v3447 = vld [vmem:[%s2692 + $0x8] sm:$0x1]
        %v3448 = vld [vmem:[%s2692 + $0xc] sm:$0xe]
        %v3449 = vld [vmem:[%s2692 + $0x10] sm:$0xf]
        %v3450 = vld [vmem:[%s2692 + $0x14] sm:$0x1]
        %v3451 = vld [vmem:[%s2692 + $0x18] sm:$0xe]
        %v3452 = vld [vmem:[%s2692 + $0x1c] sm:$0xf]
        %v3453 = vld [vmem:[%s2692 + $0x20] sm:$0x1]
        %v3454 = vld [vmem:[%s2692 + $0x24] sm:$0xe]
        %v3455 = vld [vmem:[%s2692 + $0x28] sm:$0xf]
        %v3456 = vld [vmem:[%s2692 + $0x2c] sm:$0x1]
        %v3457 = vld [vmem:[%s2692 + $0x30] sm:$0xe]
        %v3458 = vld [vmem:[%s2692 + $0x34] sm:$0xf]
        %v3459 = vld [vmem:[%s2692 + $0x38] sm:$0x1]
        %v3460 = vld [vmem:[%s2692 + $0x3c] sm:$0xe]
        %v3461 = vld [vmem:[%s2692 + $0x40] sm:$0xf]
        %v3462 = vld [vmem:[%s2692 + $0x44] sm:$0x1]
        %v3463 = vld [vmem:[%s2692 + $0x48] sm:$0xe]
        %v3464 = vld [vmem:[%s2692 + $0x4c] sm:$0xf]
        %v3465 = vld [vmem:[%s2692 + $0x50] sm:$0x1]
        %v3466 = vld [vmem:[%s2692 + $0x54] sm:$0xe]
        %v3467 = vld [vmem:[%s2692 + $0x58] sm:$0xf]
        %v3468 = vld [vmem:[%s2692 + $0x5c] sm:$0x1]
        %v3469 = vld [vmem:[%s2692 + $0x60] sm:$0xe]
        %v3470 = vld [vmem:[%s2692 + $0x64] sm:$0xf]
        %v3471 = vld [vmem:[%s2692 + $0x68] sm:$0x1]
        %v3472 = vld [vmem:[%s2692 + $0x6c] sm:$0xe]
        %v3473 = vld [vmem:[%s2692 + $0x70] sm:$0xf]
        %v3474 = vld [vmem:[%s2692 + $0x74] sm:$0x1]
        %v3475 = vld [vmem:[%s2692 + $0x78] sm:$0xe]
        %v3476 = vld [vmem:[%s2692 + $0x7c] sm:$0xf]
        %v3477 = vld [vmem:[%s2692 + $0x80] sm:$0x1]
        %v3478 = vld [vmem:[%s2692 + $0x84] sm:$0xe]
        %v3479 = vld [vmem:[%s2692 + $0x88] sm:$0xf]
        %v3480 = vld [vmem:[%s2692 + $0x8c] sm:$0x1]
        %v3481 = vld [vmem:[%s2692 + $0x90] sm:$0xe]
        %v3482 = vld [vmem:[%s2692 + $0x94] sm:$0xf]
        %v3483 = vld [vmem:[%s2692 + $0x98] sm:$0x1]
        %v3484 = vld [vmem:[%s2692 + $0x9c] sm:$0xe]
        %v3485 = vld [vmem:[%s2692 + $0xa0] sm:$0xf]
        %v3486 = vld [vmem:[%s2692 + $0xa4] sm:$0x1]
        %v3487 = vld [vmem:[%s2692 + $0xa8] sm:$0xe]
        %v3488 = vld [vmem:[%s2692 + $0xac] sm:$0xf]
        %v3489 = vld [vmem:[%s2692 + $0xb0] sm:$0x1]
        %v3490 = vld [vmem:[%s2692 + $0xb4] sm:$0xe]
        %v3491 = vld [vmem:[%s2692 + $0xb8] sm:$0xf]
        %v3492 = vld [vmem:[%s2692 + $0xbc] sm:$0x1]
        %v3541 = vrot.slane %v3445, 5
        %v3542 = vrot.slane %v3541, 4
        %v3543 = vrot.slane %v3446, 5
        %v3544 = vsel %vm1425, %v3542, %v3543
        %v3545 = vrot.slane %v3543, 4
        %v3546 = vrot.slane %v3447, 5
        %v3547 = vsel %vm1425, %v3545, %v3546
        %v3548 = vrot.slane %v3448, 5
        %v3549 = vrot.slane %v3548, 4
        %v3550 = vrot.slane %v3449, 5
        %v3551 = vsel %vm1425, %v3549, %v3550
        %v3552 = vrot.slane %v3550, 4
        %v3553 = vrot.slane %v3450, 5
        %v3554 = vsel %vm1425, %v3552, %v3553
        %v3555 = vrot.slane %v3451, 5
        %v3556 = vrot.slane %v3555, 4
        %v3557 = vrot.slane %v3452, 5
        %v3558 = vsel %vm1425, %v3556, %v3557
        %v3559 = vrot.slane %v3557, 4
        %v3560 = vrot.slane %v3453, 5
        %v3561 = vsel %vm1425, %v3559, %v3560
        %v3562 = vrot.slane %v3454, 5
        %v3563 = vrot.slane %v3562, 4
        %v3564 = vrot.slane %v3455, 5
        %v3565 = vsel %vm1425, %v3563, %v3564
        %v3566 = vrot.slane %v3564, 4
        %v3567 = vrot.slane %v3456, 5
        %v3568 = vsel %vm1425, %v3566, %v3567
        %v3569 = vrot.slane %v3457, 5
        %v3570 = vrot.slane %v3569, 4
        %v3571 = vrot.slane %v3458, 5
        %v3572 = vsel %vm1425, %v3570, %v3571
        %v3573 = vrot.slane %v3571, 4
        %v3574 = vrot.slane %v3459, 5
        %v3575 = vsel %vm1425, %v3573, %v3574
        %v3576 = vrot.slane %v3460, 5
        %v3577 = vrot.slane %v3576, 4
        %v3578 = vrot.slane %v3461, 5
        %v3579 = vsel %vm1425, %v3577, %v3578
        %v3580 = vrot.slane %v3578, 4
        %v3581 = vrot.slane %v3462, 5
        %v3582 = vsel %vm1425, %v3580, %v3581
        %v3583 = vrot.slane %v3463, 5
        %v3584 = vrot.slane %v3583, 4
        %v3585 = vrot.slane %v3464, 5
        %v3586 = vsel %vm1425, %v3584, %v3585
        %v3587 = vrot.slane %v3585, 4
        %v3588 = vrot.slane %v3465, 5
        %v3589 = vsel %vm1425, %v3587, %v3588
        %v3590 = vrot.slane %v3466, 5
        %v3591 = vrot.slane %v3590, 4
        %v3592 = vrot.slane %v3467, 5
        %v3593 = vsel %vm1425, %v3591, %v3592
        %v3594 = vrot.slane %v3592, 4
        %v3595 = vrot.slane %v3468, 5
        %v3596 = vsel %vm1425, %v3594, %v3595
        %v3597 = vrot.slane %v3469, 5
        %v3598 = vrot.slane %v3597, 4
        %v3599 = vrot.slane %v3470, 5
        %v3600 = vsel %vm1425, %v3598, %v3599
        %v3601 = vrot.slane %v3599, 4
        %v3602 = vrot.slane %v3471, 5
        %v3603 = vsel %vm1425, %v3601, %v3602
        %v3604 = vrot.slane %v3472, 5
        %v3605 = vrot.slane %v3604, 4
        %v3606 = vrot.slane %v3473, 5
        %v3607 = vsel %vm1425, %v3605, %v3606
        %v3608 = vrot.slane %v3606, 4
        %v3609 = vrot.slane %v3474, 5
        %v3610 = vsel %vm1425, %v3608, %v3609
        %v3611 = vrot.slane %v3475, 5
        %v3612 = vrot.slane %v3611, 4
        %v3613 = vrot.slane %v3476, 5
        %v3614 = vsel %vm1425, %v3612, %v3613
        %v3615 = vrot.slane %v3613, 4
        %v3616 = vrot.slane %v3477, 5
        %v3617 = vsel %vm1425, %v3615, %v3616
        %v3618 = vrot.slane %v3478, 5
        %v3619 = vrot.slane %v3618, 4
        %v3620 = vrot.slane %v3479, 5
        %v3621 = vsel %vm1425, %v3619, %v3620
        %v3622 = vrot.slane %v3620, 4
        %v3623 = vrot.slane %v3480, 5
        %v3624 = vsel %vm1425, %v3622, %v3623
        %v3625 = vrot.slane %v3481, 5
        %v3626 = vrot.slane %v3625, 4
        %v3627 = vrot.slane %v3482, 5
        %v3628 = vsel %vm1425, %v3626, %v3627
        %v3629 = vrot.slane %v3627, 4
        %v3630 = vrot.slane %v3483, 5
        %v3631 = vsel %vm1425, %v3629, %v3630
        %v3632 = vrot.slane %v3484, 5
        %v3633 = vrot.slane %v3632, 4
        %v3634 = vrot.slane %v3485, 5
        %v3635 = vsel %vm1425, %v3633, %v3634
        %v3636 = vrot.slane %v3634, 4
        %v3637 = vrot.slane %v3486, 5
        %v3638 = vsel %vm1425, %v3636, %v3637
        %v3639 = vrot.slane %v3487, 5
        %v3640 = vrot.slane %v3639, 4
        %v3641 = vrot.slane %v3488, 5
        %v3642 = vsel %vm1425, %v3640, %v3641
        %v3643 = vrot.slane %v3641, 4
        %v3644 = vrot.slane %v3489, 5
        %v3645 = vsel %vm1425, %v3643, %v3644
        %v3646 = vrot.slane %v3490, 5
        %v3647 = vrot.slane %v3646, 4
        %v3648 = vrot.slane %v3491, 5
        %v3649 = vsel %vm1425, %v3647, %v3648
        %v3650 = vrot.slane %v3648, 4
        %v3651 = vrot.slane %v3492, 5
        %v3652 = vsel %vm1425, %v3650, %v3651
        %3685 = vst.msk [vmem:[#allocation3 + $0x8] sm:$0xf] %vm170, %v3544
        %3686 = vst.msk [vmem:[#allocation3 + $0x14] sm:$0xf] %vm170, %v3547
        %3687 = vst.msk [vmem:[#allocation3 + $0x20] sm:$0xf] %vm170, %v3551
        %3688 = vst.msk [vmem:[#allocation3 + $0x2c] sm:$0xf] %vm170, %v3554
        %3689 = vst.msk [vmem:[#allocation3 + $0x38] sm:$0xf] %vm170, %v3558
        %3690 = vst.msk [vmem:[#allocation3 + $0x44] sm:$0xf] %vm170, %v3561
        %3691 = vst.msk [vmem:[#allocation3 + $0x50] sm:$0xf] %vm170, %v3565
        %3692 = vst.msk [vmem:[#allocation3 + $0x5c] sm:$0xf] %vm170, %v3568
        %3693 = vst.msk [vmem:[#allocation3 + $0x68] sm:$0xf] %vm170, %v3572
        %3694 = vst.msk [vmem:[#allocation3 + $0x74] sm:$0xf] %vm170, %v3575
        %3695 = vst.msk [vmem:[#allocation3 + $0x80] sm:$0xf] %vm170, %v3579
        %3696 = vst.msk [vmem:[#allocation3 + $0x8c] sm:$0xf] %vm170, %v3582
        %3697 = vst.msk [vmem:[#allocation3 + $0x98] sm:$0xf] %vm170, %v3586
        %3698 = vst.msk [vmem:[#allocation3 + $0xa4] sm:$0xf] %vm170, %v3589
        %3699 = vst.msk [vmem:[#allocation3 + $0xb0] sm:$0xf] %vm170, %v3593
        %3700 = vst.msk [vmem:[#allocation3 + $0xbc] sm:$0xf] %vm170, %v3596
        %3701 = vst.msk [vmem:[#allocation3 + $0xc8] sm:$0xf] %vm170, %v3600
        %3702 = vst.msk [vmem:[#allocation3 + $0xd4] sm:$0xf] %vm170, %v3603
        %3703 = vst.msk [vmem:[#allocation3 + $0xe0] sm:$0xf] %vm170, %v3607
        %3704 = vst.msk [vmem:[#allocation3 + $0xec] sm:$0xf] %vm170, %v3610
        %3705 = vst.msk [vmem:[#allocation3 + $0xf8] sm:$0xf] %vm170, %v3614
        %3706 = vst.msk [vmem:[#allocation3 + $0x104] sm:$0xf] %vm170, %v3617
        %3707 = vst.msk [vmem:[#allocation3 + $0x110] sm:$0xf] %vm170, %v3621
        %3708 = vst.msk [vmem:[#allocation3 + $0x11c] sm:$0xf] %vm170, %v3624
        %3709 = vst.msk [vmem:[#allocation3 + $0x128] sm:$0xf] %vm170, %v3628
        %3710 = vst.msk [vmem:[#allocation3 + $0x134] sm:$0xf] %vm170, %v3631
        %3711 = vst.msk [vmem:[#allocation3 + $0x140] sm:$0xf] %vm170, %v3635
        %3712 = vst.msk [vmem:[#allocation3 + $0x14c] sm:$0xf] %vm170, %v3638
        %3713 = vst.msk [vmem:[#allocation3 + $0x158] sm:$0xf] %vm170, %v3642
        %3714 = vst.msk [vmem:[#allocation3 + $0x164] sm:$0xf] %vm170, %v3645
        %3715 = vst.msk [vmem:[#allocation3 + $0x170] sm:$0xf] %vm170, %v3649
        %3716 = vst.msk [vmem:[#allocation3 + $0x17c] sm:$0xf] %vm170, %v3652
        %v3717 = vld [vmem:[#allocation3] sm:$0xff]
        %v3718 = vld [vmem:[#allocation3 + $0x8] sm:$0xf]
        %v3719 = vld [vmem:[#allocation3 + $0xc] sm:$0xff]
        %v3720 = vld [vmem:[#allocation3 + $0x14] sm:$0xf]
        %v3721 = vld [vmem:[#allocation3 + $0x18] sm:$0xff]
        %v3722 = vld [vmem:[#allocation3 + $0x20] sm:$0xf]
        %v3723 = vld [vmem:[#allocation3 + $0x24] sm:$0xff]
        %v3724 = vld [vmem:[#allocation3 + $0x2c] sm:$0xf]
        %v3725 = vld [vmem:[#allocation3 + $0x30] sm:$0xff]
        %v3726 = vld [vmem:[#allocation3 + $0x38] sm:$0xf]
        %v3727 = vld [vmem:[#allocation3 + $0x3c] sm:$0xff]
        %v3728 = vld [vmem:[#allocation3 + $0x44] sm:$0xf]
        %v3729 = vld [vmem:[#allocation3 + $0x48] sm:$0xff]
        %v3730 = vld [vmem:[#allocation3 + $0x50] sm:$0xf]
        %v3731 = vld [vmem:[#allocation3 + $0x54] sm:$0xff]
        %v3732 = vld [vmem:[#allocation3 + $0x5c] sm:$0xf]
        %v3733 = vld [vmem:[#allocation3 + $0x60] sm:$0xff]
        %v3734 = vld [vmem:[#allocation3 + $0x68] sm:$0xf]
        %v3735 = vld [vmem:[#allocation3 + $0x6c] sm:$0xff]
        %v3736 = vld [vmem:[#allocation3 + $0x74] sm:$0xf]
        %v3737 = vld [vmem:[#allocation3 + $0x78] sm:$0xff]
        %v3738 = vld [vmem:[#allocation3 + $0x80] sm:$0xf]
        %v3739 = vld [vmem:[#allocation3 + $0x84] sm:$0xff]
        %v3740 = vld [vmem:[#allocation3 + $0x8c] sm:$0xf]
        %v3741 = vld [vmem:[#allocation3 + $0x90] sm:$0xff]
        %v3742 = vld [vmem:[#allocation3 + $0x98] sm:$0xf]
        %v3743 = vld [vmem:[#allocation3 + $0x9c] sm:$0xff]
        %v3744 = vld [vmem:[#allocation3 + $0xa4] sm:$0xf]
        %v3745 = vld [vmem:[#allocation3 + $0xa8] sm:$0xff]
        %v3746 = vld [vmem:[#allocation3 + $0xb0] sm:$0xf]
        %v3747 = vld [vmem:[#allocation3 + $0xb4] sm:$0xff]
        %v3748 = vld [vmem:[#allocation3 + $0xbc] sm:$0xf]
        %v3749 = vld [vmem:[#allocation3 + $0xc0] sm:$0xff]
        %v3750 = vld [vmem:[#allocation3 + $0xc8] sm:$0xf]
        %v3751 = vld [vmem:[#allocation3 + $0xcc] sm:$0xff]
        %v3752 = vld [vmem:[#allocation3 + $0xd4] sm:$0xf]
        %v3753 = vld [vmem:[#allocation3 + $0xd8] sm:$0xff]
        %v3754 = vld [vmem:[#allocation3 + $0xe0] sm:$0xf]
        %v3755 = vld [vmem:[#allocation3 + $0xe4] sm:$0xff]
        %v3756 = vld [vmem:[#allocation3 + $0xec] sm:$0xf]
        %v3757 = vld [vmem:[#allocation3 + $0xf0] sm:$0xff]
        %v3758 = vld [vmem:[#allocation3 + $0xf8] sm:$0xf]
        %v3759 = vld [vmem:[#allocation3 + $0xfc] sm:$0xff]
        %v3760 = vld [vmem:[#allocation3 + $0x104] sm:$0xf]
        %v3761 = vld [vmem:[#allocation3 + $0x108] sm:$0xff]
        %v3762 = vld [vmem:[#allocation3 + $0x110] sm:$0xf]
        %v3763 = vld [vmem:[#allocation3 + $0x114] sm:$0xff]
        %v3764 = vld [vmem:[#allocation3 + $0x11c] sm:$0xf]
        %v3765 = vld [vmem:[#allocation3 + $0x120] sm:$0xff]
        %v3766 = vld [vmem:[#allocation3 + $0x128] sm:$0xf]
        %v3767 = vld [vmem:[#allocation3 + $0x12c] sm:$0xff]
        %v3768 = vld [vmem:[#allocation3 + $0x134] sm:$0xf]
        %v3769 = vld [vmem:[#allocation3 + $0x138] sm:$0xff]
        %v3770 = vld [vmem:[#allocation3 + $0x140] sm:$0xf]
        %v3771 = vld [vmem:[#allocation3 + $0x144] sm:$0xff]
        %v3772 = vld [vmem:[#allocation3 + $0x14c] sm:$0xf]
        %v3773 = vld [vmem:[#allocation3 + $0x150] sm:$0xff]
        %v3774 = vld [vmem:[#allocation3 + $0x158] sm:$0xf]
        %v3775 = vld [vmem:[#allocation3 + $0x15c] sm:$0xff]
        %v3776 = vld [vmem:[#allocation3 + $0x164] sm:$0xf]
        %v3777 = vld [vmem:[#allocation3 + $0x168] sm:$0xff]
        %v3778 = vld [vmem:[#allocation3 + $0x170] sm:$0xf]
        %v3779 = vld [vmem:[#allocation3 + $0x174] sm:$0xff]
        %v3780 = vld [vmem:[#allocation3 + $0x17c] sm:$0xf]
        %v3781 = vld [vmem:[%s1] sm:$0xf]
        %v3782 = vld [vmem:[%s1 + $0x4] sm:$0xf]
        %v3783 = vld [vmem:[%s1 + $0x8] sm:$0xf]
        %v3784 = vld [vmem:[%s1 + $0xc] sm:$0xf]
        %v3785 = vld [vmem:[%s1 + $0x10] sm:$0xf]
        %v3786 = vld [vmem:[%s1 + $0x14] sm:$0xf]
        %v3787 = vld [vmem:[%s1 + $0x18] sm:$0xf]
        %v3788 = vld [vmem:[%s1 + $0x1c] sm:$0xf]
        %v3789 = vld [vmem:[%s1 + $0x20] sm:$0xf]
        %v3790 = vld [vmem:[%s1 + $0x24] sm:$0xf]
        %v3791 = vld [vmem:[%s1 + $0x28] sm:$0xf]
        %v3792 = vld [vmem:[%s1 + $0x2c] sm:$0xf]
        %v3793 = vld [vmem:[%s1 + $0x30] sm:$0xf]
        %v3794 = vld [vmem:[%s1 + $0x34] sm:$0xf]
        %v3795 = vld [vmem:[%s1 + $0x38] sm:$0xf]
        %v3796 = vld [vmem:[%s1 + $0x3c] sm:$0xf]
        %v3797 = vld [vmem:[%s1 + $0x40] sm:$0xf]
        %v3798 = vld [vmem:[%s1 + $0x44] sm:$0xf]
        %v3799 = vld [vmem:[%s1 + $0x48] sm:$0xf]
        %v3800 = vld [vmem:[%s1 + $0x4c] sm:$0xf]
        %v3801 = vld [vmem:[%s1 + $0x50] sm:$0xf]
        %v3802 = vld [vmem:[%s1 + $0x54] sm:$0xf]
        %v3803 = vld [vmem:[%s1 + $0x58] sm:$0xf]
        %v3804 = vld [vmem:[%s1 + $0x5c] sm:$0xf]
        %v3805 = vld [vmem:[%s1 + $0x60] sm:$0xf]
        %v3806 = vld [vmem:[%s1 + $0x64] sm:$0xf]
        %v3807 = vld [vmem:[%s1 + $0x68] sm:$0xf]
        %v3808 = vld [vmem:[%s1 + $0x6c] sm:$0xf]
        %v3809 = vld [vmem:[%s1 + $0x70] sm:$0xf]
        %v3810 = vld [vmem:[%s1 + $0x74] sm:$0xf]
        %v3811 = vld [vmem:[%s1 + $0x78] sm:$0xf]
        %v3812 = vld [vmem:[%s1 + $0x7c] sm:$0xf]
        %v3813 = vld [vmem:[%s1 + $0x80] sm:$0xf]
        %v3814 = vld [vmem:[%s1 + $0x84] sm:$0xf]
        %v3815 = vld [vmem:[%s1 + $0x88] sm:$0xf]
        %v3816 = vld [vmem:[%s1 + $0x8c] sm:$0xf]
        %v3817 = vld [vmem:[%s2] sm:$0x1]
        %v3819 = vperm.slane %v3817, 0
        %v3885 = vunpack.c.l.b16 %v3717
        %v3886 = vunpack.c.h.b16 %v3717
        %v3887 = vunpack.c.l.b16 %v3718
        %v3888 = vunpack.c.l.b16 %v3719
        %v3889 = vunpack.c.h.b16 %v3719
        %v3890 = vunpack.c.l.b16 %v3720
        %v3891 = vunpack.c.l.b16 %v3721
        %v3892 = vunpack.c.h.b16 %v3721
        %v3893 = vunpack.c.l.b16 %v3722
        %v3894 = vunpack.c.l.b16 %v3723
        %v3895 = vunpack.c.h.b16 %v3723
        %v3896 = vunpack.c.l.b16 %v3724
        %v3897 = vunpack.c.l.b16 %v3725
        %v3898 = vunpack.c.h.b16 %v3725
        %v3899 = vunpack.c.l.b16 %v3726
        %v3900 = vunpack.c.l.b16 %v3727
        %v3901 = vunpack.c.h.b16 %v3727
        %v3902 = vunpack.c.l.b16 %v3728
        %v3903 = vunpack.c.l.b16 %v3729
        %v3904 = vunpack.c.h.b16 %v3729
        %v3905 = vunpack.c.l.b16 %v3730
        %v3906 = vunpack.c.l.b16 %v3731
        %v3907 = vunpack.c.h.b16 %v3731
        %v3908 = vunpack.c.l.b16 %v3732
        %v3909 = vunpack.c.l.b16 %v3733
        %v3910 = vunpack.c.h.b16 %v3733
        %v3911 = vunpack.c.l.b16 %v3734
        %v3912 = vunpack.c.l.b16 %v3735
        %v3913 = vunpack.c.h.b16 %v3735
        %v3914 = vunpack.c.l.b16 %v3736
        %v3915 = vunpack.c.l.b16 %v3737
        %v3916 = vunpack.c.h.b16 %v3737
        %v3917 = vunpack.c.l.b16 %v3738
        %v3918 = vunpack.c.l.b16 %v3739
        %v3919 = vunpack.c.h.b16 %v3739
        %v3920 = vunpack.c.l.b16 %v3740
        %v3921 = vunpack.c.l.b16 %v3741
        %v3922 = vunpack.c.h.b16 %v3741
        %v3923 = vunpack.c.l.b16 %v3742
        %v3924 = vunpack.c.l.b16 %v3743
        %v3925 = vunpack.c.h.b16 %v3743
        %v3926 = vunpack.c.l.b16 %v3744
        %v3927 = vunpack.c.l.b16 %v3745
        %v3928 = vunpack.c.h.b16 %v3745
        %v3929 = vunpack.c.l.b16 %v3746
        %v3930 = vunpack.c.l.b16 %v3747
        %v3931 = vunpack.c.h.b16 %v3747
        %v3932 = vunpack.c.l.b16 %v3748
        %v3933 = vunpack.c.l.b16 %v3749
        %v3934 = vunpack.c.h.b16 %v3749
        %v3935 = vunpack.c.l.b16 %v3750
        %v3936 = vunpack.c.l.b16 %v3751
        %v3937 = vunpack.c.h.b16 %v3751
        %v3938 = vunpack.c.l.b16 %v3752
        %v3939 = vunpack.c.l.b16 %v3753
        %v3940 = vunpack.c.h.b16 %v3753
        %v3941 = vunpack.c.l.b16 %v3754
        %v3942 = vunpack.c.l.b16 %v3755
        %v3943 = vunpack.c.h.b16 %v3755
        %v3944 = vunpack.c.l.b16 %v3756
        %v3945 = vunpack.c.l.b16 %v3757
        %v3946 = vunpack.c.h.b16 %v3757
        %v3947 = vunpack.c.l.b16 %v3758
        %v3948 = vunpack.c.l.b16 %v3759
        %v3949 = vunpack.c.h.b16 %v3759
        %v3950 = vunpack.c.l.b16 %v3760
        %v3951 = vunpack.c.l.b16 %v3761
        %v3952 = vunpack.c.h.b16 %v3761
        %v3953 = vunpack.c.l.b16 %v3762
        %v3954 = vunpack.c.l.b16 %v3763
        %v3955 = vunpack.c.h.b16 %v3763
        %v3956 = vunpack.c.l.b16 %v3764
        %v3957 = vunpack.c.l.b16 %v3765
        %v3958 = vunpack.c.h.b16 %v3765
        %v3959 = vunpack.c.l.b16 %v3766
        %v3960 = vunpack.c.l.b16 %v3767
        %v3961 = vunpack.c.h.b16 %v3767
        %v3962 = vunpack.c.l.b16 %v3768
        %v3963 = vunpack.c.l.b16 %v3769
        %v3964 = vunpack.c.h.b16 %v3769
        %v3965 = vunpack.c.l.b16 %v3770
        %v3966 = vunpack.c.l.b16 %v3771
        %v3967 = vunpack.c.h.b16 %v3771
        %v3968 = vunpack.c.l.b16 %v3772
        %v3969 = vunpack.c.l.b16 %v3773
        %v3970 = vunpack.c.h.b16 %v3773
        %v3971 = vunpack.c.l.b16 %v3774
        %v3972 = vunpack.c.l.b16 %v3775
        %v3973 = vunpack.c.h.b16 %v3775
        %v3974 = vunpack.c.l.b16 %v3776
        %v3975 = vunpack.c.l.b16 %v3777
        %v3976 = vunpack.c.h.b16 %v3777
        %v3977 = vunpack.c.l.b16 %v3778
        %v3978 = vunpack.c.l.b16 %v3779
        %v3979 = vunpack.c.h.b16 %v3779
        %v3980 = vunpack.c.l.b16 %v3780
        %v3981 = vpack.c.b16 %v3888, %v3885
        %v3982 = vpack.c.b16 %v3889, %v3886
        %v3983 = vpack.c.b16 %v3890, %v3887
        %v3984 = vpack.c.b16 %v3894, %v3891
        %v3985 = vpack.c.b16 %v3895, %v3892
        %v3986 = vpack.c.b16 %v3896, %v3893
        %v3987 = vpack.c.b16 %v3900, %v3897
        %v3988 = vpack.c.b16 %v3901, %v3898
        %v3989 = vpack.c.b16 %v3902, %v3899
        %v3990 = vpack.c.b16 %v3906, %v3903
        %v3991 = vpack.c.b16 %v3907, %v3904
        %v3992 = vpack.c.b16 %v3908, %v3905
        %v3993 = vpack.c.b16 %v3912, %v3909
        %v3994 = vpack.c.b16 %v3913, %v3910
        %v3995 = vpack.c.b16 %v3914, %v3911
        %v3996 = vpack.c.b16 %v3918, %v3915
        %v3997 = vpack.c.b16 %v3919, %v3916
        %v3998 = vpack.c.b16 %v3920, %v3917
        %v3999 = vpack.c.b16 %v3924, %v3921
        %v4000 = vpack.c.b16 %v3925, %v3922
        %v4001 = vpack.c.b16 %v3926, %v3923
        %v4002 = vpack.c.b16 %v3930, %v3927
        %v4003 = vpack.c.b16 %v3931, %v3928
        %v4004 = vpack.c.b16 %v3932, %v3929
        %v4005 = vpack.c.b16 %v3936, %v3933
        %v4006 = vpack.c.b16 %v3937, %v3934
        %v4007 = vpack.c.b16 %v3938, %v3935
        %v4008 = vpack.c.b16 %v3942, %v3939
        %v4009 = vpack.c.b16 %v3943, %v3940
        %v4010 = vpack.c.b16 %v3944, %v3941
        %v4011 = vpack.c.b16 %v3948, %v3945
        %v4012 = vpack.c.b16 %v3949, %v3946
        %v4013 = vpack.c.b16 %v3950, %v3947
        %v4014 = vpack.c.b16 %v3954, %v3951
        %v4015 = vpack.c.b16 %v3955, %v3952
        %v4016 = vpack.c.b16 %v3956, %v3953
        %v4017 = vpack.c.b16 %v3960, %v3957
        %v4018 = vpack.c.b16 %v3961, %v3958
        %v4019 = vpack.c.b16 %v3962, %v3959
        %v4020 = vpack.c.b16 %v3966, %v3963
        %v4021 = vpack.c.b16 %v3967, %v3964
        %v4022 = vpack.c.b16 %v3968, %v3965
        %v4023 = vpack.c.b16 %v3972, %v3969
        %v4024 = vpack.c.b16 %v3973, %v3970
        %v4025 = vpack.c.b16 %v3974, %v3971
        %v4026 = vpack.c.b16 %v3978, %v3975
        %v4027 = vpack.c.b16 %v3979, %v3976
        %v4028 = vpack.c.b16 %v3980, %v3977
        %v4097 = vunpack.c.l.b16 %v3781
        %v4098 = vunpack.c.l.b16 %v3782
        %v4099 = vunpack.c.l.b16 %v3783
        %v4100 = vunpack.c.l.b16 %v3784
        %v4101 = vunpack.c.l.b16 %v3785
        %v4102 = vunpack.c.l.b16 %v3786
        %v4103 = vunpack.c.l.b16 %v3787
        %v4104 = vunpack.c.l.b16 %v3788
        %v4105 = vunpack.c.l.b16 %v3789
        %v4106 = vunpack.c.l.b16 %v3790
        %v4107 = vunpack.c.l.b16 %v3791
        %v4108 = vunpack.c.l.b16 %v3792
        %v4109 = vunpack.c.l.b16 %v3793
        %v4110 = vunpack.c.l.b16 %v3794
        %v4111 = vunpack.c.l.b16 %v3795
        %v4112 = vunpack.c.l.b16 %v3796
        %v4113 = vunpack.c.l.b16 %v3797
        %v4114 = vunpack.c.l.b16 %v3798
        %v4115 = vunpack.c.l.b16 %v3799
        %v4116 = vunpack.c.l.b16 %v3800
        %v4117 = vunpack.c.l.b16 %v3801
        %v4118 = vunpack.c.l.b16 %v3802
        %v4119 = vunpack.c.l.b16 %v3803
        %v4120 = vunpack.c.l.b16 %v3804
        %v4121 = vunpack.c.l.b16 %v3805
        %v4122 = vunpack.c.l.b16 %v3806
        %v4123 = vunpack.c.l.b16 %v3807
        %v4124 = vunpack.c.l.b16 %v3808
        %v4125 = vunpack.c.l.b16 %v3809
        %v4126 = vunpack.c.l.b16 %v3810
        %v4127 = vunpack.c.l.b16 %v3811
        %v4128 = vunpack.c.l.b16 %v3812
        %v4129 = vunpack.c.l.b16 %v3813
        %v4130 = vunpack.c.l.b16 %v3814
        %v4131 = vunpack.c.l.b16 %v3815
        %v4132 = vunpack.c.l.b16 %v3816
        %v4133 = vpack.c.b16 %v4098, %v4097
        %v4134 = vpack.c.b16 %v4100, %v4099
        %v4135 = vpack.c.b16 %v4102, %v4101
        %v4136 = vpack.c.b16 %v4104, %v4103
        %v4137 = vpack.c.b16 %v4106, %v4105
        %v4138 = vpack.c.b16 %v4108, %v4107
        %v4139 = vpack.c.b16 %v4110, %v4109
        %v4140 = vpack.c.b16 %v4112, %v4111
        %v4141 = vpack.c.b16 %v4114, %v4113
        %v4142 = vpack.c.b16 %v4116, %v4115
        %v4143 = vpack.c.b16 %v4118, %v4117
        %v4144 = vpack.c.b16 %v4120, %v4119
        %v4145 = vpack.c.b16 %v4122, %v4121
        %v4146 = vpack.c.b16 %v4124, %v4123
        %v4147 = vpack.c.b16 %v4126, %v4125
        %v4148 = vpack.c.b16 %v4128, %v4127
        %v4149 = vpack.c.b16 %v4130, %v4129
        %v4150 = vpack.c.b16 %v4132, %v4131
        %vm4169 = vcmask 261120
        %v4171 = vsel %vm4169, %v3983, 0
        %v4174 = vsel %vm4169, %v3986, 0
        %v4177 = vsel %vm4169, %v3989, 0
        %v4180 = vsel %vm4169, %v3992, 0
        %v4183 = vsel %vm4169, %v3995, 0
        %v4186 = vsel %vm4169, %v3998, 0
        %v4189 = vsel %vm4169, %v4001, 0
        %v4192 = vsel %vm4169, %v4004, 0
        %v4195 = vsel %vm4169, %v4007, 0
        %v4198 = vsel %vm4169, %v4010, 0
        %v4201 = vsel %vm4169, %v4013, 0
        %v4204 = vsel %vm4169, %v4016, 0
        %v4207 = vsel %vm4169, %v4019, 0
        %v4210 = vsel %vm4169, %v4022, 0
        %v4213 = vsel %vm4169, %v4025, 0
        %v4216 = vsel %vm4169, %v4028, 0
        %4218 = vmatpush.bf16.msra.mxu0 %v4140
        %4219 = vmatpush.bf16.msra.mxu0 %v4139
        %4220 = vmatpush.bf16.msra.mxu0 %v4138
        %4221 = vmatpush.bf16.msra.mxu0 %v4137
        %4222 = vmatpush.bf16.msra.mxu0 %v4136
        %4223 = vmatpush.bf16.msra.mxu0 %v4135
        %4224 = vmatpush.bf16.msra.mxu0 %v4134
        %4225 = vmatpush.bf16.msra.mxu0 %v4133
        %4226 = vmatmul.bf16.gmra.mxu0 %v3981
        %v4227 = vpop.f32.mrf.mxu0
        %v4228 = vadd.f32 %v3819, %v4227
        %v4229 = vpop.f32.mrf.mxu0
        %v4230 = vadd.f32 %v3819, %v4229
        %4231 = vmatmul.bf16.gmra.mxu0 %v3984
        %v4232 = vpop.f32.mrf.mxu0
        %v4233 = vadd.f32 %v3819, %v4232
        %v4234 = vpop.f32.mrf.mxu0
        %v4235 = vadd.f32 %v3819, %v4234
        %4236 = vmatmul.bf16.gmra.mxu0 %v3987
        %v4237 = vpop.f32.mrf.mxu0
        %v4238 = vadd.f32 %v3819, %v4237
        %v4239 = vpop.f32.mrf.mxu0
        %v4240 = vadd.f32 %v3819, %v4239
        %4241 = vmatmul.bf16.gmra.mxu0 %v3990
        %v4242 = vpop.f32.mrf.mxu0
        %v4243 = vadd.f32 %v3819, %v4242
        %v4244 = vpop.f32.mrf.mxu0
        %v4245 = vadd.f32 %v3819, %v4244
        %4246 = vmatmul.bf16.gmra.mxu0 %v3993
        %v4247 = vpop.f32.mrf.mxu0
        %v4248 = vadd.f32 %v3819, %v4247
        %v4249 = vpop.f32.mrf.mxu0
        %v4250 = vadd.f32 %v3819, %v4249
        %4251 = vmatmul.bf16.gmra.mxu0 %v3996
        %v4252 = vpop.f32.mrf.mxu0
        %v4253 = vadd.f32 %v3819, %v4252
        %v4254 = vpop.f32.mrf.mxu0
        %v4255 = vadd.f32 %v3819, %v4254
        %4256 = vmatmul.bf16.gmra.mxu0 %v3999
        %v4257 = vpop.f32.mrf.mxu0
        %v4258 = vadd.f32 %v3819, %v4257
        %v4259 = vpop.f32.mrf.mxu0
        %v4260 = vadd.f32 %v3819, %v4259
        %4261 = vmatmul.bf16.gmra.mxu0 %v4002
        %v4262 = vpop.f32.mrf.mxu0
        %v4263 = vadd.f32 %v3819, %v4262
        %v4264 = vpop.f32.mrf.mxu0
        %v4265 = vadd.f32 %v3819, %v4264
        %4266 = vmatmul.bf16.gmra.mxu0 %v4005
        %v4267 = vpop.f32.mrf.mxu0
        %v4268 = vadd.f32 %v3819, %v4267
        %v4269 = vpop.f32.mrf.mxu0
        %v4270 = vadd.f32 %v3819, %v4269
        %4271 = vmatmul.bf16.gmra.mxu0 %v4008
        %v4272 = vpop.f32.mrf.mxu0
        %v4273 = vadd.f32 %v3819, %v4272
        %v4274 = vpop.f32.mrf.mxu0
        %v4275 = vadd.f32 %v3819, %v4274
        %4276 = vmatmul.bf16.gmra.mxu0 %v4011
        %v4277 = vpop.f32.mrf.mxu0
        %v4278 = vadd.f32 %v3819, %v4277
        %v4279 = vpop.f32.mrf.mxu0
        %v4280 = vadd.f32 %v3819, %v4279
        %4281 = vmatmul.bf16.gmra.mxu0 %v4014
        %v4282 = vpop.f32.mrf.mxu0
        %v4283 = vadd.f32 %v3819, %v4282
        %v4284 = vpop.f32.mrf.mxu0
        %v4285 = vadd.f32 %v3819, %v4284
        %4286 = vmatmul.bf16.gmra.mxu0 %v4017
        %v4287 = vpop.f32.mrf.mxu0
        %v4288 = vadd.f32 %v3819, %v4287
        %v4289 = vpop.f32.mrf.mxu0
        %v4290 = vadd.f32 %v3819, %v4289
        %4291 = vmatmul.bf16.gmra.mxu0 %v4020
        %v4292 = vpop.f32.mrf.mxu0
        %v4293 = vadd.f32 %v3819, %v4292
        %v4294 = vpop.f32.mrf.mxu0
        %v4295 = vadd.f32 %v3819, %v4294
        %4296 = vmatmul.bf16.gmra.mxu0 %v4023
        %v4297 = vpop.f32.mrf.mxu0
        %v4298 = vadd.f32 %v3819, %v4297
        %v4299 = vpop.f32.mrf.mxu0
        %v4300 = vadd.f32 %v3819, %v4299
        %4301 = vmatmul.bf16.gmra.mxu0 %v4026
        %v4302 = vpop.f32.mrf.mxu0
        %v4303 = vadd.f32 %v3819, %v4302
        %v4304 = vpop.f32.mrf.mxu0
        %v4305 = vadd.f32 %v3819, %v4304
        %4306 = vdwg.mxu0
        %4307 = vmatpush.bf16.msra.mxu0 %v4148
        %4308 = vmatpush.bf16.msra.mxu0 %v4147
        %4309 = vmatpush.bf16.msra.mxu0 %v4146
        %4310 = vmatpush.bf16.msra.mxu0 %v4145
        %4311 = vmatpush.bf16.msra.mxu0 %v4144
        %4312 = vmatpush.bf16.msra.mxu0 %v4143
        %4313 = vmatpush.bf16.msra.mxu0 %v4142
        %4314 = vmatpush.bf16.msra.mxu0 %v4141
        %4315 = vmatmul.bf16.gmra.mxu0 %v3982
        %v4316 = vpop.f32.mrf.mxu0
        %v4317 = vadd.f32 %v4228, %v4316
        %v4318 = vpop.f32.mrf.mxu0
        %v4319 = vadd.f32 %v4230, %v4318
        %4320 = vmatmul.bf16.gmra.mxu0 %v3985
        %v4321 = vpop.f32.mrf.mxu0
        %v4322 = vadd.f32 %v4233, %v4321
        %v4323 = vpop.f32.mrf.mxu0
        %v4324 = vadd.f32 %v4235, %v4323
        %4325 = vmatmul.bf16.gmra.mxu0 %v3988
        %v4326 = vpop.f32.mrf.mxu0
        %v4327 = vadd.f32 %v4238, %v4326
        %v4328 = vpop.f32.mrf.mxu0
        %v4329 = vadd.f32 %v4240, %v4328
        %4330 = vmatmul.bf16.gmra.mxu0 %v3991
        %v4331 = vpop.f32.mrf.mxu0
        %v4332 = vadd.f32 %v4243, %v4331
        %v4333 = vpop.f32.mrf.mxu0
        %v4334 = vadd.f32 %v4245, %v4333
        %4335 = vmatmul.bf16.gmra.mxu0 %v3994
        %v4336 = vpop.f32.mrf.mxu0
        %v4337 = vadd.f32 %v4248, %v4336
        %v4338 = vpop.f32.mrf.mxu0
        %v4339 = vadd.f32 %v4250, %v4338
        %4340 = vmatmul.bf16.gmra.mxu0 %v3997
        %v4341 = vpop.f32.mrf.mxu0
        %v4342 = vadd.f32 %v4253, %v4341
        %v4343 = vpop.f32.mrf.mxu0
        %v4344 = vadd.f32 %v4255, %v4343
        %4345 = vmatmul.bf16.gmra.mxu0 %v4000
        %v4346 = vpop.f32.mrf.mxu0
        %v4347 = vadd.f32 %v4258, %v4346
        %v4348 = vpop.f32.mrf.mxu0
        %v4349 = vadd.f32 %v4260, %v4348
        %4350 = vmatmul.bf16.gmra.mxu0 %v4003
        %v4351 = vpop.f32.mrf.mxu0
        %v4352 = vadd.f32 %v4263, %v4351
        %v4353 = vpop.f32.mrf.mxu0
        %v4354 = vadd.f32 %v4265, %v4353
        %4355 = vmatmul.bf16.gmra.mxu0 %v4006
        %v4356 = vpop.f32.mrf.mxu0
        %v4357 = vadd.f32 %v4268, %v4356
        %v4358 = vpop.f32.mrf.mxu0
        %v4359 = vadd.f32 %v4270, %v4358
        %4360 = vmatmul.bf16.gmra.mxu0 %v4009
        %v4361 = vpop.f32.mrf.mxu0
        %v4362 = vadd.f32 %v4273, %v4361
        %v4363 = vpop.f32.mrf.mxu0
        %v4364 = vadd.f32 %v4275, %v4363
        %4365 = vmatmul.bf16.gmra.mxu0 %v4012
        %v4366 = vpop.f32.mrf.mxu0
        %v4367 = vadd.f32 %v4278, %v4366
        %v4368 = vpop.f32.mrf.mxu0
        %v4369 = vadd.f32 %v4280, %v4368
        %4370 = vmatmul.bf16.gmra.mxu0 %v4015
        %v4371 = vpop.f32.mrf.mxu0
        %v4372 = vadd.f32 %v4283, %v4371
        %v4373 = vpop.f32.mrf.mxu0
        %v4374 = vadd.f32 %v4285, %v4373
        %4375 = vmatmul.bf16.gmra.mxu0 %v4018
        %v4376 = vpop.f32.mrf.mxu0
        %v4377 = vadd.f32 %v4288, %v4376
        %v4378 = vpop.f32.mrf.mxu0
        %v4379 = vadd.f32 %v4290, %v4378
        %4380 = vmatmul.bf16.gmra.mxu0 %v4021
        %v4381 = vpop.f32.mrf.mxu0
        %v4382 = vadd.f32 %v4293, %v4381
        %v4383 = vpop.f32.mrf.mxu0
        %v4384 = vadd.f32 %v4295, %v4383
        %4385 = vmatmul.bf16.gmra.mxu0 %v4024
        %v4386 = vpop.f32.mrf.mxu0
        %v4387 = vadd.f32 %v4298, %v4386
        %v4388 = vpop.f32.mrf.mxu0
        %v4389 = vadd.f32 %v4300, %v4388
        %4390 = vmatmul.bf16.gmra.mxu0 %v4027
        %v4391 = vpop.f32.mrf.mxu0
        %v4392 = vadd.f32 %v4303, %v4391
        %v4393 = vpop.f32.mrf.mxu0
        %v4394 = vadd.f32 %v4305, %v4393
        %4395 = vdwg.mxu0
        %4396 = vmatpush.bf16.msra.mxu0 0
        %4397 = vmatpush.bf16.msra.mxu0 0
        %4398 = vmatpush.bf16.msra.mxu0 0
        %4399 = vmatpush.bf16.msra.mxu0 0
        %4400 = vmatpush.bf16.msra.mxu0 0
        %4401 = vmatpush.bf16.msra.mxu0 0
        %4402 = vmatpush.bf16.msra.mxu0 %v4150
        %4403 = vmatpush.bf16.msra.mxu0 %v4149
        %4404 = vmatmul.bf16.gmra.mxu0 %v4171
        %v4405 = vpop.f32.mrf.mxu0
        %v4406 = vadd.f32 %v4317, %v4405
        %v4407 = vpop.f32.mrf.mxu0
        %v4408 = vadd.f32 %v4319, %v4407
        %4409 = vmatmul.bf16.gmra.mxu0 %v4174
        %v4410 = vpop.f32.mrf.mxu0
        %v4411 = vadd.f32 %v4322, %v4410
        %v4412 = vpop.f32.mrf.mxu0
        %v4413 = vadd.f32 %v4324, %v4412
        %4414 = vmatmul.bf16.gmra.mxu0 %v4177
        %v4415 = vpop.f32.mrf.mxu0
        %v4416 = vadd.f32 %v4327, %v4415
        %v4417 = vpop.f32.mrf.mxu0
        %v4418 = vadd.f32 %v4329, %v4417
        %4419 = vmatmul.bf16.gmra.mxu0 %v4180
        %v4420 = vpop.f32.mrf.mxu0
        %v4421 = vadd.f32 %v4332, %v4420
        %v4422 = vpop.f32.mrf.mxu0
        %v4423 = vadd.f32 %v4334, %v4422
        %4424 = vmatmul.bf16.gmra.mxu0 %v4183
        %v4425 = vpop.f32.mrf.mxu0
        %v4426 = vadd.f32 %v4337, %v4425
        %v4427 = vpop.f32.mrf.mxu0
        %v4428 = vadd.f32 %v4339, %v4427
        %4429 = vmatmul.bf16.gmra.mxu0 %v4186
        %v4430 = vpop.f32.mrf.mxu0
        %v4431 = vadd.f32 %v4342, %v4430
        %v4432 = vpop.f32.mrf.mxu0
        %v4433 = vadd.f32 %v4344, %v4432
        %4434 = vmatmul.bf16.gmra.mxu0 %v4189
        %v4435 = vpop.f32.mrf.mxu0
        %v4436 = vadd.f32 %v4347, %v4435
        %v4437 = vpop.f32.mrf.mxu0
        %v4438 = vadd.f32 %v4349, %v4437
        %4439 = vmatmul.bf16.gmra.mxu0 %v4192
        %v4440 = vpop.f32.mrf.mxu0
        %v4441 = vadd.f32 %v4352, %v4440
        %v4442 = vpop.f32.mrf.mxu0
        %v4443 = vadd.f32 %v4354, %v4442
        %4444 = vmatmul.bf16.gmra.mxu0 %v4195
        %v4445 = vpop.f32.mrf.mxu0
        %v4446 = vadd.f32 %v4357, %v4445
        %v4447 = vpop.f32.mrf.mxu0
        %v4448 = vadd.f32 %v4359, %v4447
        %4449 = vmatmul.bf16.gmra.mxu0 %v4198
        %v4450 = vpop.f32.mrf.mxu0
        %v4451 = vadd.f32 %v4362, %v4450
        %v4452 = vpop.f32.mrf.mxu0
        %v4453 = vadd.f32 %v4364, %v4452
        %4454 = vmatmul.bf16.gmra.mxu0 %v4201
        %v4455 = vpop.f32.mrf.mxu0
        %v4456 = vadd.f32 %v4367, %v4455
        %v4457 = vpop.f32.mrf.mxu0
        %v4458 = vadd.f32 %v4369, %v4457
        %4459 = vmatmul.bf16.gmra.mxu0 %v4204
        %v4460 = vpop.f32.mrf.mxu0
        %v4461 = vadd.f32 %v4372, %v4460
        %v4462 = vpop.f32.mrf.mxu0
        %v4463 = vadd.f32 %v4374, %v4462
        %4464 = vmatmul.bf16.gmra.mxu0 %v4207
        %v4465 = vpop.f32.mrf.mxu0
        %v4466 = vadd.f32 %v4377, %v4465
        %v4467 = vpop.f32.mrf.mxu0
        %v4468 = vadd.f32 %v4379, %v4467
        %4469 = vmatmul.bf16.gmra.mxu0 %v4210
        %v4470 = vpop.f32.mrf.mxu0
        %v4471 = vadd.f32 %v4382, %v4470
        %v4472 = vpop.f32.mrf.mxu0
        %v4473 = vadd.f32 %v4384, %v4472
        %4474 = vmatmul.bf16.gmra.mxu0 %v4213
        %v4475 = vpop.f32.mrf.mxu0
        %v4476 = vadd.f32 %v4387, %v4475
        %v4477 = vpop.f32.mrf.mxu0
        %v4478 = vadd.f32 %v4389, %v4477
        %4479 = vmatmul.bf16.gmra.mxu0 %v4216
        %v4480 = vpop.f32.mrf.mxu0
        %v4481 = vadd.f32 %v4392, %v4480
        %v4482 = vpop.f32.mrf.mxu0
        %v4483 = vadd.f32 %v4394, %v4482
        %4484 = vdwg.mxu0
        %v4485 = vmax.f32 %v4406, 0.0
        %v4486 = vmax.f32 %v4408, 0.0
        %v4487 = vmax.f32 %v4411, 0.0
        %v4488 = vmax.f32 %v4413, 0.0
        %v4489 = vmax.f32 %v4416, 0.0
        %v4490 = vmax.f32 %v4418, 0.0
        %v4491 = vmax.f32 %v4421, 0.0
        %v4492 = vmax.f32 %v4423, 0.0
        %v4493 = vmax.f32 %v4426, 0.0
        %v4494 = vmax.f32 %v4428, 0.0
        %v4495 = vmax.f32 %v4431, 0.0
        %v4496 = vmax.f32 %v4433, 0.0
        %v4497 = vmax.f32 %v4436, 0.0
        %v4498 = vmax.f32 %v4438, 0.0
        %v4499 = vmax.f32 %v4441, 0.0
        %v4500 = vmax.f32 %v4443, 0.0
        %v4501 = vmax.f32 %v4446, 0.0
        %v4502 = vmax.f32 %v4448, 0.0
        %v4503 = vmax.f32 %v4451, 0.0
        %v4504 = vmax.f32 %v4453, 0.0
        %v4505 = vmax.f32 %v4456, 0.0
        %v4506 = vmax.f32 %v4458, 0.0
        %v4507 = vmax.f32 %v4461, 0.0
        %v4508 = vmax.f32 %v4463, 0.0
        %v4509 = vmax.f32 %v4466, 0.0
        %v4510 = vmax.f32 %v4468, 0.0
        %v4511 = vmax.f32 %v4471, 0.0
        %v4512 = vmax.f32 %v4473, 0.0
        %v4513 = vmax.f32 %v4476, 0.0
        %v4514 = vmax.f32 %v4478, 0.0
        %v4515 = vmax.f32 %v4481, 0.0
        %v4516 = vmax.f32 %v4483, 0.0
        %4517 = vst.msk [vmem:[%s163] sm:$0xff] %vm4169, %v4485
        %4518 = vst.msk [vmem:[%s163 + $0x8] sm:$0xff] %vm4169, %v4486
        %4519 = vst.msk [vmem:[%s163 + $0x10] sm:$0xff] %vm4169, %v4487
        %4520 = vst.msk [vmem:[%s163 + $0x18] sm:$0xff] %vm4169, %v4488
        %4521 = vst.msk [vmem:[%s163 + $0x20] sm:$0xff] %vm4169, %v4489
        %4522 = vst.msk [vmem:[%s163 + $0x28] sm:$0xff] %vm4169, %v4490
        %4523 = vst.msk [vmem:[%s163 + $0x30] sm:$0xff] %vm4169, %v4491
        %4524 = vst.msk [vmem:[%s163 + $0x38] sm:$0xff] %vm4169, %v4492
        %4525 = vst.msk [vmem:[%s163 + $0x40] sm:$0xff] %vm4169, %v4493
        %4526 = vst.msk [vmem:[%s163 + $0x48] sm:$0xff] %vm4169, %v4494
        %4527 = vst.msk [vmem:[%s163 + $0x50] sm:$0xff] %vm4169, %v4495
        %4528 = vst.msk [vmem:[%s163 + $0x58] sm:$0xff] %vm4169, %v4496
        %4529 = vst.msk [vmem:[%s163 + $0x60] sm:$0xff] %vm4169, %v4497
        %4530 = vst.msk [vmem:[%s163 + $0x68] sm:$0xff] %vm4169, %v4498
        %4531 = vst.msk [vmem:[%s163 + $0x70] sm:$0xff] %vm4169, %v4499
        %4532 = vst.msk [vmem:[%s163 + $0x78] sm:$0xff] %vm4169, %v4500
        %4533 = vst.msk [vmem:[%s163 + $0x80] sm:$0xff] %vm4169, %v4501
        %4534 = vst.msk [vmem:[%s163 + $0x88] sm:$0xff] %vm4169, %v4502
        %4535 = vst.msk [vmem:[%s163 + $0x90] sm:$0xff] %vm4169, %v4503
        %4536 = vst.msk [vmem:[%s163 + $0x98] sm:$0xff] %vm4169, %v4504
        %4537 = vst.msk [vmem:[%s163 + $0xa0] sm:$0xff] %vm4169, %v4505
        %4538 = vst.msk [vmem:[%s163 + $0xa8] sm:$0xff] %vm4169, %v4506
        %4539 = vst.msk [vmem:[%s163 + $0xb0] sm:$0xff] %vm4169, %v4507
        %4540 = vst.msk [vmem:[%s163 + $0xb8] sm:$0xff] %vm4169, %v4508
        %4541 = vst.msk [vmem:[%s163 + $0xc0] sm:$0xff] %vm4169, %v4509
        %4542 = vst.msk [vmem:[%s163 + $0xc8] sm:$0xff] %vm4169, %v4510
        %4543 = vst.msk [vmem:[%s163 + $0xd0] sm:$0xff] %vm4169, %v4511
        %4544 = vst.msk [vmem:[%s163 + $0xd8] sm:$0xff] %vm4169, %v4512
        %4545 = vst.msk [vmem:[%s163 + $0xe0] sm:$0xff] %vm4169, %v4513
        %4546 = vst.msk [vmem:[%s163 + $0xe8] sm:$0xff] %vm4169, %v4514
        %4547 = vst.msk [vmem:[%s163 + $0xf0] sm:$0xff] %vm4169, %v4515
        %4548 = vst.msk [vmem:[%s163 + $0xf8] sm:$0xff] %vm4169, %v4516
        %s4549 = sand.u32 %s93, 1
        %s4550 = scalar_lea.sflag [#allocation5], %s4549
        %s4551 = sand.u32 %s93, 1
        %s4552 = smul.addr %s4551, 256
        %s4553 = scalar_lea.vmem [#allocation4], %s4552
        // Predicated region
        $region33: #{mobileone_block_pallas.1} parent=31 // pred_check
          %p4554 = pneg %p103
        $region34: #{mobileone_block_pallas.1} parent=31 // pred_check_branch
          %4556 = sbr.rel (%p4554) target = $region36
        $region35: #{mobileone_block_pallas.1} parent=31 // pred_region
          %4558 = vsyncadd %s4550, 0
          %s4559 = smul.addr %s17, 32
          %s4560 = smul.addr %s4559, 8
          %s4561 = scalar_lea.hbm %s3, %s4560
          %s4562 = sshll.u32 %s4553, 4
          %s4563 = int_to_ptr.vmem [resolvable:$true] %s4562
          %s4564 = sshll.u32 %s4561, 4
          %s4565 = int_to_ptr.hbm [resolvable:$true] %s4564
          %4570 = dma.vmem_to_hbm [thread:$0]  %s4563, 4096, %s4565, %s4550, 128, 128, 8
        $region36: #{mobileone_block_pallas.1} parent=31 // pred_fallthru
          _
      $region32: #{mobileone_block_pallas.1} parent=5 // pred_fallthru
        _
      %p4571 = scmp.le.s32.totalorder 2, %s12
      // Predicated region
      $region37: #{mobileone_block_pallas.1} parent=5 // pred_check
        %p4572 = pneg %p4571
      $region38: #{mobileone_block_pallas.1} parent=5 // pred_check_branch
        %4574 = sbr.rel (%p4572) target = $region40
      $region39: #{mobileone_block_pallas.1} parent=5 // pred_region
        %s4575 = ssub.s32 %s12, 2
        // Predicated region
        $region41: #{mobileone_block_pallas.1} parent=39 // pred_check
          %p4576 = pneg %p109
        $region42: #{mobileone_block_pallas.1} parent=39 // pred_check_branch
          %4578 = sbr.rel (%p4576) target = $region44
        $region43: #{mobileone_block_pallas.1} parent=39 // pred_region
          %s4579 = sand.u32 %s94, 1
          %s4580 = scalar_lea.sflag [#allocation5], %s4579
          %s4581 = sand.u32 %s94, 1
          %s4582 = smul.addr %s4581, 256
          %s4583 = scalar_lea.vmem [#allocation4], %s4582
          %4585 = dma.done %s4580, 4096
        $region44: #{mobileone_block_pallas.1} parent=39 // pred_fallthru
          _
      $region40: #{mobileone_block_pallas.1} parent=5 // pred_fallthru
        _
    $region6: #{mobileone_block_pallas.1} parent=1 // loop_footer
      %s16 = sadd.s32 1, %s12
    $region7: #{mobileone_block_pallas.1} parent=1 // loop_footer_branch
      %11 = sbr.rel target = $region3
    $region8: #{mobileone_block_pallas.1} parent=1 // loop_exit
      _
    %4586 = vsyncpa [#allocation5], 1
    %s4587 = scalar_lea.sflag [#allocation5], 1
    %4588 = vsyncpa %s4587, 1

</llo_original>
